<compile_context>
chip_gen: v7x
topology: tpu7x:2x2x1
jax: 0.10.0
libtpu: 0.0.40
codegen_flags: <defaults>
</compile_context>

<pallas_src>
import jax
import jax.numpy as jnp
import numpy as np
from jax import lax
from jax.experimental import pallas as pl
from jax.experimental.pallas import tpu as pltpu


# ---------------------------------------------------------------------------
# Generation-aware configuration
# ---------------------------------------------------------------------------
_GEN_DEFAULTS = {
    #        linear tiles            scoped-VMEM limits            LSTM block targets
    "v5e": dict(tm=128, tn=256, tk=256, linear_vmem=16 << 20, lstm_vmem=16 << 20,
                batch_target=128, time_target=16),
    "v6e": dict(tm=512, tn=512, tk=512, linear_vmem=96 << 20, lstm_vmem=64 << 20,
                batch_target=256, time_target=16),
    "v7x": dict(tm=256, tn=512, tk=512, linear_vmem=32 << 20, lstm_vmem=48 << 20,
                batch_target=256, time_target=16),
}


def _tpu_generation():
    try:
        kind = jax.devices()[0].device_kind.lower()
    except Exception:
        return "v6e"
    if ("v5 lite" in kind) or ("v5e" in kind) or ("v5lite" in kind):
        return "v5e"
    if "v6" in kind:
        return "v6e"
    if "7" in kind:
        return "v7x"
    return "v6e"


def _vmem_capacity_bytes():
    try:
        return int(pltpu.get_tpu_info().vmem_capacity_bytes)
    except Exception:
        return 128 * 1024 * 1024


def _gen_cfg():
    gen = _tpu_generation()
    cfg = dict(_GEN_DEFAULTS[gen])
    cfg["name"] = gen
    cap = int(0.75 * _vmem_capacity_bytes())        # never ask for more than 3/4 of physical
    cfg["linear_vmem"] = min(cfg["linear_vmem"], cap)
    cfg["lstm_vmem"] = min(cfg["lstm_vmem"], cap)
    return cfg


def _round_up(x, m):
    return ((x + m - 1) // m) * m


def _choose_block(dim, target, *, align=8, want_splits=1):
    """Largest divisor of `dim` <= target, preferring multiples of `align`.

    Optionally capped so dim // block >= want_splits (v7x: keep >=2 batch
    blocks so both TensorCores get work).  If no aligned divisor exists we fall
    back to the full dim (always a legal block shape)."""
    cap = max(1, min(target, dim))
    if want_splits > 1 and dim >= align * want_splits:
        cap = min(cap, dim // want_splits)
    divs = [d for d in range(1, dim + 1) if dim % d == 0 and d <= cap]
    aligned = [d for d in divs if d % align == 0]
    if aligned:
        return max(aligned)
    if align == 1 and divs:
        return max(divs)
    return dim


# ---------------------------------------------------------------------------
# Tiled linear:  (M, K) @ (K, N) + (1, N)  with K-axis accumulation in VMEM
# ---------------------------------------------------------------------------
def _linear_kernel(x_ref, w_ref, b_ref, o_ref, acc_ref):
    k = pl.program_id(2)

    @pl.when(k == 0)
    def _():
        acc_ref[...] = jnp.zeros_like(acc_ref)

    acc_ref[...] += jnp.dot(x_ref[...], w_ref[...],
                            preferred_element_type=jnp.float32)

    @pl.when(k == pl.num_programs(2) - 1)
    def _():
        o_ref[...] = (acc_ref[...] + b_ref[...]).astype(o_ref.dtype)


def pallas_linear(x, w, b, *, out_dtype=jnp.float32):
    """x: (M, K), w: (K, N), b: (N,) -> (M, N) in out_dtype.

    Generation-aware tiles; non-divisible shapes are zero-padded to
    (8,128)-aligned, tile-divisible shapes (tail sliced off at the end), so the
    accumulator scratch stays bounded and stores stay lane-dense even for real
    (non-power-of-two) vocab sizes."""
    M, K = x.shape
    K2, N = w.shape
    assert K == K2
    cfg = _gen_cfg()

    tm = min(cfg["tm"], _round_up(M, 8))
    tn = min(cfg["tn"], _round_up(N, 128))
    tk = min(cfg["tk"], _round_up(K, 128))
    Mp, Kp, Np = _round_up(M, tm), _round_up(K, tk), _round_up(N, tn)

    if (Mp, Kp) != (M, K):
        x = jnp.pad(x, ((0, Mp - M), (0, Kp - K)))
    if (Kp, Np) != (K, N):
        w = jnp.pad(w, ((0, Kp - K), (0, Np - N)))
    b2 = b.reshape(1, N).astype(jnp.float32)
    if Np != N:
        b2 = jnp.pad(b2, ((0, 0), (0, Np - N)))

    grid = (Mp // tm, Np // tn, Kp // tk)

    out = pl.pallas_call(
        _linear_kernel,
        out_shape=jax.ShapeDtypeStruct((Mp, Np), out_dtype),
        grid_spec=pltpu.PrefetchScalarGridSpec(
            num_scalar_prefetch=0,
            grid=grid,
            in_specs=[
                pl.BlockSpec((tm, tk), lambda i, j, k: (i, k)),
                pl.BlockSpec((tk, tn), lambda i, j, k: (k, j)),
                pl.BlockSpec((1, tn), lambda i, j, k: (0, j)),
            ],
            out_specs=pl.BlockSpec((tm, tn), lambda i, j, k: (i, j)),
            scratch_shapes=[pltpu.VMEM((tm, tn), jnp.float32)],
        ),
        compiler_params=pltpu.CompilerParams(
            dimension_semantics=("parallel", "parallel", "arbitrary"),
            vmem_limit_bytes=cfg["linear_vmem"],
        ),
    )(x, w, b2)

    if (Mp, Np) != (M, N):
        out = out[:M, :N]
    return out


# ---------------------------------------------------------------------------
# LSTM recurrence kernel (input projection already applied, time-major blocks)
# ---------------------------------------------------------------------------
def _lstm_kernel(xp_ref, whh_ref, h0_ref, c0_ref,
                 out_ref, hN_ref, cN_ref, h_scr, c_scr):
    """Grid = (batch blocks [parallel], time chunks [arbitrary, innermost]).

    xp_ref : (Tc, Bb, 4H)  time-major precomputed x_t @ W_ih + b (gate order i,f,g,o)
    whh_ref: (H, 4H)       fused recurrent weight (bf16)
    out_ref: (Tc, Bb, H)   time-major hidden states (bf16)
    h/c scratch (f32) carry the state across time chunks of the same batch block.
    Bb is split into two independent sub-blocks whose matmul / gate chains are
    interleaved so MXU pushes of one overlap EUP transcendentals of the other.
    """
    t = pl.program_id(1)

    @pl.when(t == 0)
    def _():
        h_scr[...] = h0_ref[...]
        c_scr[...] = c0_ref[...]

    Tc, Bb, G = xp_ref.shape
    H = G // 4
    interleave = (Bb % 16 == 0)            # halves stay sublane-aligned (>= 8 rows)
    Hb = Bb // 2

    whh = whh_ref[...]                     # loop-invariant (H, 4H) bf16
    mx_dtype = whh.dtype

    def gate_update(gates, c):
        i_g = jax.nn.sigmoid(gates[:, 0 * H:1 * H])
        f_g = jax.nn.sigmoid(gates[:, 1 * H:2 * H])
        g_g = jnp.tanh(gates[:, 2 * H:3 * H])
        o_g = jax.nn.sigmoid(gates[:, 3 * H:4 * H])
        c_new = f_g * c + i_g * g_g
        h_new = o_g * jnp.tanh(c_new)
        return h_new, c_new

    h_all = h_scr[...]
    c_all = c_scr[...]

    if interleave:
        def step(s, carry):
            hA, cA, hB, cB = carry
            xp_s = xp_ref[s]                               # (Bb, 4H) dense tile
            gA = xp_s[:Hb] + jnp.dot(hA.astype(mx_dtype), whh,
                                     preferred_element_type=jnp.float32)
            gB = xp_s[Hb:] + jnp.dot(hB.astype(mx_dtype), whh,
                                     preferred_element_type=jnp.float32)
            hA, cA = gate_update(gA, cA)
            hB, cB = gate_update(gB, cB)
            out_ref[s] = jnp.concatenate([hA, hB], axis=0).astype(out_ref.dtype)
            return hA, cA, hB, cB

        carry = (h_all[:Hb], c_all[:Hb], h_all[Hb:], c_all[Hb:])
    else:
        def step(s, carry):
            h, c = carry
            gates = xp_ref[s] + jnp.dot(h.astype(mx_dtype), whh,
                                        preferred_element_type=jnp.float32)
            h, c = gate_update(gates, c)
            out_ref[s] = h.astype(out_ref.dtype)
            return h, c

        carry = (h_all, c_all)

    if Tc <= 16:
        # small chunk: fully unrolled static loop (all indices static)
        for s in range(Tc):
            carry = step(s, carry)
    else:
        # large chunk: bounded unroll keeps instruction count / vreg pressure sane
        carry = lax.fori_loop(0, Tc, step, carry, unroll=8)

    if interleave:
        hA, cA, hB, cB = carry
        h = jnp.concatenate([hA, hB], axis=0)
        c = jnp.concatenate([cA, cB], axis=0)
    else:
        h, c = carry

    h_scr[...] = h
    c_scr[...] = c

    @pl.when(t == pl.num_programs(1) - 1)
    def _():
        hN_ref[...] = h
        cN_ref[...] = c


def pallas_lstm(x_proj_tm, w_hh, h0, c0, *, time_block=None, batch_block=None,
                hidden_dtype=jnp.bfloat16):
    """x_proj_tm: (T, B, 4H) TIME-MAJOR precomputed x @ W_ih + b.

    Returns (out (T, B, H) in hidden_dtype, hN (B, H) f32, cN (B, H) f32).
    Loop-invariant blocks (W_hh, h0, c0) keep constant block indices so they are
    not re-DMA'd per step (budget ~2x their size for default double-buffering;
    on v7x at real H consider pipeline_mode=pl.Buffered(1) for them)."""
    T, B, G = x_proj_tm.shape
    H = h0.shape[-1]
    assert G == 4 * H
    cfg = _gen_cfg()

    tb = cfg["time_target"] if time_block is None else time_block
    bb = cfg["batch_target"] if batch_block is None else batch_block
    want_splits = 2 if (batch_block is None and cfg["name"] == "v7x") else 1
    Tc = _choose_block(T, tb, align=1)
    Bb = _choose_block(B, bb, align=8, want_splits=want_splits)
    grid = (B // Bb, T // Tc)

    grid_spec = pltpu.PrefetchScalarGridSpec(
        num_scalar_prefetch=0,
        grid=grid,
        in_specs=[
            pl.BlockSpec((Tc, Bb, G), lambda b, t: (t, b, 0)),   # xp, time-major
            pl.BlockSpec((H, G), lambda b, t: (0, 0)),           # W_hh (invariant)
            pl.BlockSpec((Bb, H), lambda b, t: (b, 0)),          # h0
            pl.BlockSpec((Bb, H), lambda b, t: (b, 0)),          # c0
        ],
        out_specs=[
            pl.BlockSpec((Tc, Bb, H), lambda b, t: (t, b, 0)),   # out, time-major
            pl.BlockSpec((Bb, H), lambda b, t: (b, 0)),          # hN
            pl.BlockSpec((Bb, H), lambda b, t: (b, 0)),          # cN
        ],
        scratch_shapes=[
            pltpu.VMEM((Bb, H), jnp.float32),
            pltpu.VMEM((Bb, H), jnp.float32),
        ],
    )
    return pl.pallas_call(
        _lstm_kernel,
        out_shape=(
            jax.ShapeDtypeStruct((T, B, H), hidden_dtype),
            jax.ShapeDtypeStruct((B, H), jnp.float32),
            jax.ShapeDtypeStruct((B, H), jnp.float32),
        ),
        grid_spec=grid_spec,
        compiler_params=pltpu.CompilerParams(
            dimension_semantics=("parallel", "arbitrary"),
            vmem_limit_bytes=cfg["lstm_vmem"],
        ),
    )(x_proj_tm, w_hh, h0, c0)


# ---------------------------------------------------------------------------
# Forward pass (mirrors RNNLM.forward)
# ---------------------------------------------------------------------------
def rnnlm_forward(tokens, state, params, *, time_block=None, batch_block=None):
    """tokens: (B, T) int32 ids; state = (h0, c0) each (1, B, H).

    Equivalent to RNNLM.forward(one_hot(tokens), state): the one-hot Linear
    embedding is a row gather of W_emb = embed.weight.T."""
    B, T = tokens.shape
    h0, c0 = state
    H = h0.shape[-1]

    # Embedding gather, rows ordered TIME-MAJOR so x_proj is born (T, B, 4H).
    ids_tm = tokens.T.reshape(-1).astype(jnp.int32)                       # (T*B,)
    emb = jnp.take(params["W_emb"], ids_tm, axis=0)                       # (T*B, E) bf16

    # Hoisted, gate-fused input projection (one pipelined matmul), bf16 output.
    x_proj = pallas_linear(emb, params["W_ih"], params["b_lstm"],
                           out_dtype=jnp.bfloat16)                        # (T*B, 4H)
    x_proj = x_proj.reshape(T, B, 4 * H)

    # Recurrence: only h_prev @ W_hh + elementwise gate math per timestep.
    out_tbh, hN, cN = pallas_lstm(x_proj, params["W_hh"],
                                  h0[0].astype(jnp.float32),
                                  c0[0].astype(jnp.float32),
                                  time_block=time_block, batch_block=batch_block)

    # torch (batch_first): out.reshape(B*T, H) -> one (T,B,H)->(B,T,H) relayout
    # of the H-wide hidden states (much cheaper than permuting V-wide logits).
    out = jnp.transpose(out_tbh, (1, 0, 2)).reshape(B * T, H)             # bf16

    # Tiled output projection with bias; f32 logits at demo scale.
    logits = pallas_linear(out, params["W_out"], params["b_out"],
                           out_dtype=jnp.float32)                         # (B*T, V)
    return logits, (hN[None], cN[None])


def rnnlm_forward_onehot(x_onehot, state, params, **kwargs):
    """Exact module signature: x is (B, T, V) STRICTLY one-hot float.

    (argmax recovers the token ids; for soft / label-smoothed inputs this
    diverges from the one-hot-matmul semantics -- use the dense path instead.)"""
    tokens = jnp.argmax(x_onehot, axis=-1).astype(jnp.int32)
    return rnnlm_forward(tokens, state, params, **kwargs)


# ---------------------------------------------------------------------------
# Pure-JAX reference (torch-equivalent math, f32 HIGHEST-precision matmuls)
# ---------------------------------------------------------------------------
def rnnlm_reference(x_onehot, state, params):
    P = jax.lax.Precision.HIGHEST
    B, T, V = x_onehot.shape
    h0, c0 = state
    H = h0.shape[-1]

    W_emb = params["W_emb"].astype(jnp.float32)
    W_ih = params["W_ih"].astype(jnp.float32)
    W_hh = params["W_hh"].astype(jnp.float32)
    W_out = params["W_out"].astype(jnp.float32)

    emb = jnp.dot(x_onehot.reshape(B * T, V), W_emb, precision=P)
    xp = jnp.dot(emb, W_ih, precision=P) + params["b_lstm"]
    xp = xp.reshape(B, T, 4 * H)

    def step(carry, x_t):
        h, c = carry
        gates = x_t + jnp.dot(h, W_hh, precision=P)
        i_g = jax.nn.sigmoid(gates[:, 0 * H:1 * H])
        f_g = jax.nn.sigmoid(gates[:, 1 * H:2 * H])
        g_g = jnp.tanh(gates[:, 2 * H:3 * H])
        o_g = jax.nn.sigmoid(gates[:, 3 * H:4 * H])
        c = f_g * c + i_g * g_g
        h = o_g * jnp.tanh(c)
        return (h, c), h

    (hN, cN), outs = jax.lax.scan(step, (h0[0], c0[0]),
                                  jnp.transpose(xp, (1, 0, 2)))
    out = jnp.transpose(outs, (1, 0, 2)).reshape(B * T, H)
    logits = jnp.dot(out, W_out, precision=P) + params["b_out"]
    return logits, (hN[None], cN[None])


# ---------------------------------------------------------------------------
if __name__ == "__main__":
    # embed/hidden match the torch module; small batch/seq/vocab for the demo.
    # Explicit time_block=8 / batch_block=32 exercises both grid axes
    # (2 batch blocks x 2 time chunks) plus the 2-way interleave (16-row halves).
    B, T = 64, 16
    vocab_size, embed_size, hidden_size = 128, 64, 256

    key = jax.random.PRNGKey(0)
    keys = jax.random.split(key, 10)
    scale = 0.1

    # torch-shaped parameters (f32), then the kernel-layout / bf16 params dict.
    W_emb_t = scale * jax.random.normal(keys[0], (embed_size, vocab_size), jnp.float32)
    W_ih_t = scale * jax.random.normal(keys[1], (4 * hidden_size, embed_size), jnp.float32)
    W_hh_t = scale * jax.random.normal(keys[2], (4 * hidden_size, hidden_size), jnp.float32)
    b_ih = scale * jax.random.normal(keys[3], (4 * hidden_size,), jnp.float32)
    b_hh = scale * jax.random.normal(keys[4], (4 * hidden_size,), jnp.float32)
    W_out_t = scale * jax.random.normal(keys[5], (vocab_size, hidden_size), jnp.float32)
    b_out = scale * jax.random.normal(keys[6], (vocab_size,), jnp.float32)

    params = {
        "W_emb": W_emb_t.T.astype(jnp.bfloat16),   # (V, E)
        "W_ih": W_ih_t.T.astype(jnp.bfloat16),     # (E, 4H) gate-fused (i,f,g,o)
        "W_hh": W_hh_t.T.astype(jnp.bfloat16),     # (H, 4H)
        "b_lstm": b_ih + b_hh,                     # (4H,) f32
        "W_out": W_out_t.T.astype(jnp.bfloat16),   # (H, V)
        "b_out": b_out,                            # (V,)  f32
    }

    tok = jax.random.randint(keys[7], (B, T), 0, vocab_size)
    x_onehot = jax.nn.one_hot(tok, vocab_size, dtype=jnp.float32)
    h0 = jnp.zeros((1, B, hidden_size), jnp.float32)
    c0 = jnp.zeros((1, B, hidden_size), jnp.float32)

    logits, (hN, cN) = jax.block_until_ready(
        rnnlm_forward_onehot(x_onehot, (h0, c0), params,
                             time_block=8, batch_block=32))
    ref_logits, (ref_h, ref_c) = rnnlm_reference(x_onehot, (h0, c0), params)

    # Tolerances loosened (vs the all-f32 version) for bf16 x_proj / hidden
    # activations; weights are identical (bf16) in both kernel and reference.
    np.testing.assert_allclose(np.asarray(logits), np.asarray(ref_logits),
                               rtol=2e-2, atol=2e-2)
    np.testing.assert_allclose(np.asarray(hN), np.asarray(ref_h), rtol=2e-2, atol=2e-2)
    np.testing.assert_allclose(np.asarray(cN), np.asarray(ref_c), rtol=2e-2, atol=2e-2)

    assert logits.shape == (B * T, vocab_size)
    print("KERNEL_OK")
</pallas_src>

<mosaic_0001>
module attributes {stable_mosaic.version = 11 : i64} {
  func.func @_linear_kernel(%arg0: i32, %arg1: i32, %arg2: i32, %arg3: memref<512x128xbf16, #tpu.memory_space<vmem>>, %arg4: memref<128x512xbf16, #tpu.memory_space<vmem>>, %arg5: memref<1x512xf32, #tpu.memory_space<vmem>>, %arg6: memref<512x512xbf16, #tpu.memory_space<vmem>>, %arg7: memref<512x512xf32, #tpu.memory_space<vmem>>) attributes {dimension_semantics = [#tpu.dimension_semantics<parallel>, #tpu.dimension_semantics<parallel>, #tpu.dimension_semantics<arbitrary>], iteration_bounds = array<i64: 2, 2, 1>, scalar_prefetch = 0 : i64, scratch_operands = 1 : i64, tpu.core_type = #tpu.core_type<tc>, window_params = [{transform_indices = @transform_0, window_bounds = array<i64: 512, 128>}, {transform_indices = @transform_1, window_bounds = array<i64: 128, 512>}, {transform_indices = @transform_2, window_bounds = array<i64: 1, 512>}, {transform_indices = @transform_3, window_bounds = array<i64: 512, 512>}]} {
    %c0_i32 = arith.constant 0 : i32
    %0 = arith.cmpi eq, %arg2, %c0_i32 : i32
    %1 = arith.extui %0 : i1 to i32
    %c0_i32_0 = arith.constant 0 : i32
    %2 = arith.cmpi ne, %1, %c0_i32_0 : i32
    scf.if %2 {
      %cst_10 = arith.constant 0.000000e+00 : f32
      %12 = vector.broadcast %cst_10 : f32 to vector<512x512xf32>
      %c0_11 = arith.constant 0 : index
      %c0_12 = arith.constant 0 : index
      %13 = vector.load %arg7[%c0_11, %c0_12] : memref<512x512xf32, #tpu.memory_space<vmem>>, vector<512x512xf32>
      tpu.vector_store %arg7[%c0_11, %c0_12], %12 {strides = array<i32>} : memref<512x512xf32, #tpu.memory_space<vmem>>, vector<512x512xf32>,
    } else {
    }
    %c0 = arith.constant 0 : index
    %c0_1 = arith.constant 0 : index
    %3 = vector.load %arg7[%c0, %c0_1] : memref<512x512xf32, #tpu.memory_space<vmem>>, vector<512x512xf32>
    %c0_2 = arith.constant 0 : index
    %c0_3 = arith.constant 0 : index
    %4 = vector.load %arg3[%c0_2, %c0_3] : memref<512x128xbf16, #tpu.memory_space<vmem>>, vector<512x128xbf16>
    %c0_4 = arith.constant 0 : index
    %c0_5 = arith.constant 0 : index
    %5 = vector.load %arg4[%c0_4, %c0_5] : memref<128x512xbf16, #tpu.memory_space<vmem>>, vector<128x512xbf16>
    %cst = arith.constant dense<0.000000e+00> : vector<512x512xf32>
    %6 = tpu.matmul %4, %5, %cst {dimension_numbers = #tpu.dot_dimension_numbers<[1], [0], [0], [1], [0, 0, 1, 1], [], []>} : vector<512x128xbf16>, vector<128x512xbf16>, vector<512x512xf32> -> vector<512x512xf32>
    %7 = arith.addf %3, %6 : vector<512x512xf32>
    %c0_6 = arith.constant 0 : index
    %c0_7 = arith.constant 0 : index
    %8 = vector.load %arg7[%c0_6, %c0_7] : memref<512x512xf32, #tpu.memory_space<vmem>>, vector<512x512xf32>
    tpu.vector_store %arg7[%c0_6, %c0_7], %7 {strides = array<i32>} : memref<512x512xf32, #tpu.memory_space<vmem>>, vector<512x512xf32>,
    %c0_i32_8 = arith.constant 0 : i32
    %9 = arith.cmpi eq, %arg2, %c0_i32_8 : i32
    %10 = arith.extui %9 : i1 to i32
    %c0_i32_9 = arith.constant 0 : i32
    %11 = arith.cmpi ne, %10, %c0_i32_9 : i32
    scf.if %11 {
      %c0_10 = arith.constant 0 : index
      %c0_11 = arith.constant 0 : index
      %12 = vector.load %arg7[%c0_10, %c0_11] : memref<512x512xf32, #tpu.memory_space<vmem>>, vector<512x512xf32>
      %c0_12 = arith.constant 0 : index
      %c0_13 = arith.constant 0 : index
      %13 = vector.load %arg5[%c0_12, %c0_13] : memref<1x512xf32, #tpu.memory_space<vmem>>, vector<1x512xf32>
      %14 = vector.broadcast %13 : vector<1x512xf32> to vector<512x512xf32>
      %15 = arith.addf %12, %14 : vector<512x512xf32>
      %16 = arith.truncf %15 : vector<512x512xf32> to vector<512x512xbf16>
      %c0_14 = arith.constant 0 : index
      %c0_15 = arith.constant 0 : index
      %17 = vector.load %arg6[%c0_14, %c0_15] : memref<512x512xbf16, #tpu.memory_space<vmem>>, vector<512x512xbf16>
      tpu.vector_store %arg6[%c0_14, %c0_15], %16 {strides = array<i32>} : memref<512x512xbf16, #tpu.memory_space<vmem>>, vector<512x512xbf16>,
    } else {
    }
    return
  }
  func.func @transform_0(%arg0: i32, %arg1: i32, %arg2: i32) -> (i32, i32) {
    %c0_i32 = arith.constant 0 : i32
    return %arg0, %arg2 : i32, i32
  }
  func.func @transform_1(%arg0: i32, %arg1: i32, %arg2: i32) -> (i32, i32) {
    %c0_i32 = arith.constant 0 : i32
    return %arg2, %arg1 : i32, i32
  }
  func.func @transform_2(%arg0: i32, %arg1: i32, %arg2: i32) -> (i32, i32) {
    %c0_i32 = arith.constant 0 : i32
    %c0_i32_0 = arith.constant 0 : i32
    return %c0_i32, %arg1 : i32, i32
  }
  func.func @transform_3(%arg0: i32, %arg1: i32, %arg2: i32) -> (i32, i32) {
    %c0_i32 = arith.constant 0 : i32
    return %arg0, %arg1 : i32, i32
  }
}

</mosaic_0001>

<llo_original>
// kernel: tpu_custom_call.1
$region0: #{tpu_custom_call.1}
  #allocation0 [shape = 'u32[]', space=smem, size = 0x4, offset = 0x4, fixed_abs, tag = 'smem constant byte address 0x4 - core index']
  #allocation1 [shape = 'u32[144,128]{1,0:T(1,128)}', space=vmem, size = 0x12000, scoped, tag = 'internal scratch']
  #allocation2 [shape = 'f32[512,512]{1,0:T(8,128)}', space=vmem, size = 0x100000, scoped, tag = 'scratch operand']
  %s0 = inlined_call_operand.hbm [shape: bf16[1024,128], index: 0, kind: input, shape index: {}]
  %s1 = inlined_call_operand.hbm [shape: bf16[128,1024], index: 1, kind: input, shape index: {}]
  %s2 = inlined_call_operand.hbm [shape: f32[1,1024], index: 2, kind: input, shape index: {}]
  %s3 = inlined_call_operand.hbm [shape: bf16[1024,1024], index: 3, kind: output, shape index: {}]
  %s4 = sld [smem:[#allocation0]]
  $region65: #{tpu_custom_call.1} parent=0
    _
  %s6 = ssub.s32 1, %s4
  %s7 = scalar_select 0, %s6, %s4
  $region1: #{tpu_custom_call.1} parent=0
    #allocation3 [shape = 'u8[262144]{0}', space=vmem, size = 0x40000, scoped, tag = 'input window, operand 0']
    #allocation4 [shape = 's32[2]{0}', space=sflag, size = 0x8, scoped, tag = 'scoped memory for tpu_custom_call.1']
    #allocation5 [shape = 's32[2]{0}', space=sflag, size = 0x8, scoped, tag = 'scoped memory for tpu_custom_call.1']
    #allocation6 [shape = 'u8[262144]{0}', space=vmem, size = 0x40000, scoped, tag = 'input window, operand 1']
    #allocation7 [shape = 's32[2]{0}', space=sflag, size = 0x8, scoped, tag = 'scoped memory for tpu_custom_call.1']
    #allocation8 [shape = 'u8[4096]{0}', space=vmem, size = 0x1000, scoped, tag = 'input window, operand 2']
    #allocation9 [shape = 'u8[1048576]{0}', space=vmem, size = 0x100000, scoped, tag = 'output window, operand 0']
    %8 = vsyncpa [#allocation4], 0
    %s9 = scalar_lea.sflag [#allocation4], 1
    %10 = vsyncpa %s9, 0
    %11 = vsyncpa [#allocation7], 0
    %s12 = scalar_lea.sflag [#allocation7], 1
    %13 = vsyncpa %s12, 0
    %14 = vsyncpa [#allocation5], 0
    %s15 = scalar_lea.sflag [#allocation5], 1
    %16 = vsyncpa %s15, 0
    loop: start=0, step=1, limit=6
    $region2: #{tpu_custom_call.1} parent=1 // loop_pre_header
      _
    $region3: #{tpu_custom_call.1} parent=1 // loop_header
      %s18 = sphi 0, %s22
      %p19 = scmp.ge.s32.totalorder %s18, 6
      %s25 = sphi 0, %s44
      %s26 = sphi 0, %s40
      %s27 = sphi 0, %s36
      %s28 = sphi 0, %s25
      %s29 = sphi 0, %s26
      %s30 = sphi 0, %s27
      %s31 = sphi 0, %s28
      %s32 = sphi 0, %s29
      %s33 = sphi 0, %s30
      %s49 = sphi 0, %s51
      %s52 = sphi 0, %s49
      %s53 = sphi 0, %s52
      %s69 = sphi 0, %s53
      %s77 = sphi 0, %s79
      %s80 = sphi 0, %s77
      %s81 = sphi 0, %s80
      %s97 = sphi 0, %s81
      %s103 = sphi 0, %s105
      %s106 = sphi 0, %s103
      %s107 = sphi 0, %s106
      %s123 = sphi 0, %s107
      %s131 = sphi 0, %s133
      %s134 = sphi 0, %s131
      %s135 = sphi 0, %s134
      %s151 = sphi 0, %s135
    $region4: #{tpu_custom_call.1} parent=1 // loop_header_branch
      %21 = sbr.rel (%p19) target = $region8
    $region5: #{tpu_custom_call.1} parent=1 // loop_body
      %s23 = ssub.s32 %s18, 1
      %s24 = ssub.s32 %s18, 2
      %s34 = sadd.s32 1, %s27
      %p35 = scmp.ge.s32.totalorder %s34, 1
      %s36 = scalar_select %p35, 0, %s34
      %s37 = sadd.s32 1, %s26
      %s38 = scalar_select %p35, %s37, %s26
      %p39 = scmp.ge.s32.totalorder %s38, 2
      %s40 = scalar_select %p39, 0, %s38
      %s41 = sadd.s32 1, %s25
      %s42 = scalar_select %p39, %s41, %s25
      %p43 = scmp.ge.s32.totalorder %s42, 2
      %s44 = scalar_select %p43, 0, %s42
      %s45 = ssub.s32 %s25, %s44
      %s46 = ssub.s32 %s27, %s36
      %s47 = sor.u32 %s45, %s46
      %p48 = scmp.eq.s32.totalorder %s47, 0
      %s50 = sadd.s32 %s49, 1
      %s51 = scalar_select %p48, %s49, %s50
      %p54 = pneg %p48
      %p55 = scmp.eq.s32.totalorder %s18, 3
      %p56 = por %p54, %p55
      %p57 = scmp.ne.s32.totalorder %s49, %s52
      %p58 = scmp.eq.s32.totalorder %s18, 0
      %p59 = por %p57, %p58
      %p60 = scmp.ne.s32.totalorder %s49, %s52
      %p61 = scmp.eq.s32.totalorder %s23, 3
      %p62 = por %p60, %p61
      %p63 = scmp.ne.s32.totalorder %s52, %s53
      %p64 = scmp.eq.s32.totalorder %s23, 0
      %p65 = por %p63, %p64
      %p66 = scmp.ne.s32.totalorder %s52, %s53
      %p67 = scmp.eq.s32.totalorder %s24, 3
      %p68 = por %p66, %p67
      %p70 = scmp.ne.s32.totalorder %s53, %s69
      %p71 = scmp.eq.s32.totalorder %s24, 0
      %p72 = por %p70, %p71
      %s73 = ssub.s32 %s27, %s36
      %s74 = ssub.s32 %s26, %s40
      %s75 = sor.u32 %s73, %s74
      %p76 = scmp.eq.s32.totalorder %s75, 0
      %s78 = sadd.s32 %s77, 1
      %s79 = scalar_select %p76, %s77, %s78
      %p82 = pneg %p76
      %p83 = scmp.eq.s32.totalorder %s18, 3
      %p84 = por %p82, %p83
      %p85 = scmp.ne.s32.totalorder %s77, %s80
      %p86 = scmp.eq.s32.totalorder %s18, 0
      %p87 = por %p85, %p86
      %p88 = scmp.ne.s32.totalorder %s77, %s80
      %p89 = scmp.eq.s32.totalorder %s23, 3
      %p90 = por %p88, %p89
      %p91 = scmp.ne.s32.totalorder %s80, %s81
      %p92 = scmp.eq.s32.totalorder %s23, 0
      %p93 = por %p91, %p92
      %p94 = scmp.ne.s32.totalorder %s80, %s81
      %p95 = scmp.eq.s32.totalorder %s24, 3
      %p96 = por %p94, %p95
      %p98 = scmp.ne.s32.totalorder %s81, %s97
      %p99 = scmp.eq.s32.totalorder %s24, 0
      %p100 = por %p98, %p99
      %s101 = ssub.s32 %s26, %s40
      %p102 = scmp.eq.s32.totalorder %s101, 0
      %s104 = sadd.s32 %s103, 1
      %s105 = scalar_select %p102, %s103, %s104
      %p108 = pneg %p102
      %p109 = scmp.eq.s32.totalorder %s18, 3
      %p110 = por %p108, %p109
      %p111 = scmp.ne.s32.totalorder %s103, %s106
      %p112 = scmp.eq.s32.totalorder %s18, 0
      %p113 = por %p111, %p112
      %p114 = scmp.ne.s32.totalorder %s103, %s106
      %p115 = scmp.eq.s32.totalorder %s23, 3
      %p116 = por %p114, %p115
      %p117 = scmp.ne.s32.totalorder %s106, %s107
      %p118 = scmp.eq.s32.totalorder %s23, 0
      %p119 = por %p117, %p118
      %p120 = scmp.ne.s32.totalorder %s106, %s107
      %p121 = scmp.eq.s32.totalorder %s24, 3
      %p122 = por %p120, %p121
      %p124 = scmp.ne.s32.totalorder %s107, %s123
      %p125 = scmp.eq.s32.totalorder %s24, 0
      %p126 = por %p124, %p125
      %s127 = ssub.s32 %s25, %s44
      %s128 = ssub.s32 %s26, %s40
      %s129 = sor.u32 %s127, %s128
      %p130 = scmp.eq.s32.totalorder %s129, 0
      %s132 = sadd.s32 %s131, 1
      %s133 = scalar_select %p130, %s131, %s132
      %p136 = pneg %p130
      %p137 = scmp.eq.s32.totalorder %s18, 3
      %p138 = por %p136, %p137
      %p139 = scmp.ne.s32.totalorder %s131, %s134
      %p140 = scmp.eq.s32.totalorder %s18, 0
      %p141 = por %p139, %p140
      %p142 = scmp.ne.s32.totalorder %s131, %s134
      %p143 = scmp.eq.s32.totalorder %s23, 3
      %p144 = por %p142, %p143
      %p145 = scmp.ne.s32.totalorder %s134, %s135
      %p146 = scmp.eq.s32.totalorder %s23, 0
      %p147 = por %p145, %p146
      %p148 = scmp.ne.s32.totalorder %s134, %s135
      %p149 = scmp.eq.s32.totalorder %s24, 3
      %p150 = por %p148, %p149
      %p152 = scmp.ne.s32.totalorder %s135, %s151
      %p153 = scmp.eq.s32.totalorder %s24, 0
      %p154 = por %p152, %p153
      %p155 = scmp.le.s32.totalorder 1, %s18
      %p156 = scmp.lt.s32.totalorder %s18, 5
      %p157 = pnand %p155, %p156
      %p158 = pneg %p157
      // Predicated region
      $region9: #{tpu_custom_call.1} parent=5 // pred_check
        _
      $region10: #{tpu_custom_call.1} parent=5 // pred_check_branch
        %160 = sbr.rel (%p157) target = $region12
      $region11: #{tpu_custom_call.1} parent=5 // pred_region
        %s161 = ssub.s32 %s18, 1
      $region12: #{tpu_custom_call.1} parent=5 // pred_fallthru
        _
      %p162 = scmp.lt.s32.totalorder %s18, 4
      // Predicated region
      $region13: #{tpu_custom_call.1} parent=5 // pred_check
        %p163 = pneg %p162
      $region14: #{tpu_custom_call.1} parent=5 // pred_check_branch
        %165 = sbr.rel (%p163) target = $region16
      $region15: #{tpu_custom_call.1} parent=5 // pred_region
        // Predicated region
        $region17: #{tpu_custom_call.1} parent=15 // pred_check
          %p166 = pneg %p59
        $region18: #{tpu_custom_call.1} parent=15 // pred_check_branch
          %168 = sbr.rel (%p166) target = $region20
        $region19: #{tpu_custom_call.1} parent=15 // pred_region
          %s169 = sand.u32 %s49, 1
          %s170 = scalar_lea.sflag [#allocation4], %s169
          %s171 = sand.u32 %s49, 1
          %s172 = smul.addr %s171, 256
          %s173 = scalar_lea.vmem [#allocation3], %s172
          %s174 = smul.u32 64, %s25
          %s176 = ssub.s32 4096, 4096
          %177 = vsyncadd %s170, %s176
          %s178 = sadd.s32 %s27, %s174
          %s179 = smul.addr %s178, 64
          %s180 = scalar_lea.hbm %s0, %s179
          %s181 = sshll.u32 %s173, 4
          %s182 = int_to_ptr.vmem [resolvable:$true] %s181
          %187 = dma.hbm_to_vmem [thread:$0]  %s180, 4096, %s182, %s170, 64, 64, 4
        $region20: #{tpu_custom_call.1} parent=15 // pred_fallthru
          _
        // Predicated region
        $region21: #{tpu_custom_call.1} parent=15 // pred_check
          %p188 = pneg %p87
        $region22: #{tpu_custom_call.1} parent=15 // pred_check_branch
          %190 = sbr.rel (%p188) target = $region24
        $region23: #{tpu_custom_call.1} parent=15 // pred_region
          %s191 = sand.u32 %s18, 1
          %s192 = scalar_lea.sflag [#allocation7], %s191
          %s193 = sand.u32 %s77, 1
          %s194 = smul.addr %s193, 256
          %s195 = scalar_lea.vmem [#allocation6], %s194
          %s196 = smul.u32 16, %s27
          %s197 = smul.u32 4, %s26
          %s199 = ssub.s32 4096, 4096
          %200 = vsyncadd %s192, %s199
          %s201 = smul.addr %s196, 8
          %s202 = sadd.s32 %s197, %s201
          %s203 = smul.addr %s202, 64
          %s204 = scalar_lea.hbm %s1, %s203
          %s205 = sshll.u32 %s195, 4
          %s206 = int_to_ptr.vmem [resolvable:$true] %s205
          %211 = dma.hbm_to_vmem [thread:$0]  %s204, 4096, %s206, %s192, 512, 256, 16
        $region24: #{tpu_custom_call.1} parent=15 // pred_fallthru
          _
        // Predicated region
        $region25: #{tpu_custom_call.1} parent=15 // pred_check
          %p212 = pneg %p113
        $region26: #{tpu_custom_call.1} parent=15 // pred_check_branch
          %214 = sbr.rel (%p212) target = $region28
        $region27: #{tpu_custom_call.1} parent=15 // pred_region
          %s215 = sand.u32 %s18, 1
          %s216 = scalar_lea.sflag [#allocation7], %s215
          %s217 = sand.u32 %s103, 1
          %s218 = smul.addr %s217, 4
          %s219 = scalar_lea.vmem [#allocation8], %s218
          %s220 = smul.u32 4, %s26
          %s222 = ssub.s32 64, 64
          %223 = vsyncadd %s216, %s222
          %s224 = smul.addr %s220, 16
          %s225 = scalar_lea.hbm %s2, %s224
          %s227 = sshll.u32 %s219, 4
          %s228 = int_to_ptr.vmem [resolvable:$true] %s227
          %230 = dma.hbm_to_vmem [thread:$0]  %s225, 64, %s228, %s216
        $region28: #{tpu_custom_call.1} parent=15 // pred_fallthru
          _
      $region16: #{tpu_custom_call.1} parent=5 // pred_fallthru
        _
      %p231 = scmp.le.s32.totalorder 1, %s18
      %p232 = scmp.lt.s32.totalorder %s18, 5
      %p233 = pnand %p231, %p232
      %p234 = pneg %p233
      // Predicated region
      $region29: #{tpu_custom_call.1} parent=5 // pred_check
        _
      $region30: #{tpu_custom_call.1} parent=5 // pred_check_branch
        %236 = sbr.rel (%p233) target = $region32
      $region31: #{tpu_custom_call.1} parent=5 // pred_region
        %s237 = ssub.s32 %s18, 1
        %s238 = sand.u32 %s52, 1
        %s239 = scalar_lea.sflag [#allocation4], %s238
        %s240 = sand.u32 %s52, 1
        %s241 = smul.addr %s240, 256
        %s242 = scalar_lea.vmem [#allocation3], %s241
        // Predicated region
        $region33: #{tpu_custom_call.1} parent=31 // pred_check
          %p243 = pneg %p65
        $region34: #{tpu_custom_call.1} parent=31 // pred_check_branch
          %245 = sbr.rel (%p243) target = $region36
        $region35: #{tpu_custom_call.1} parent=31 // pred_region
          %246 = dma.done %s239, 4096
        $region36: #{tpu_custom_call.1} parent=31 // pred_fallthru
          _
        %s247 = sand.u32 %s23, 1
        %s248 = scalar_lea.sflag [#allocation7], %s247
        %s249 = sand.u32 %s80, 1
        %s250 = smul.addr %s249, 256
        %s251 = scalar_lea.vmem [#allocation6], %s250
        // Predicated region
        $region37: #{tpu_custom_call.1} parent=31 // pred_check
          %p252 = pneg %p93
        $region38: #{tpu_custom_call.1} parent=31 // pred_check_branch
          %254 = sbr.rel (%p252) target = $region40
        $region39: #{tpu_custom_call.1} parent=31 // pred_region
          %255 = dma.done %s248, 4096
        $region40: #{tpu_custom_call.1} parent=31 // pred_fallthru
          _
        %s256 = sand.u32 %s23, 1
        %s257 = scalar_lea.sflag [#allocation7], %s256
        %s258 = sand.u32 %s106, 1
        %s259 = smul.addr %s258, 4
        %s260 = scalar_lea.vmem [#allocation8], %s259
        // Predicated region
        $region41: #{tpu_custom_call.1} parent=31 // pred_check
          %p261 = pneg %p119
        $region42: #{tpu_custom_call.1} parent=31 // pred_check_branch
          %263 = sbr.rel (%p261) target = $region44
        $region43: #{tpu_custom_call.1} parent=31 // pred_region
          %264 = dma.done %s257, 64
        $region44: #{tpu_custom_call.1} parent=31 // pred_fallthru
          _
        %s265 = sand.u32 %s52, 1
        %s266 = scalar_lea.sflag [#allocation4], %s265
        %s267 = sand.u32 %s52, 1
        %s268 = smul.addr %s267, 256
        %s269 = scalar_lea.vmem [#allocation3], %s268
        %p270 = pneg %p65
        %p271 = pneg %p62
        %s272 = sand.u32 %s23, 1
        %s273 = scalar_lea.sflag [#allocation7], %s272
        %s274 = sand.u32 %s80, 1
        %s275 = smul.addr %s274, 256
        %s276 = scalar_lea.vmem [#allocation6], %s275
        %p277 = pneg %p93
        %p278 = pneg %p90
        %s279 = sand.u32 %s23, 1
        %s280 = scalar_lea.sflag [#allocation7], %s279
        %s281 = sand.u32 %s106, 1
        %s282 = smul.addr %s281, 4
        %s283 = scalar_lea.vmem [#allocation8], %s282
        %p284 = pneg %p119
        %p285 = pneg %p116
        %p286 = pneg %p147
        %p287 = pneg %p144
        %s288 = sand.u32 %s134, 1
        %s289 = scalar_lea.sflag [#allocation5], %s288
        %s290 = sand.u32 %s134, 1
        %s291 = smul.addr %s290, 1024
        %s292 = scalar_lea.vmem [#allocation9], %s291
        %s293 = smul.u32 64, %s28
        %s294 = smul.u32 16, %s30
        %s295 = smul.u32 4, %s29
        %s296 = smul.u32 4, %s29
        %s297 = smul.u32 64, %s28
        %s298 = smul.u32 4, %s29
        %p300 = scmp.eq.s32.totalorder %s30, 0
        // Predicated region
        $region45: #{tpu_custom_call.1} parent=31 // pred_check
          %p301 = pneg %p300
        $region46: #{tpu_custom_call.1} parent=31 // pred_check_branch
          %303 = sbr.rel (%p301) target = $region48
        $region47: #{tpu_custom_call.1} parent=31 // pred_region
          %304 = vst [vmem:[#allocation2] sm:$0xff] 0.0
          %305 = vst [vmem:[#allocation2 + $0x8] sm:$0xff] 0.0
          %306 = vst [vmem:[#allocation2 + $0x10] sm:$0xff] 0.0
          %307 = vst [vmem:[#allocation2 + $0x18] sm:$0xff] 0.0
          %308 = vst [vmem:[#allocation2 + $0x20] sm:$0xff] 0.0
          %309 = vst [vmem:[#allocation2 + $0x28] sm:$0xff] 0.0
          %310 = vst [vmem:[#allocation2 + $0x30] sm:$0xff] 0.0
          %311 = vst [vmem:[#allocation2 + $0x38] sm:$0xff] 0.0
          %312 = vst [vmem:[#allocation2 + $0x40] sm:$0xff] 0.0
          %313 = vst [vmem:[#allocation2 + $0x48] sm:$0xff] 0.0
          %314 = vst [vmem:[#allocation2 + $0x50] sm:$0xff] 0.0
          %315 = vst [vmem:[#allocation2 + $0x58] sm:$0xff] 0.0
          %316 = vst [vmem:[#allocation2 + $0x60] sm:$0xff] 0.0
          %317 = vst [vmem:[#allocation2 + $0x68] sm:$0xff] 0.0
          %318 = vst [vmem:[#allocation2 + $0x70] sm:$0xff] 0.0
          %319 = vst [vmem:[#allocation2 + $0x78] sm:$0xff] 0.0
          %320 = vst [vmem:[#allocation2 + $0x80] sm:$0xff] 0.0
          %321 = vst [vmem:[#allocation2 + $0x88] sm:$0xff] 0.0
          %322 = vst [vmem:[#allocation2 + $0x90] sm:$0xff] 0.0
          %323 = vst [vmem:[#allocation2 + $0x98] sm:$0xff] 0.0
          %324 = vst [vmem:[#allocation2 + $0xa0] sm:$0xff] 0.0
          %325 = vst [vmem:[#allocation2 + $0xa8] sm:$0xff] 0.0
          %326 = vst [vmem:[#allocation2 + $0xb0] sm:$0xff] 0.0
          %327 = vst [vmem:[#allocation2 + $0xb8] sm:$0xff] 0.0
          %328 = vst [vmem:[#allocation2 + $0xc0] sm:$0xff] 0.0
          %329 = vst [vmem:[#allocation2 + $0xc8] sm:$0xff] 0.0
          %330 = vst [vmem:[#allocation2 + $0xd0] sm:$0xff] 0.0
          %331 = vst [vmem:[#allocation2 + $0xd8] sm:$0xff] 0.0
          %332 = vst [vmem:[#allocation2 + $0xe0] sm:$0xff] 0.0
          %333 = vst [vmem:[#allocation2 + $0xe8] sm:$0xff] 0.0
          %334 = vst [vmem:[#allocation2 + $0xf0] sm:$0xff] 0.0
          %335 = vst [vmem:[#allocation2 + $0xf8] sm:$0xff] 0.0
          %336 = vst [vmem:[#allocation2 + $0x100] sm:$0xff] 0.0
          %337 = vst [vmem:[#allocation2 + $0x108] sm:$0xff] 0.0
          %338 = vst [vmem:[#allocation2 + $0x110] sm:$0xff] 0.0
          %339 = vst [vmem:[#allocation2 + $0x118] sm:$0xff] 0.0
          %340 = vst [vmem:[#allocation2 + $0x120] sm:$0xff] 0.0
          %341 = vst [vmem:[#allocation2 + $0x128] sm:$0xff] 0.0
          %342 = vst [vmem:[#allocation2 + $0x130] sm:$0xff] 0.0
          %343 = vst [vmem:[#allocation2 + $0x138] sm:$0xff] 0.0
          %344 = vst [vmem:[#allocation2 + $0x140] sm:$0xff] 0.0
          %345 = vst [vmem:[#allocation2 + $0x148] sm:$0xff] 0.0
          %346 = vst [vmem:[#allocation2 + $0x150] sm:$0xff] 0.0
          %347 = vst [vmem:[#allocation2 + $0x158] sm:$0xff] 0.0
          %348 = vst [vmem:[#allocation2 + $0x160] sm:$0xff] 0.0
          %349 = vst [vmem:[#allocation2 + $0x168] sm:$0xff] 0.0
          %350 = vst [vmem:[#allocation2 + $0x170] sm:$0xff] 0.0
          %351 = vst [vmem:[#allocation2 + $0x178] sm:$0xff] 0.0
          %352 = vst [vmem:[#allocation2 + $0x180] sm:$0xff] 0.0
          %353 = vst [vmem:[#allocation2 + $0x188] sm:$0xff] 0.0
          %354 = vst [vmem:[#allocation2 + $0x190] sm:$0xff] 0.0
          %355 = vst [vmem:[#allocation2 + $0x198] sm:$0xff] 0.0
          %356 = vst [vmem:[#allocation2 + $0x1a0] sm:$0xff] 0.0
          %357 = vst [vmem:[#allocation2 + $0x1a8] sm:$0xff] 0.0
          %358 = vst [vmem:[#allocation2 + $0x1b0] sm:$0xff] 0.0
          %359 = vst [vmem:[#allocation2 + $0x1b8] sm:$0xff] 0.0
          %360 = vst [vmem:[#allocation2 + $0x1c0] sm:$0xff] 0.0
          %361 = vst [vmem:[#allocation2 + $0x1c8] sm:$0xff] 0.0
          %362 = vst [vmem:[#allocation2 + $0x1d0] sm:$0xff] 0.0
          %363 = vst [vmem:[#allocation2 + $0x1d8] sm:$0xff] 0.0
          %364 = vst [vmem:[#allocation2 + $0x1e0] sm:$0xff] 0.0
          %365 = vst [vmem:[#allocation2 + $0x1e8] sm:$0xff] 0.0
          %366 = vst [vmem:[#allocation2 + $0x1f0] sm:$0xff] 0.0
          %367 = vst [vmem:[#allocation2 + $0x1f8] sm:$0xff] 0.0
          %368 = vst [vmem:[#allocation2 + $0x200] sm:$0xff] 0.0
          %369 = vst [vmem:[#allocation2 + $0x208] sm:$0xff] 0.0
          %370 = vst [vmem:[#allocation2 + $0x210] sm:$0xff] 0.0
          %371 = vst [vmem:[#allocation2 + $0x218] sm:$0xff] 0.0
          %372 = vst [vmem:[#allocation2 + $0x220] sm:$0xff] 0.0
          %373 = vst [vmem:[#allocation2 + $0x228] sm:$0xff] 0.0
          %374 = vst [vmem:[#allocation2 + $0x230] sm:$0xff] 0.0
          %375 = vst [vmem:[#allocation2 + $0x238] sm:$0xff] 0.0
          %376 = vst [vmem:[#allocation2 + $0x240] sm:$0xff] 0.0
          %377 = vst [vmem:[#allocation2 + $0x248] sm:$0xff] 0.0
          %378 = vst [vmem:[#allocation2 + $0x250] sm:$0xff] 0.0
          %379 = vst [vmem:[#allocation2 + $0x258] sm:$0xff] 0.0
          %380 = vst [vmem:[#allocation2 + $0x260] sm:$0xff] 0.0
          %381 = vst [vmem:[#allocation2 + $0x268] sm:$0xff] 0.0
          %382 = vst [vmem:[#allocation2 + $0x270] sm:$0xff] 0.0
          %383 = vst [vmem:[#allocation2 + $0x278] sm:$0xff] 0.0
          %384 = vst [vmem:[#allocation2 + $0x280] sm:$0xff] 0.0
          %385 = vst [vmem:[#allocation2 + $0x288] sm:$0xff] 0.0
          %386 = vst [vmem:[#allocation2 + $0x290] sm:$0xff] 0.0
          %387 = vst [vmem:[#allocation2 + $0x298] sm:$0xff] 0.0
          %388 = vst [vmem:[#allocation2 + $0x2a0] sm:$0xff] 0.0
          %389 = vst [vmem:[#allocation2 + $0x2a8] sm:$0xff] 0.0
          %390 = vst [vmem:[#allocation2 + $0x2b0] sm:$0xff] 0.0
          %391 = vst [vmem:[#allocation2 + $0x2b8] sm:$0xff] 0.0
          %392 = vst [vmem:[#allocation2 + $0x2c0] sm:$0xff] 0.0
          %393 = vst [vmem:[#allocation2 + $0x2c8] sm:$0xff] 0.0
          %394 = vst [vmem:[#allocation2 + $0x2d0] sm:$0xff] 0.0
          %395 = vst [vmem:[#allocation2 + $0x2d8] sm:$0xff] 0.0
          %396 = vst [vmem:[#allocation2 + $0x2e0] sm:$0xff] 0.0
          %397 = vst [vmem:[#allocation2 + $0x2e8] sm:$0xff] 0.0
          %398 = vst [vmem:[#allocation2 + $0x2f0] sm:$0xff] 0.0
          %399 = vst [vmem:[#allocation2 + $0x2f8] sm:$0xff] 0.0
          %400 = vst [vmem:[#allocation2 + $0x300] sm:$0xff] 0.0
          %401 = vst [vmem:[#allocation2 + $0x308] sm:$0xff] 0.0
          %402 = vst [vmem:[#allocation2 + $0x310] sm:$0xff] 0.0
          %403 = vst [vmem:[#allocation2 + $0x318] sm:$0xff] 0.0
          %404 = vst [vmem:[#allocation2 + $0x320] sm:$0xff] 0.0
          %405 = vst [vmem:[#allocation2 + $0x328] sm:$0xff] 0.0
          %406 = vst [vmem:[#allocation2 + $0x330] sm:$0xff] 0.0
          %407 = vst [vmem:[#allocation2 + $0x338] sm:$0xff] 0.0
          %408 = vst [vmem:[#allocation2 + $0x340] sm:$0xff] 0.0
          %409 = vst [vmem:[#allocation2 + $0x348] sm:$0xff] 0.0
          %410 = vst [vmem:[#allocation2 + $0x350] sm:$0xff] 0.0
          %411 = vst [vmem:[#allocation2 + $0x358] sm:$0xff] 0.0
          %412 = vst [vmem:[#allocation2 + $0x360] sm:$0xff] 0.0
          %413 = vst [vmem:[#allocation2 + $0x368] sm:$0xff] 0.0
          %414 = vst [vmem:[#allocation2 + $0x370] sm:$0xff] 0.0
          %415 = vst [vmem:[#allocation2 + $0x378] sm:$0xff] 0.0
          %416 = vst [vmem:[#allocation2 + $0x380] sm:$0xff] 0.0
          %417 = vst [vmem:[#allocation2 + $0x388] sm:$0xff] 0.0
          %418 = vst [vmem:[#allocation2 + $0x390] sm:$0xff] 0.0
          %419 = vst [vmem:[#allocation2 + $0x398] sm:$0xff] 0.0
          %420 = vst [vmem:[#allocation2 + $0x3a0] sm:$0xff] 0.0
          %421 = vst [vmem:[#allocation2 + $0x3a8] sm:$0xff] 0.0
          %422 = vst [vmem:[#allocation2 + $0x3b0] sm:$0xff] 0.0
          %423 = vst [vmem:[#allocation2 + $0x3b8] sm:$0xff] 0.0
          %424 = vst [vmem:[#allocation2 + $0x3c0] sm:$0xff] 0.0
          %425 = vst [vmem:[#allocation2 + $0x3c8] sm:$0xff] 0.0
          %426 = vst [vmem:[#allocation2 + $0x3d0] sm:$0xff] 0.0
          %427 = vst [vmem:[#allocation2 + $0x3d8] sm:$0xff] 0.0
          %428 = vst [vmem:[#allocation2 + $0x3e0] sm:$0xff] 0.0
          %429 = vst [vmem:[#allocation2 + $0x3e8] sm:$0xff] 0.0
          %430 = vst [vmem:[#allocation2 + $0x3f0] sm:$0xff] 0.0
          %431 = vst [vmem:[#allocation2 + $0x3f8] sm:$0xff] 0.0
          %432 = vst [vmem:[#allocation2 + $0x400] sm:$0xff] 0.0
          %433 = vst [vmem:[#allocation2 + $0x408] sm:$0xff] 0.0
          %434 = vst [vmem:[#allocation2 + $0x410] sm:$0xff] 0.0
          %435 = vst [vmem:[#allocation2 + $0x418] sm:$0xff] 0.0
          %436 = vst [vmem:[#allocation2 + $0x420] sm:$0xff] 0.0
          %437 = vst [vmem:[#allocation2 + $0x428] sm:$0xff] 0.0
          %438 = vst [vmem:[#allocation2 + $0x430] sm:$0xff] 0.0
          %439 = vst [vmem:[#allocation2 + $0x438] sm:$0xff] 0.0
          %440 = vst [vmem:[#allocation2 + $0x440] sm:$0xff] 0.0
          %441 = vst [vmem:[#allocation2 + $0x448] sm:$0xff] 0.0
          %442 = vst [vmem:[#allocation2 + $0x450] sm:$0xff] 0.0
          %443 = vst [vmem:[#allocation2 + $0x458] sm:$0xff] 0.0
          %444 = vst [vmem:[#allocation2 + $0x460] sm:$0xff] 0.0
          %445 = vst [vmem:[#allocation2 + $0x468] sm:$0xff] 0.0
          %446 = vst [vmem:[#allocation2 + $0x470] sm:$0xff] 0.0
          %447 = vst [vmem:[#allocation2 + $0x478] sm:$0xff] 0.0
          %448 = vst [vmem:[#allocation2 + $0x480] sm:$0xff] 0.0
          %449 = vst [vmem:[#allocation2 + $0x488] sm:$0xff] 0.0
          %450 = vst [vmem:[#allocation2 + $0x490] sm:$0xff] 0.0
          %451 = vst [vmem:[#allocation2 + $0x498] sm:$0xff] 0.0
          %452 = vst [vmem:[#allocation2 + $0x4a0] sm:$0xff] 0.0
          %453 = vst [vmem:[#allocation2 + $0x4a8] sm:$0xff] 0.0
          %454 = vst [vmem:[#allocation2 + $0x4b0] sm:$0xff] 0.0
          %455 = vst [vmem:[#allocation2 + $0x4b8] sm:$0xff] 0.0
          %456 = vst [vmem:[#allocation2 + $0x4c0] sm:$0xff] 0.0
          %457 = vst [vmem:[#allocation2 + $0x4c8] sm:$0xff] 0.0
          %458 = vst [vmem:[#allocation2 + $0x4d0] sm:$0xff] 0.0
          %459 = vst [vmem:[#allocation2 + $0x4d8] sm:$0xff] 0.0
          %460 = vst [vmem:[#allocation2 + $0x4e0] sm:$0xff] 0.0
          %461 = vst [vmem:[#allocation2 + $0x4e8] sm:$0xff] 0.0
          %462 = vst [vmem:[#allocation2 + $0x4f0] sm:$0xff] 0.0
          %463 = vst [vmem:[#allocation2 + $0x4f8] sm:$0xff] 0.0
          %464 = vst [vmem:[#allocation2 + $0x500] sm:$0xff] 0.0
          %465 = vst [vmem:[#allocation2 + $0x508] sm:$0xff] 0.0
          %466 = vst [vmem:[#allocation2 + $0x510] sm:$0xff] 0.0
          %467 = vst [vmem:[#allocation2 + $0x518] sm:$0xff] 0.0
          %468 = vst [vmem:[#allocation2 + $0x520] sm:$0xff] 0.0
          %469 = vst [vmem:[#allocation2 + $0x528] sm:$0xff] 0.0
          %470 = vst [vmem:[#allocation2 + $0x530] sm:$0xff] 0.0
          %471 = vst [vmem:[#allocation2 + $0x538] sm:$0xff] 0.0
          %472 = vst [vmem:[#allocation2 + $0x540] sm:$0xff] 0.0
          %473 = vst [vmem:[#allocation2 + $0x548] sm:$0xff] 0.0
          %474 = vst [vmem:[#allocation2 + $0x550] sm:$0xff] 0.0
          %475 = vst [vmem:[#allocation2 + $0x558] sm:$0xff] 0.0
          %476 = vst [vmem:[#allocation2 + $0x560] sm:$0xff] 0.0
          %477 = vst [vmem:[#allocation2 + $0x568] sm:$0xff] 0.0
          %478 = vst [vmem:[#allocation2 + $0x570] sm:$0xff] 0.0
          %479 = vst [vmem:[#allocation2 + $0x578] sm:$0xff] 0.0
          %480 = vst [vmem:[#allocation2 + $0x580] sm:$0xff] 0.0
          %481 = vst [vmem:[#allocation2 + $0x588] sm:$0xff] 0.0
          %482 = vst [vmem:[#allocation2 + $0x590] sm:$0xff] 0.0
          %483 = vst [vmem:[#allocation2 + $0x598] sm:$0xff] 0.0
          %484 = vst [vmem:[#allocation2 + $0x5a0] sm:$0xff] 0.0
          %485 = vst [vmem:[#allocation2 + $0x5a8] sm:$0xff] 0.0
          %486 = vst [vmem:[#allocation2 + $0x5b0] sm:$0xff] 0.0
          %487 = vst [vmem:[#allocation2 + $0x5b8] sm:$0xff] 0.0
          %488 = vst [vmem:[#allocation2 + $0x5c0] sm:$0xff] 0.0
          %489 = vst [vmem:[#allocation2 + $0x5c8] sm:$0xff] 0.0
          %490 = vst [vmem:[#allocation2 + $0x5d0] sm:$0xff] 0.0
          %491 = vst [vmem:[#allocation2 + $0x5d8] sm:$0xff] 0.0
          %492 = vst [vmem:[#allocation2 + $0x5e0] sm:$0xff] 0.0
          %493 = vst [vmem:[#allocation2 + $0x5e8] sm:$0xff] 0.0
          %494 = vst [vmem:[#allocation2 + $0x5f0] sm:$0xff] 0.0
          %495 = vst [vmem:[#allocation2 + $0x5f8] sm:$0xff] 0.0
          %496 = vst [vmem:[#allocation2 + $0x600] sm:$0xff] 0.0
          %497 = vst [vmem:[#allocation2 + $0x608] sm:$0xff] 0.0
          %498 = vst [vmem:[#allocation2 + $0x610] sm:$0xff] 0.0
          %499 = vst [vmem:[#allocation2 + $0x618] sm:$0xff] 0.0
          %500 = vst [vmem:[#allocation2 + $0x620] sm:$0xff] 0.0
          %501 = vst [vmem:[#allocation2 + $0x628] sm:$0xff] 0.0
          %502 = vst [vmem:[#allocation2 + $0x630] sm:$0xff] 0.0
          %503 = vst [vmem:[#allocation2 + $0x638] sm:$0xff] 0.0
          %504 = vst [vmem:[#allocation2 + $0x640] sm:$0xff] 0.0
          %505 = vst [vmem:[#allocation2 + $0x648] sm:$0xff] 0.0
          %506 = vst [vmem:[#allocation2 + $0x650] sm:$0xff] 0.0
          %507 = vst [vmem:[#allocation2 + $0x658] sm:$0xff] 0.0
          %508 = vst [vmem:[#allocation2 + $0x660] sm:$0xff] 0.0
          %509 = vst [vmem:[#allocation2 + $0x668] sm:$0xff] 0.0
          %510 = vst [vmem:[#allocation2 + $0x670] sm:$0xff] 0.0
          %511 = vst [vmem:[#allocation2 + $0x678] sm:$0xff] 0.0
          %512 = vst [vmem:[#allocation2 + $0x680] sm:$0xff] 0.0
          %513 = vst [vmem:[#allocation2 + $0x688] sm:$0xff] 0.0
          %514 = vst [vmem:[#allocation2 + $0x690] sm:$0xff] 0.0
          %515 = vst [vmem:[#allocation2 + $0x698] sm:$0xff] 0.0
          %516 = vst [vmem:[#allocation2 + $0x6a0] sm:$0xff] 0.0
          %517 = vst [vmem:[#allocation2 + $0x6a8] sm:$0xff] 0.0
          %518 = vst [vmem:[#allocation2 + $0x6b0] sm:$0xff] 0.0
          %519 = vst [vmem:[#allocation2 + $0x6b8] sm:$0xff] 0.0
          %520 = vst [vmem:[#allocation2 + $0x6c0] sm:$0xff] 0.0
          %521 = vst [vmem:[#allocation2 + $0x6c8] sm:$0xff] 0.0
          %522 = vst [vmem:[#allocation2 + $0x6d0] sm:$0xff] 0.0
          %523 = vst [vmem:[#allocation2 + $0x6d8] sm:$0xff] 0.0
          %524 = vst [vmem:[#allocation2 + $0x6e0] sm:$0xff] 0.0
          %525 = vst [vmem:[#allocation2 + $0x6e8] sm:$0xff] 0.0
          %526 = vst [vmem:[#allocation2 + $0x6f0] sm:$0xff] 0.0
          %527 = vst [vmem:[#allocation2 + $0x6f8] sm:$0xff] 0.0
          %528 = vst [vmem:[#allocation2 + $0x700] sm:$0xff] 0.0
          %529 = vst [vmem:[#allocation2 + $0x708] sm:$0xff] 0.0
          %530 = vst [vmem:[#allocation2 + $0x710] sm:$0xff] 0.0
          %531 = vst [vmem:[#allocation2 + $0x718] sm:$0xff] 0.0
          %532 = vst [vmem:[#allocation2 + $0x720] sm:$0xff] 0.0
          %533 = vst [vmem:[#allocation2 + $0x728] sm:$0xff] 0.0
          %534 = vst [vmem:[#allocation2 + $0x730] sm:$0xff] 0.0
          %535 = vst [vmem:[#allocation2 + $0x738] sm:$0xff] 0.0
          %536 = vst [vmem:[#allocation2 + $0x740] sm:$0xff] 0.0
          %537 = vst [vmem:[#allocation2 + $0x748] sm:$0xff] 0.0
          %538 = vst [vmem:[#allocation2 + $0x750] sm:$0xff] 0.0
          %539 = vst [vmem:[#allocation2 + $0x758] sm:$0xff] 0.0
          %540 = vst [vmem:[#allocation2 + $0x760] sm:$0xff] 0.0
          %541 = vst [vmem:[#allocation2 + $0x768] sm:$0xff] 0.0
          %542 = vst [vmem:[#allocation2 + $0x770] sm:$0xff] 0.0
          %543 = vst [vmem:[#allocation2 + $0x778] sm:$0xff] 0.0
          %544 = vst [vmem:[#allocation2 + $0x780] sm:$0xff] 0.0
          %545 = vst [vmem:[#allocation2 + $0x788] sm:$0xff] 0.0
          %546 = vst [vmem:[#allocation2 + $0x790] sm:$0xff] 0.0
          %547 = vst [vmem:[#allocation2 + $0x798] sm:$0xff] 0.0
          %548 = vst [vmem:[#allocation2 + $0x7a0] sm:$0xff] 0.0
          %549 = vst [vmem:[#allocation2 + $0x7a8] sm:$0xff] 0.0
          %550 = vst [vmem:[#allocation2 + $0x7b0] sm:$0xff] 0.0
          %551 = vst [vmem:[#allocation2 + $0x7b8] sm:$0xff] 0.0
          %552 = vst [vmem:[#allocation2 + $0x7c0] sm:$0xff] 0.0
          %553 = vst [vmem:[#allocation2 + $0x7c8] sm:$0xff] 0.0
          %554 = vst [vmem:[#allocation2 + $0x7d0] sm:$0xff] 0.0
          %555 = vst [vmem:[#allocation2 + $0x7d8] sm:$0xff] 0.0
          %556 = vst [vmem:[#allocation2 + $0x7e0] sm:$0xff] 0.0
          %557 = vst [vmem:[#allocation2 + $0x7e8] sm:$0xff] 0.0
          %558 = vst [vmem:[#allocation2 + $0x7f0] sm:$0xff] 0.0
          %559 = vst [vmem:[#allocation2 + $0x7f8] sm:$0xff] 0.0
        $region48: #{tpu_custom_call.1} parent=31 // pred_fallthru
          _
        %v560 = vld [vmem:[#allocation2] sm:$0xff]
        %v561 = vld [vmem:[#allocation2 + $0x8] sm:$0xff]
        %v562 = vld [vmem:[#allocation2 + $0x10] sm:$0xff]
        %v563 = vld [vmem:[#allocation2 + $0x18] sm:$0xff]
        %v564 = vld [vmem:[#allocation2 + $0x20] sm:$0xff]
        %v565 = vld [vmem:[#allocation2 + $0x28] sm:$0xff]
        %v566 = vld [vmem:[#allocation2 + $0x30] sm:$0xff]
        %v567 = vld [vmem:[#allocation2 + $0x38] sm:$0xff]
        %v568 = vld [vmem:[#allocation2 + $0x40] sm:$0xff]
        %v569 = vld [vmem:[#allocation2 + $0x48] sm:$0xff]
        %v570 = vld [vmem:[#allocation2 + $0x50] sm:$0xff]
        %v571 = vld [vmem:[#allocation2 + $0x58] sm:$0xff]
        %v572 = vld [vmem:[#allocation2 + $0x60] sm:$0xff]
        %v573 = vld [vmem:[#allocation2 + $0x68] sm:$0xff]
        %v574 = vld [vmem:[#allocation2 + $0x70] sm:$0xff]
        %v575 = vld [vmem:[#allocation2 + $0x78] sm:$0xff]
        %v576 = vld [vmem:[#allocation2 + $0x80] sm:$0xff]
        %v577 = vld [vmem:[#allocation2 + $0x88] sm:$0xff]
        %v578 = vld [vmem:[#allocation2 + $0x90] sm:$0xff]
        %v579 = vld [vmem:[#allocation2 + $0x98] sm:$0xff]
        %v580 = vld [vmem:[#allocation2 + $0xa0] sm:$0xff]
        %v581 = vld [vmem:[#allocation2 + $0xa8] sm:$0xff]
        %v582 = vld [vmem:[#allocation2 + $0xb0] sm:$0xff]
        %v583 = vld [vmem:[#allocation2 + $0xb8] sm:$0xff]
        %v584 = vld [vmem:[#allocation2 + $0xc0] sm:$0xff]
        %v585 = vld [vmem:[#allocation2 + $0xc8] sm:$0xff]
        %v586 = vld [vmem:[#allocation2 + $0xd0] sm:$0xff]
        %v587 = vld [vmem:[#allocation2 + $0xd8] sm:$0xff]
        %v588 = vld [vmem:[#allocation2 + $0xe0] sm:$0xff]
        %v589 = vld [vmem:[#allocation2 + $0xe8] sm:$0xff]
        %v590 = vld [vmem:[#allocation2 + $0xf0] sm:$0xff]
        %v591 = vld [vmem:[#allocation2 + $0xf8] sm:$0xff]
        %v592 = vld [vmem:[#allocation2 + $0x100] sm:$0xff]
        %v593 = vld [vmem:[#allocation2 + $0x108] sm:$0xff]
        %v594 = vld [vmem:[#allocation2 + $0x110] sm:$0xff]
        %v595 = vld [vmem:[#allocation2 + $0x118] sm:$0xff]
        %v596 = vld [vmem:[#allocation2 + $0x120] sm:$0xff]
        %v597 = vld [vmem:[#allocation2 + $0x128] sm:$0xff]
        %v598 = vld [vmem:[#allocation2 + $0x130] sm:$0xff]
        %v599 = vld [vmem:[#allocation2 + $0x138] sm:$0xff]
        %v600 = vld [vmem:[#allocation2 + $0x140] sm:$0xff]
        %v601 = vld [vmem:[#allocation2 + $0x148] sm:$0xff]
        %v602 = vld [vmem:[#allocation2 + $0x150] sm:$0xff]
        %v603 = vld [vmem:[#allocation2 + $0x158] sm:$0xff]
        %v604 = vld [vmem:[#allocation2 + $0x160] sm:$0xff]
        %v605 = vld [vmem:[#allocation2 + $0x168] sm:$0xff]
        %v606 = vld [vmem:[#allocation2 + $0x170] sm:$0xff]
        %v607 = vld [vmem:[#allocation2 + $0x178] sm:$0xff]
        %v608 = vld [vmem:[#allocation2 + $0x180] sm:$0xff]
        %v609 = vld [vmem:[#allocation2 + $0x188] sm:$0xff]
        %v610 = vld [vmem:[#allocation2 + $0x190] sm:$0xff]
        %v611 = vld [vmem:[#allocation2 + $0x198] sm:$0xff]
        %v612 = vld [vmem:[#allocation2 + $0x1a0] sm:$0xff]
        %v613 = vld [vmem:[#allocation2 + $0x1a8] sm:$0xff]
        %v614 = vld [vmem:[#allocation2 + $0x1b0] sm:$0xff]
        %v615 = vld [vmem:[#allocation2 + $0x1b8] sm:$0xff]
        %v616 = vld [vmem:[#allocation2 + $0x1c0] sm:$0xff]
        %v617 = vld [vmem:[#allocation2 + $0x1c8] sm:$0xff]
        %v618 = vld [vmem:[#allocation2 + $0x1d0] sm:$0xff]
        %v619 = vld [vmem:[#allocation2 + $0x1d8] sm:$0xff]
        %v620 = vld [vmem:[#allocation2 + $0x1e0] sm:$0xff]
        %v621 = vld [vmem:[#allocation2 + $0x1e8] sm:$0xff]
        %v622 = vld [vmem:[#allocation2 + $0x1f0] sm:$0xff]
        %v623 = vld [vmem:[#allocation2 + $0x1f8] sm:$0xff]
        %v624 = vld [vmem:[#allocation2 + $0x200] sm:$0xff]
        %v625 = vld [vmem:[#allocation2 + $0x208] sm:$0xff]
        %v626 = vld [vmem:[#allocation2 + $0x210] sm:$0xff]
        %v627 = vld [vmem:[#allocation2 + $0x218] sm:$0xff]
        %v628 = vld [vmem:[#allocation2 + $0x220] sm:$0xff]
        %v629 = vld [vmem:[#allocation2 + $0x228] sm:$0xff]
        %v630 = vld [vmem:[#allocation2 + $0x230] sm:$0xff]
        %v631 = vld [vmem:[#allocation2 + $0x238] sm:$0xff]
        %v632 = vld [vmem:[#allocation2 + $0x240] sm:$0xff]
        %v633 = vld [vmem:[#allocation2 + $0x248] sm:$0xff]
        %v634 = vld [vmem:[#allocation2 + $0x250] sm:$0xff]
        %v635 = vld [vmem:[#allocation2 + $0x258] sm:$0xff]
        %v636 = vld [vmem:[#allocation2 + $0x260] sm:$0xff]
        %v637 = vld [vmem:[#allocation2 + $0x268] sm:$0xff]
        %v638 = vld [vmem:[#allocation2 + $0x270] sm:$0xff]
        %v639 = vld [vmem:[#allocation2 + $0x278] sm:$0xff]
        %v640 = vld [vmem:[#allocation2 + $0x280] sm:$0xff]
        %v641 = vld [vmem:[#allocation2 + $0x288] sm:$0xff]
        %v642 = vld [vmem:[#allocation2 + $0x290] sm:$0xff]
        %v643 = vld [vmem:[#allocation2 + $0x298] sm:$0xff]
        %v644 = vld [vmem:[#allocation2 + $0x2a0] sm:$0xff]
        %v645 = vld [vmem:[#allocation2 + $0x2a8] sm:$0xff]
        %v646 = vld [vmem:[#allocation2 + $0x2b0] sm:$0xff]
        %v647 = vld [vmem:[#allocation2 + $0x2b8] sm:$0xff]
        %v648 = vld [vmem:[#allocation2 + $0x2c0] sm:$0xff]
        %v649 = vld [vmem:[#allocation2 + $0x2c8] sm:$0xff]
        %v650 = vld [vmem:[#allocation2 + $0x2d0] sm:$0xff]
        %v651 = vld [vmem:[#allocation2 + $0x2d8] sm:$0xff]
        %v652 = vld [vmem:[#allocation2 + $0x2e0] sm:$0xff]
        %v653 = vld [vmem:[#allocation2 + $0x2e8] sm:$0xff]
        %v654 = vld [vmem:[#allocation2 + $0x2f0] sm:$0xff]
        %v655 = vld [vmem:[#allocation2 + $0x2f8] sm:$0xff]
        %v656 = vld [vmem:[#allocation2 + $0x300] sm:$0xff]
        %v657 = vld [vmem:[#allocation2 + $0x308] sm:$0xff]
        %v658 = vld [vmem:[#allocation2 + $0x310] sm:$0xff]
        %v659 = vld [vmem:[#allocation2 + $0x318] sm:$0xff]
        %v660 = vld [vmem:[#allocation2 + $0x320] sm:$0xff]
        %v661 = vld [vmem:[#allocation2 + $0x328] sm:$0xff]
        %v662 = vld [vmem:[#allocation2 + $0x330] sm:$0xff]
        %v663 = vld [vmem:[#allocation2 + $0x338] sm:$0xff]
        %v664 = vld [vmem:[#allocation2 + $0x340] sm:$0xff]
        %v665 = vld [vmem:[#allocation2 + $0x348] sm:$0xff]
        %v666 = vld [vmem:[#allocation2 + $0x350] sm:$0xff]
        %v667 = vld [vmem:[#allocation2 + $0x358] sm:$0xff]
        %v668 = vld [vmem:[#allocation2 + $0x360] sm:$0xff]
        %v669 = vld [vmem:[#allocation2 + $0x368] sm:$0xff]
        %v670 = vld [vmem:[#allocation2 + $0x370] sm:$0xff]
        %v671 = vld [vmem:[#allocation2 + $0x378] sm:$0xff]
        %v672 = vld [vmem:[#allocation2 + $0x380] sm:$0xff]
        %v673 = vld [vmem:[#allocation2 + $0x388] sm:$0xff]
        %v674 = vld [vmem:[#allocation2 + $0x390] sm:$0xff]
        %v675 = vld [vmem:[#allocation2 + $0x398] sm:$0xff]
        %v676 = vld [vmem:[#allocation2 + $0x3a0] sm:$0xff]
        %v677 = vld [vmem:[#allocation2 + $0x3a8] sm:$0xff]
        %v678 = vld [vmem:[#allocation2 + $0x3b0] sm:$0xff]
        %v679 = vld [vmem:[#allocation2 + $0x3b8] sm:$0xff]
        %v680 = vld [vmem:[#allocation2 + $0x3c0] sm:$0xff]
        %v681 = vld [vmem:[#allocation2 + $0x3c8] sm:$0xff]
        %v682 = vld [vmem:[#allocation2 + $0x3d0] sm:$0xff]
        %v683 = vld [vmem:[#allocation2 + $0x3d8] sm:$0xff]
        %v684 = vld [vmem:[#allocation2 + $0x3e0] sm:$0xff]
        %v685 = vld [vmem:[#allocation2 + $0x3e8] sm:$0xff]
        %v686 = vld [vmem:[#allocation2 + $0x3f0] sm:$0xff]
        %v687 = vld [vmem:[#allocation2 + $0x3f8] sm:$0xff]
        %v688 = vld [vmem:[#allocation2 + $0x400] sm:$0xff]
        %v689 = vld [vmem:[#allocation2 + $0x408] sm:$0xff]
        %v690 = vld [vmem:[#allocation2 + $0x410] sm:$0xff]
        %v691 = vld [vmem:[#allocation2 + $0x418] sm:$0xff]
        %v692 = vld [vmem:[#allocation2 + $0x420] sm:$0xff]
        %v693 = vld [vmem:[#allocation2 + $0x428] sm:$0xff]
        %v694 = vld [vmem:[#allocation2 + $0x430] sm:$0xff]
        %v695 = vld [vmem:[#allocation2 + $0x438] sm:$0xff]
        %v696 = vld [vmem:[#allocation2 + $0x440] sm:$0xff]
        %v697 = vld [vmem:[#allocation2 + $0x448] sm:$0xff]
        %v698 = vld [vmem:[#allocation2 + $0x450] sm:$0xff]
        %v699 = vld [vmem:[#allocation2 + $0x458] sm:$0xff]
        %v700 = vld [vmem:[#allocation2 + $0x460] sm:$0xff]
        %v701 = vld [vmem:[#allocation2 + $0x468] sm:$0xff]
        %v702 = vld [vmem:[#allocation2 + $0x470] sm:$0xff]
        %v703 = vld [vmem:[#allocation2 + $0x478] sm:$0xff]
        %v704 = vld [vmem:[#allocation2 + $0x480] sm:$0xff]
        %v705 = vld [vmem:[#allocation2 + $0x488] sm:$0xff]
        %v706 = vld [vmem:[#allocation2 + $0x490] sm:$0xff]
        %v707 = vld [vmem:[#allocation2 + $0x498] sm:$0xff]
        %v708 = vld [vmem:[#allocation2 + $0x4a0] sm:$0xff]
        %v709 = vld [vmem:[#allocation2 + $0x4a8] sm:$0xff]
        %v710 = vld [vmem:[#allocation2 + $0x4b0] sm:$0xff]
        %v711 = vld [vmem:[#allocation2 + $0x4b8] sm:$0xff]
        %v712 = vld [vmem:[#allocation2 + $0x4c0] sm:$0xff]
        %v713 = vld [vmem:[#allocation2 + $0x4c8] sm:$0xff]
        %v714 = vld [vmem:[#allocation2 + $0x4d0] sm:$0xff]
        %v715 = vld [vmem:[#allocation2 + $0x4d8] sm:$0xff]
        %v716 = vld [vmem:[#allocation2 + $0x4e0] sm:$0xff]
        %v717 = vld [vmem:[#allocation2 + $0x4e8] sm:$0xff]
        %v718 = vld [vmem:[#allocation2 + $0x4f0] sm:$0xff]
        %v719 = vld [vmem:[#allocation2 + $0x4f8] sm:$0xff]
        %v720 = vld [vmem:[#allocation2 + $0x500] sm:$0xff]
        %v721 = vld [vmem:[#allocation2 + $0x508] sm:$0xff]
        %v722 = vld [vmem:[#allocation2 + $0x510] sm:$0xff]
        %v723 = vld [vmem:[#allocation2 + $0x518] sm:$0xff]
        %v724 = vld [vmem:[#allocation2 + $0x520] sm:$0xff]
        %v725 = vld [vmem:[#allocation2 + $0x528] sm:$0xff]
        %v726 = vld [vmem:[#allocation2 + $0x530] sm:$0xff]
        %v727 = vld [vmem:[#allocation2 + $0x538] sm:$0xff]
        %v728 = vld [vmem:[#allocation2 + $0x540] sm:$0xff]
        %v729 = vld [vmem:[#allocation2 + $0x548] sm:$0xff]
        %v730 = vld [vmem:[#allocation2 + $0x550] sm:$0xff]
        %v731 = vld [vmem:[#allocation2 + $0x558] sm:$0xff]
        %v732 = vld [vmem:[#allocation2 + $0x560] sm:$0xff]
        %v733 = vld [vmem:[#allocation2 + $0x568] sm:$0xff]
        %v734 = vld [vmem:[#allocation2 + $0x570] sm:$0xff]
        %v735 = vld [vmem:[#allocation2 + $0x578] sm:$0xff]
        %v736 = vld [vmem:[#allocation2 + $0x580] sm:$0xff]
        %v737 = vld [vmem:[#allocation2 + $0x588] sm:$0xff]
        %v738 = vld [vmem:[#allocation2 + $0x590] sm:$0xff]
        %v739 = vld [vmem:[#allocation2 + $0x598] sm:$0xff]
        %v740 = vld [vmem:[#allocation2 + $0x5a0] sm:$0xff]
        %v741 = vld [vmem:[#allocation2 + $0x5a8] sm:$0xff]
        %v742 = vld [vmem:[#allocation2 + $0x5b0] sm:$0xff]
        %v743 = vld [vmem:[#allocation2 + $0x5b8] sm:$0xff]
        %v744 = vld [vmem:[#allocation2 + $0x5c0] sm:$0xff]
        %v745 = vld [vmem:[#allocation2 + $0x5c8] sm:$0xff]
        %v746 = vld [vmem:[#allocation2 + $0x5d0] sm:$0xff]
        %v747 = vld [vmem:[#allocation2 + $0x5d8] sm:$0xff]
        %v748 = vld [vmem:[#allocation2 + $0x5e0] sm:$0xff]
        %v749 = vld [vmem:[#allocation2 + $0x5e8] sm:$0xff]
        %v750 = vld [vmem:[#allocation2 + $0x5f0] sm:$0xff]
        %v751 = vld [vmem:[#allocation2 + $0x5f8] sm:$0xff]
        %v752 = vld [vmem:[#allocation2 + $0x600] sm:$0xff]
        %v753 = vld [vmem:[#allocation2 + $0x608] sm:$0xff]
        %v754 = vld [vmem:[#allocation2 + $0x610] sm:$0xff]
        %v755 = vld [vmem:[#allocation2 + $0x618] sm:$0xff]
        %v756 = vld [vmem:[#allocation2 + $0x620] sm:$0xff]
        %v757 = vld [vmem:[#allocation2 + $0x628] sm:$0xff]
        %v758 = vld [vmem:[#allocation2 + $0x630] sm:$0xff]
        %v759 = vld [vmem:[#allocation2 + $0x638] sm:$0xff]
        %v760 = vld [vmem:[#allocation2 + $0x640] sm:$0xff]
        %v761 = vld [vmem:[#allocation2 + $0x648] sm:$0xff]
        %v762 = vld [vmem:[#allocation2 + $0x650] sm:$0xff]
        %v763 = vld [vmem:[#allocation2 + $0x658] sm:$0xff]
        %v764 = vld [vmem:[#allocation2 + $0x660] sm:$0xff]
        %v765 = vld [vmem:[#allocation2 + $0x668] sm:$0xff]
        %v766 = vld [vmem:[#allocation2 + $0x670] sm:$0xff]
        %v767 = vld [vmem:[#allocation2 + $0x678] sm:$0xff]
        %v768 = vld [vmem:[#allocation2 + $0x680] sm:$0xff]
        %v769 = vld [vmem:[#allocation2 + $0x688] sm:$0xff]
        %v770 = vld [vmem:[#allocation2 + $0x690] sm:$0xff]
        %v771 = vld [vmem:[#allocation2 + $0x698] sm:$0xff]
        %v772 = vld [vmem:[#allocation2 + $0x6a0] sm:$0xff]
        %v773 = vld [vmem:[#allocation2 + $0x6a8] sm:$0xff]
        %v774 = vld [vmem:[#allocation2 + $0x6b0] sm:$0xff]
        %v775 = vld [vmem:[#allocation2 + $0x6b8] sm:$0xff]
        %v776 = vld [vmem:[#allocation2 + $0x6c0] sm:$0xff]
        %v777 = vld [vmem:[#allocation2 + $0x6c8] sm:$0xff]
        %v778 = vld [vmem:[#allocation2 + $0x6d0] sm:$0xff]
        %v779 = vld [vmem:[#allocation2 + $0x6d8] sm:$0xff]
        %v780 = vld [vmem:[#allocation2 + $0x6e0] sm:$0xff]
        %v781 = vld [vmem:[#allocation2 + $0x6e8] sm:$0xff]
        %v782 = vld [vmem:[#allocation2 + $0x6f0] sm:$0xff]
        %v783 = vld [vmem:[#allocation2 + $0x6f8] sm:$0xff]
        %v784 = vld [vmem:[#allocation2 + $0x700] sm:$0xff]
        %v785 = vld [vmem:[#allocation2 + $0x708] sm:$0xff]
        %v786 = vld [vmem:[#allocation2 + $0x710] sm:$0xff]
        %v787 = vld [vmem:[#allocation2 + $0x718] sm:$0xff]
        %v788 = vld [vmem:[#allocation2 + $0x720] sm:$0xff]
        %v789 = vld [vmem:[#allocation2 + $0x728] sm:$0xff]
        %v790 = vld [vmem:[#allocation2 + $0x730] sm:$0xff]
        %v791 = vld [vmem:[#allocation2 + $0x738] sm:$0xff]
        %v792 = vld [vmem:[#allocation2 + $0x740] sm:$0xff]
        %v793 = vld [vmem:[#allocation2 + $0x748] sm:$0xff]
        %v794 = vld [vmem:[#allocation2 + $0x750] sm:$0xff]
        %v795 = vld [vmem:[#allocation2 + $0x758] sm:$0xff]
        %v796 = vld [vmem:[#allocation2 + $0x760] sm:$0xff]
        %v797 = vld [vmem:[#allocation2 + $0x768] sm:$0xff]
        %v798 = vld [vmem:[#allocation2 + $0x770] sm:$0xff]
        %v799 = vld [vmem:[#allocation2 + $0x778] sm:$0xff]
        %v800 = vld [vmem:[#allocation2 + $0x780] sm:$0xff]
        %v801 = vld [vmem:[#allocation2 + $0x788] sm:$0xff]
        %v802 = vld [vmem:[#allocation2 + $0x790] sm:$0xff]
        %v803 = vld [vmem:[#allocation2 + $0x798] sm:$0xff]
        %v804 = vld [vmem:[#allocation2 + $0x7a0] sm:$0xff]
        %v805 = vld [vmem:[#allocation2 + $0x7a8] sm:$0xff]
        %v806 = vld [vmem:[#allocation2 + $0x7b0] sm:$0xff]
        %v807 = vld [vmem:[#allocation2 + $0x7b8] sm:$0xff]
        %v808 = vld [vmem:[#allocation2 + $0x7c0] sm:$0xff]
        %v809 = vld [vmem:[#allocation2 + $0x7c8] sm:$0xff]
        %v810 = vld [vmem:[#allocation2 + $0x7d0] sm:$0xff]
        %v811 = vld [vmem:[#allocation2 + $0x7d8] sm:$0xff]
        %v812 = vld [vmem:[#allocation2 + $0x7e0] sm:$0xff]
        %v813 = vld [vmem:[#allocation2 + $0x7e8] sm:$0xff]
        %v814 = vld [vmem:[#allocation2 + $0x7f0] sm:$0xff]
        %v815 = vld [vmem:[#allocation2 + $0x7f8] sm:$0xff]
        %v816 = vld [vmem:[%s242] sm:$0xf]
        %v817 = vld [vmem:[%s242 + $0x4] sm:$0xf]
        %v818 = vld [vmem:[%s242 + $0x8] sm:$0xf]
        %v819 = vld [vmem:[%s242 + $0xc] sm:$0xf]
        %v820 = vld [vmem:[%s242 + $0x10] sm:$0xf]
        %v821 = vld [vmem:[%s242 + $0x14] sm:$0xf]
        %v822 = vld [vmem:[%s242 + $0x18] sm:$0xf]
        %v823 = vld [vmem:[%s242 + $0x1c] sm:$0xf]
        %v824 = vld [vmem:[%s242 + $0x20] sm:$0xf]
        %v825 = vld [vmem:[%s242 + $0x24] sm:$0xf]
        %v826 = vld [vmem:[%s242 + $0x28] sm:$0xf]
        %v827 = vld [vmem:[%s242 + $0x2c] sm:$0xf]
        %v828 = vld [vmem:[%s242 + $0x30] sm:$0xf]
        %v829 = vld [vmem:[%s242 + $0x34] sm:$0xf]
        %v830 = vld [vmem:[%s242 + $0x38] sm:$0xf]
        %v831 = vld [vmem:[%s242 + $0x3c] sm:$0xf]
        %v832 = vld [vmem:[%s242 + $0x40] sm:$0xf]
        %v833 = vld [vmem:[%s242 + $0x44] sm:$0xf]
        %v834 = vld [vmem:[%s242 + $0x48] sm:$0xf]
        %v835 = vld [vmem:[%s242 + $0x4c] sm:$0xf]
        %v836 = vld [vmem:[%s242 + $0x50] sm:$0xf]
        %v837 = vld [vmem:[%s242 + $0x54] sm:$0xf]
        %v838 = vld [vmem:[%s242 + $0x58] sm:$0xf]
        %v839 = vld [vmem:[%s242 + $0x5c] sm:$0xf]
        %v840 = vld [vmem:[%s242 + $0x60] sm:$0xf]
        %v841 = vld [vmem:[%s242 + $0x64] sm:$0xf]
        %v842 = vld [vmem:[%s242 + $0x68] sm:$0xf]
        %v843 = vld [vmem:[%s242 + $0x6c] sm:$0xf]
        %v844 = vld [vmem:[%s242 + $0x70] sm:$0xf]
        %v845 = vld [vmem:[%s242 + $0x74] sm:$0xf]
        %v846 = vld [vmem:[%s242 + $0x78] sm:$0xf]
        %v847 = vld [vmem:[%s242 + $0x7c] sm:$0xf]
        %v848 = vld [vmem:[%s242 + $0x80] sm:$0xf]
        %v849 = vld [vmem:[%s242 + $0x84] sm:$0xf]
        %v850 = vld [vmem:[%s242 + $0x88] sm:$0xf]
        %v851 = vld [vmem:[%s242 + $0x8c] sm:$0xf]
        %v852 = vld [vmem:[%s242 + $0x90] sm:$0xf]
        %v853 = vld [vmem:[%s242 + $0x94] sm:$0xf]
        %v854 = vld [vmem:[%s242 + $0x98] sm:$0xf]
        %v855 = vld [vmem:[%s242 + $0x9c] sm:$0xf]
        %v856 = vld [vmem:[%s242 + $0xa0] sm:$0xf]
        %v857 = vld [vmem:[%s242 + $0xa4] sm:$0xf]
        %v858 = vld [vmem:[%s242 + $0xa8] sm:$0xf]
        %v859 = vld [vmem:[%s242 + $0xac] sm:$0xf]
        %v860 = vld [vmem:[%s242 + $0xb0] sm:$0xf]
        %v861 = vld [vmem:[%s242 + $0xb4] sm:$0xf]
        %v862 = vld [vmem:[%s242 + $0xb8] sm:$0xf]
        %v863 = vld [vmem:[%s242 + $0xbc] sm:$0xf]
        %v864 = vld [vmem:[%s242 + $0xc0] sm:$0xf]
        %v865 = vld [vmem:[%s242 + $0xc4] sm:$0xf]
        %v866 = vld [vmem:[%s242 + $0xc8] sm:$0xf]
        %v867 = vld [vmem:[%s242 + $0xcc] sm:$0xf]
        %v868 = vld [vmem:[%s242 + $0xd0] sm:$0xf]
        %v869 = vld [vmem:[%s242 + $0xd4] sm:$0xf]
        %v870 = vld [vmem:[%s242 + $0xd8] sm:$0xf]
        %v871 = vld [vmem:[%s242 + $0xdc] sm:$0xf]
        %v872 = vld [vmem:[%s242 + $0xe0] sm:$0xf]
        %v873 = vld [vmem:[%s242 + $0xe4] sm:$0xf]
        %v874 = vld [vmem:[%s242 + $0xe8] sm:$0xf]
        %v875 = vld [vmem:[%s242 + $0xec] sm:$0xf]
        %v876 = vld [vmem:[%s242 + $0xf0] sm:$0xf]
        %v877 = vld [vmem:[%s242 + $0xf4] sm:$0xf]
        %v878 = vld [vmem:[%s242 + $0xf8] sm:$0xf]
        %v879 = vld [vmem:[%s242 + $0xfc] sm:$0xf]
        %v880 = vld [vmem:[%s251] sm:$0xff]
        %v881 = vld [vmem:[%s251 + $0x8] sm:$0xff]
        %v882 = vld [vmem:[%s251 + $0x10] sm:$0xff]
        %v883 = vld [vmem:[%s251 + $0x18] sm:$0xff]
        %v884 = vld [vmem:[%s251 + $0x20] sm:$0xff]
        %v885 = vld [vmem:[%s251 + $0x28] sm:$0xff]
        %v886 = vld [vmem:[%s251 + $0x30] sm:$0xff]
        %v887 = vld [vmem:[%s251 + $0x38] sm:$0xff]
        %v888 = vld [vmem:[%s251 + $0x40] sm:$0xff]
        %v889 = vld [vmem:[%s251 + $0x48] sm:$0xff]
        %v890 = vld [vmem:[%s251 + $0x50] sm:$0xff]
        %v891 = vld [vmem:[%s251 + $0x58] sm:$0xff]
        %v892 = vld [vmem:[%s251 + $0x60] sm:$0xff]
        %v893 = vld [vmem:[%s251 + $0x68] sm:$0xff]
        %v894 = vld [vmem:[%s251 + $0x70] sm:$0xff]
        %v895 = vld [vmem:[%s251 + $0x78] sm:$0xff]
        %v896 = vld [vmem:[%s251 + $0x80] sm:$0xff]
        %v897 = vld [vmem:[%s251 + $0x88] sm:$0xff]
        %v898 = vld [vmem:[%s251 + $0x90] sm:$0xff]
        %v899 = vld [vmem:[%s251 + $0x98] sm:$0xff]
        %v900 = vld [vmem:[%s251 + $0xa0] sm:$0xff]
        %v901 = vld [vmem:[%s251 + $0xa8] sm:$0xff]
        %v902 = vld [vmem:[%s251 + $0xb0] sm:$0xff]
        %v903 = vld [vmem:[%s251 + $0xb8] sm:$0xff]
        %v904 = vld [vmem:[%s251 + $0xc0] sm:$0xff]
        %v905 = vld [vmem:[%s251 + $0xc8] sm:$0xff]
        %v906 = vld [vmem:[%s251 + $0xd0] sm:$0xff]
        %v907 = vld [vmem:[%s251 + $0xd8] sm:$0xff]
        %v908 = vld [vmem:[%s251 + $0xe0] sm:$0xff]
        %v909 = vld [vmem:[%s251 + $0xe8] sm:$0xff]
        %v910 = vld [vmem:[%s251 + $0xf0] sm:$0xff]
        %v911 = vld [vmem:[%s251 + $0xf8] sm:$0xff]
        %v976 = vunpack.c.l.b16 %v816
        %v977 = vunpack.c.l.b16 %v817
        %v978 = vunpack.c.l.b16 %v818
        %v979 = vunpack.c.l.b16 %v819
        %v980 = vunpack.c.l.b16 %v820
        %v981 = vunpack.c.l.b16 %v821
        %v982 = vunpack.c.l.b16 %v822
        %v983 = vunpack.c.l.b16 %v823
        %v984 = vunpack.c.l.b16 %v824
        %v985 = vunpack.c.l.b16 %v825
        %v986 = vunpack.c.l.b16 %v826
        %v987 = vunpack.c.l.b16 %v827
        %v988 = vunpack.c.l.b16 %v828
        %v989 = vunpack.c.l.b16 %v829
        %v990 = vunpack.c.l.b16 %v830
        %v991 = vunpack.c.l.b16 %v831
        %v992 = vunpack.c.l.b16 %v832
        %v993 = vunpack.c.l.b16 %v833
        %v994 = vunpack.c.l.b16 %v834
        %v995 = vunpack.c.l.b16 %v835
        %v996 = vunpack.c.l.b16 %v836
        %v997 = vunpack.c.l.b16 %v837
        %v998 = vunpack.c.l.b16 %v838
        %v999 = vunpack.c.l.b16 %v839
        %v1000 = vunpack.c.l.b16 %v840
        %v1001 = vunpack.c.l.b16 %v841
        %v1002 = vunpack.c.l.b16 %v842
        %v1003 = vunpack.c.l.b16 %v843
        %v1004 = vunpack.c.l.b16 %v844
        %v1005 = vunpack.c.l.b16 %v845
        %v1006 = vunpack.c.l.b16 %v846
        %v1007 = vunpack.c.l.b16 %v847
        %v1008 = vunpack.c.l.b16 %v848
        %v1009 = vunpack.c.l.b16 %v849
        %v1010 = vunpack.c.l.b16 %v850
        %v1011 = vunpack.c.l.b16 %v851
        %v1012 = vunpack.c.l.b16 %v852
        %v1013 = vunpack.c.l.b16 %v853
        %v1014 = vunpack.c.l.b16 %v854
        %v1015 = vunpack.c.l.b16 %v855
        %v1016 = vunpack.c.l.b16 %v856
        %v1017 = vunpack.c.l.b16 %v857
        %v1018 = vunpack.c.l.b16 %v858
        %v1019 = vunpack.c.l.b16 %v859
        %v1020 = vunpack.c.l.b16 %v860
        %v1021 = vunpack.c.l.b16 %v861
        %v1022 = vunpack.c.l.b16 %v862
        %v1023 = vunpack.c.l.b16 %v863
        %v1024 = vunpack.c.l.b16 %v864
        %v1025 = vunpack.c.l.b16 %v865
        %v1026 = vunpack.c.l.b16 %v866
        %v1027 = vunpack.c.l.b16 %v867
        %v1028 = vunpack.c.l.b16 %v868
        %v1029 = vunpack.c.l.b16 %v869
        %v1030 = vunpack.c.l.b16 %v870
        %v1031 = vunpack.c.l.b16 %v871
        %v1032 = vunpack.c.l.b16 %v872
        %v1033 = vunpack.c.l.b16 %v873
        %v1034 = vunpack.c.l.b16 %v874
        %v1035 = vunpack.c.l.b16 %v875
        %v1036 = vunpack.c.l.b16 %v876
        %v1037 = vunpack.c.l.b16 %v877
        %v1038 = vunpack.c.l.b16 %v878
        %v1039 = vunpack.c.l.b16 %v879
        %v1040 = vpack.c.b16 %v977, %v976
        %v1041 = vpack.c.b16 %v979, %v978
        %v1042 = vpack.c.b16 %v981, %v980
        %v1043 = vpack.c.b16 %v983, %v982
        %v1044 = vpack.c.b16 %v985, %v984
        %v1045 = vpack.c.b16 %v987, %v986
        %v1046 = vpack.c.b16 %v989, %v988
        %v1047 = vpack.c.b16 %v991, %v990
        %v1048 = vpack.c.b16 %v993, %v992
        %v1049 = vpack.c.b16 %v995, %v994
        %v1050 = vpack.c.b16 %v997, %v996
        %v1051 = vpack.c.b16 %v999, %v998
        %v1052 = vpack.c.b16 %v1001, %v1000
        %v1053 = vpack.c.b16 %v1003, %v1002
        %v1054 = vpack.c.b16 %v1005, %v1004
        %v1055 = vpack.c.b16 %v1007, %v1006
        %v1056 = vpack.c.b16 %v1009, %v1008
        %v1057 = vpack.c.b16 %v1011, %v1010
        %v1058 = vpack.c.b16 %v1013, %v1012
        %v1059 = vpack.c.b16 %v1015, %v1014
        %v1060 = vpack.c.b16 %v1017, %v1016
        %v1061 = vpack.c.b16 %v1019, %v1018
        %v1062 = vpack.c.b16 %v1021, %v1020
        %v1063 = vpack.c.b16 %v1023, %v1022
        %v1064 = vpack.c.b16 %v1025, %v1024
        %v1065 = vpack.c.b16 %v1027, %v1026
        %v1066 = vpack.c.b16 %v1029, %v1028
        %v1067 = vpack.c.b16 %v1031, %v1030
        %v1068 = vpack.c.b16 %v1033, %v1032
        %v1069 = vpack.c.b16 %v1035, %v1034
        %v1070 = vpack.c.b16 %v1037, %v1036
        %v1071 = vpack.c.b16 %v1039, %v1038
        %v1136 = vunpack.c.l.b16 %v880
        %v1137 = vunpack.c.h.b16 %v880
        %v1138 = vunpack.c.l.b16 %v881
        %v1139 = vunpack.c.h.b16 %v881
        %v1140 = vunpack.c.l.b16 %v882
        %v1141 = vunpack.c.h.b16 %v882
        %v1142 = vunpack.c.l.b16 %v883
        %v1143 = vunpack.c.h.b16 %v883
        %v1144 = vunpack.c.l.b16 %v884
        %v1145 = vunpack.c.h.b16 %v884
        %v1146 = vunpack.c.l.b16 %v885
        %v1147 = vunpack.c.h.b16 %v885
        %v1148 = vunpack.c.l.b16 %v886
        %v1149 = vunpack.c.h.b16 %v886
        %v1150 = vunpack.c.l.b16 %v887
        %v1151 = vunpack.c.h.b16 %v887
        %v1152 = vunpack.c.l.b16 %v888
        %v1153 = vunpack.c.h.b16 %v888
        %v1154 = vunpack.c.l.b16 %v889
        %v1155 = vunpack.c.h.b16 %v889
        %v1156 = vunpack.c.l.b16 %v890
        %v1157 = vunpack.c.h.b16 %v890
        %v1158 = vunpack.c.l.b16 %v891
        %v1159 = vunpack.c.h.b16 %v891
        %v1160 = vunpack.c.l.b16 %v892
        %v1161 = vunpack.c.h.b16 %v892
        %v1162 = vunpack.c.l.b16 %v893
        %v1163 = vunpack.c.h.b16 %v893
        %v1164 = vunpack.c.l.b16 %v894
        %v1165 = vunpack.c.h.b16 %v894
        %v1166 = vunpack.c.l.b16 %v895
        %v1167 = vunpack.c.h.b16 %v895
        %v1168 = vunpack.c.l.b16 %v896
        %v1169 = vunpack.c.h.b16 %v896
        %v1170 = vunpack.c.l.b16 %v897
        %v1171 = vunpack.c.h.b16 %v897
        %v1172 = vunpack.c.l.b16 %v898
        %v1173 = vunpack.c.h.b16 %v898
        %v1174 = vunpack.c.l.b16 %v899
        %v1175 = vunpack.c.h.b16 %v899
        %v1176 = vunpack.c.l.b16 %v900
        %v1177 = vunpack.c.h.b16 %v900
        %v1178 = vunpack.c.l.b16 %v901
        %v1179 = vunpack.c.h.b16 %v901
        %v1180 = vunpack.c.l.b16 %v902
        %v1181 = vunpack.c.h.b16 %v902
        %v1182 = vunpack.c.l.b16 %v903
        %v1183 = vunpack.c.h.b16 %v903
        %v1184 = vunpack.c.l.b16 %v904
        %v1185 = vunpack.c.h.b16 %v904
        %v1186 = vunpack.c.l.b16 %v905
        %v1187 = vunpack.c.h.b16 %v905
        %v1188 = vunpack.c.l.b16 %v906
        %v1189 = vunpack.c.h.b16 %v906
        %v1190 = vunpack.c.l.b16 %v907
        %v1191 = vunpack.c.h.b16 %v907
        %v1192 = vunpack.c.l.b16 %v908
        %v1193 = vunpack.c.h.b16 %v908
        %v1194 = vunpack.c.l.b16 %v909
        %v1195 = vunpack.c.h.b16 %v909
        %v1196 = vunpack.c.l.b16 %v910
        %v1197 = vunpack.c.h.b16 %v910
        %v1198 = vunpack.c.l.b16 %v911
        %v1199 = vunpack.c.h.b16 %v911
        %v1200 = vpack.c.b16 %v1140, %v1136
        %v1201 = vpack.c.b16 %v1141, %v1137
        %v1202 = vpack.c.b16 %v1142, %v1138
        %v1203 = vpack.c.b16 %v1143, %v1139
        %v1204 = vpack.c.b16 %v1148, %v1144
        %v1205 = vpack.c.b16 %v1149, %v1145
        %v1206 = vpack.c.b16 %v1150, %v1146
        %v1207 = vpack.c.b16 %v1151, %v1147
        %v1208 = vpack.c.b16 %v1156, %v1152
        %v1209 = vpack.c.b16 %v1157, %v1153
        %v1210 = vpack.c.b16 %v1158, %v1154
        %v1211 = vpack.c.b16 %v1159, %v1155
        %v1212 = vpack.c.b16 %v1164, %v1160
        %v1213 = vpack.c.b16 %v1165, %v1161
        %v1214 = vpack.c.b16 %v1166, %v1162
        %v1215 = vpack.c.b16 %v1167, %v1163
        %v1216 = vpack.c.b16 %v1172, %v1168
        %v1217 = vpack.c.b16 %v1173, %v1169
        %v1218 = vpack.c.b16 %v1174, %v1170
        %v1219 = vpack.c.b16 %v1175, %v1171
        %v1220 = vpack.c.b16 %v1180, %v1176
        %v1221 = vpack.c.b16 %v1181, %v1177
        %v1222 = vpack.c.b16 %v1182, %v1178
        %v1223 = vpack.c.b16 %v1183, %v1179
        %v1224 = vpack.c.b16 %v1188, %v1184
        %v1225 = vpack.c.b16 %v1189, %v1185
        %v1226 = vpack.c.b16 %v1190, %v1186
        %v1227 = vpack.c.b16 %v1191, %v1187
        %v1228 = vpack.c.b16 %v1196, %v1192
        %v1229 = vpack.c.b16 %v1197, %v1193
        %v1230 = vpack.c.b16 %v1198, %v1194
        %v1231 = vpack.c.b16 %v1199, %v1195
        %1264 = vmatprep.subr.bf16.mxu0 %v1201
        %1265 = vmatpush1.bf16.msra.mxu0 %v1200
        %1266 = vmatprep.subr.bf16.mxu0 %v1205
        %1267 = vmatpush1.bf16.msra.mxu0 %v1204
        %1268 = vmatprep.subr.bf16.mxu0 %v1209
        %1269 = vmatpush1.bf16.msra.mxu0 %v1208
        %1270 = vmatprep.subr.bf16.mxu0 %v1213
        %1271 = vmatpush1.bf16.msra.mxu0 %v1212
        %1272 = vmatprep.subr.bf16.mxu0 %v1217
        %1273 = vmatpush1.bf16.msra.mxu0 %v1216
        %1274 = vmatprep.subr.bf16.mxu0 %v1221
        %1275 = vmatpush1.bf16.msra.mxu0 %v1220
        %1276 = vmatprep.subr.bf16.mxu0 %v1225
        %1277 = vmatpush1.bf16.msra.mxu0 %v1224
        %1278 = vmatprep.subr.bf16.mxu0 %v1229
        %1279 = vmatpush1.bf16.msra.mxu0 %v1228
        %1280 = vmatprep.subr.bf16.mxu0 0
        %1281 = vmatpush1.bf16.msra.mxu0 0
        %1282 = vmatprep.subr.bf16.mxu0 0
        %1283 = vmatpush1.bf16.msra.mxu0 0
        %1284 = vmatprep.subr.bf16.mxu0 0
        %1285 = vmatpush1.bf16.msra.mxu0 0
        %1286 = vmatprep.subr.bf16.mxu0 0
        %1287 = vmatpush1.bf16.msra.mxu0 0
        %1288 = vmatprep.subr.bf16.mxu0 0
        %1289 = vmatpush1.bf16.msra.mxu0 0
        %1290 = vmatprep.subr.bf16.mxu0 0
        %1291 = vmatpush1.bf16.msra.mxu0 0
        %1292 = vmatprep.subr.bf16.mxu0 0
        %1293 = vmatpush1.bf16.msra.mxu0 0
        %1294 = vmatprep.subr.bf16.mxu0 0
        %1295 = vmatpush1.bf16.msra.mxu0 0
        %1296 = vmatprep.mubr.bf16.mxu0 0
        %1297 = vmatmul.mubr.bf16.gmra.mrb[0].mxu0 %v1040
        %v1298 = vpop.f32.mrb[0].mxu0
        %v1299 = vadd.f32 0.0, %v1298
        %v1300 = vpop.f32.mrb[0].mxu0
        %v1301 = vadd.f32 0.0, %v1300
        %v1302 = vpop.f32.mrb[0].mxu0
        %v1303 = vadd.f32 0.0, %v1302
        %v1304 = vpop.f32.mrb[0].mxu0
        %v1305 = vadd.f32 0.0, %v1304
        %1306 = vmatprep.mubr.bf16.mxu0 0
        %1307 = vmatmul.mubr.bf16.gmra.mrb[0].mxu0 %v1041
        %v1308 = vpop.f32.mrb[0].mxu0
        %v1309 = vadd.f32 0.0, %v1308
        %v1310 = vpop.f32.mrb[0].mxu0
        %v1311 = vadd.f32 0.0, %v1310
        %v1312 = vpop.f32.mrb[0].mxu0
        %v1313 = vadd.f32 0.0, %v1312
        %v1314 = vpop.f32.mrb[0].mxu0
        %v1315 = vadd.f32 0.0, %v1314
        %1316 = vmatprep.mubr.bf16.mxu0 0
        %1317 = vmatmul.mubr.bf16.gmra.mrb[0].mxu0 %v1042
        %v1318 = vpop.f32.mrb[0].mxu0
        %v1319 = vadd.f32 0.0, %v1318
        %v1320 = vpop.f32.mrb[0].mxu0
        %v1321 = vadd.f32 0.0, %v1320
        %v1322 = vpop.f32.mrb[0].mxu0
        %v1323 = vadd.f32 0.0, %v1322
        %v1324 = vpop.f32.mrb[0].mxu0
        %v1325 = vadd.f32 0.0, %v1324
        %1326 = vmatprep.mubr.bf16.mxu0 0
        %1327 = vmatmul.mubr.bf16.gmra.mrb[0].mxu0 %v1043
        %v1328 = vpop.f32.mrb[0].mxu0
        %v1329 = vadd.f32 0.0, %v1328
        %v1330 = vpop.f32.mrb[0].mxu0
        %v1331 = vadd.f32 0.0, %v1330
        %v1332 = vpop.f32.mrb[0].mxu0
        %v1333 = vadd.f32 0.0, %v1332
        %v1334 = vpop.f32.mrb[0].mxu0
        %v1335 = vadd.f32 0.0, %v1334
        %1336 = vmatprep.mubr.bf16.mxu0 0
        %1337 = vmatmul.mubr.bf16.gmra.mrb[0].mxu0 %v1044
        %v1338 = vpop.f32.mrb[0].mxu0
        %v1339 = vadd.f32 0.0, %v1338
        %v1340 = vpop.f32.mrb[0].mxu0
        %v1341 = vadd.f32 0.0, %v1340
        %v1342 = vpop.f32.mrb[0].mxu0
        %v1343 = vadd.f32 0.0, %v1342
        %v1344 = vpop.f32.mrb[0].mxu0
        %v1345 = vadd.f32 0.0, %v1344
        %1346 = vmatprep.mubr.bf16.mxu0 0
        %1347 = vmatmul.mubr.bf16.gmra.mrb[0].mxu0 %v1045
        %v1348 = vpop.f32.mrb[0].mxu0
        %v1349 = vadd.f32 0.0, %v1348
        %v1350 = vpop.f32.mrb[0].mxu0
        %v1351 = vadd.f32 0.0, %v1350
        %v1352 = vpop.f32.mrb[0].mxu0
        %v1353 = vadd.f32 0.0, %v1352
        %v1354 = vpop.f32.mrb[0].mxu0
        %v1355 = vadd.f32 0.0, %v1354
        %1356 = vmatprep.mubr.bf16.mxu0 0
        %1357 = vmatmul.mubr.bf16.gmra.mrb[0].mxu0 %v1046
        %v1358 = vpop.f32.mrb[0].mxu0
        %v1359 = vadd.f32 0.0, %v1358
        %v1360 = vpop.f32.mrb[0].mxu0
        %v1361 = vadd.f32 0.0, %v1360
        %v1362 = vpop.f32.mrb[0].mxu0
        %v1363 = vadd.f32 0.0, %v1362
        %v1364 = vpop.f32.mrb[0].mxu0
        %v1365 = vadd.f32 0.0, %v1364
        %1366 = vmatprep.mubr.bf16.mxu0 0
        %1367 = vmatmul.mubr.bf16.gmra.mrb[0].mxu0 %v1047
        %v1368 = vpop.f32.mrb[0].mxu0
        %v1369 = vadd.f32 0.0, %v1368
        %v1370 = vpop.f32.mrb[0].mxu0
        %v1371 = vadd.f32 0.0, %v1370
        %v1372 = vpop.f32.mrb[0].mxu0
        %v1373 = vadd.f32 0.0, %v1372
        %v1374 = vpop.f32.mrb[0].mxu0
        %v1375 = vadd.f32 0.0, %v1374
        %1376 = vmatprep.mubr.bf16.mxu0 0
        %1377 = vmatmul.mubr.bf16.gmra.mrb[0].mxu0 %v1048
        %v1378 = vpop.f32.mrb[0].mxu0
        %v1379 = vadd.f32 0.0, %v1378
        %v1380 = vpop.f32.mrb[0].mxu0
        %v1381 = vadd.f32 0.0, %v1380
        %v1382 = vpop.f32.mrb[0].mxu0
        %v1383 = vadd.f32 0.0, %v1382
        %v1384 = vpop.f32.mrb[0].mxu0
        %v1385 = vadd.f32 0.0, %v1384
        %1386 = vmatprep.mubr.bf16.mxu0 0
        %1387 = vmatmul.mubr.bf16.gmra.mrb[0].mxu0 %v1049
        %v1388 = vpop.f32.mrb[0].mxu0
        %v1389 = vadd.f32 0.0, %v1388
        %v1390 = vpop.f32.mrb[0].mxu0
        %v1391 = vadd.f32 0.0, %v1390
        %v1392 = vpop.f32.mrb[0].mxu0
        %v1393 = vadd.f32 0.0, %v1392
        %v1394 = vpop.f32.mrb[0].mxu0
        %v1395 = vadd.f32 0.0, %v1394
        %1396 = vmatprep.mubr.bf16.mxu0 0
        %1397 = vmatmul.mubr.bf16.gmra.mrb[0].mxu0 %v1050
        %v1398 = vpop.f32.mrb[0].mxu0
        %v1399 = vadd.f32 0.0, %v1398
        %v1400 = vpop.f32.mrb[0].mxu0
        %v1401 = vadd.f32 0.0, %v1400
        %v1402 = vpop.f32.mrb[0].mxu0
        %v1403 = vadd.f32 0.0, %v1402
        %v1404 = vpop.f32.mrb[0].mxu0
        %v1405 = vadd.f32 0.0, %v1404
        %1406 = vmatprep.mubr.bf16.mxu0 0
        %1407 = vmatmul.mubr.bf16.gmra.mrb[0].mxu0 %v1051
        %v1408 = vpop.f32.mrb[0].mxu0
        %v1409 = vadd.f32 0.0, %v1408
        %v1410 = vpop.f32.mrb[0].mxu0
        %v1411 = vadd.f32 0.0, %v1410
        %v1412 = vpop.f32.mrb[0].mxu0
        %v1413 = vadd.f32 0.0, %v1412
        %v1414 = vpop.f32.mrb[0].mxu0
        %v1415 = vadd.f32 0.0, %v1414
        %1416 = vmatprep.mubr.bf16.mxu0 0
        %1417 = vmatmul.mubr.bf16.gmra.mrb[0].mxu0 %v1052
        %v1418 = vpop.f32.mrb[0].mxu0
        %v1419 = vadd.f32 0.0, %v1418
        %v1420 = vpop.f32.mrb[0].mxu0
        %v1421 = vadd.f32 0.0, %v1420
        %v1422 = vpop.f32.mrb[0].mxu0
        %v1423 = vadd.f32 0.0, %v1422
        %v1424 = vpop.f32.mrb[0].mxu0
        %v1425 = vadd.f32 0.0, %v1424
        %1426 = vmatprep.mubr.bf16.mxu0 0
        %1427 = vmatmul.mubr.bf16.gmra.mrb[0].mxu0 %v1053
        %v1428 = vpop.f32.mrb[0].mxu0
        %v1429 = vadd.f32 0.0, %v1428
        %v1430 = vpop.f32.mrb[0].mxu0
        %v1431 = vadd.f32 0.0, %v1430
        %v1432 = vpop.f32.mrb[0].mxu0
        %v1433 = vadd.f32 0.0, %v1432
        %v1434 = vpop.f32.mrb[0].mxu0
        %v1435 = vadd.f32 0.0, %v1434
        %1436 = vmatprep.mubr.bf16.mxu0 0
        %1437 = vmatmul.mubr.bf16.gmra.mrb[0].mxu0 %v1054
        %v1438 = vpop.f32.mrb[0].mxu0
        %v1439 = vadd.f32 0.0, %v1438
        %v1440 = vpop.f32.mrb[0].mxu0
        %v1441 = vadd.f32 0.0, %v1440
        %v1442 = vpop.f32.mrb[0].mxu0
        %v1443 = vadd.f32 0.0, %v1442
        %v1444 = vpop.f32.mrb[0].mxu0
        %v1445 = vadd.f32 0.0, %v1444
        %1446 = vmatprep.mubr.bf16.mxu0 0
        %1447 = vmatmul.mubr.bf16.gmra.mrb[0].mxu0 %v1055
        %v1448 = vpop.f32.mrb[0].mxu0
        %v1449 = vadd.f32 0.0, %v1448
        %v1450 = vpop.f32.mrb[0].mxu0
        %v1451 = vadd.f32 0.0, %v1450
        %v1452 = vpop.f32.mrb[0].mxu0
        %v1453 = vadd.f32 0.0, %v1452
        %v1454 = vpop.f32.mrb[0].mxu0
        %v1455 = vadd.f32 0.0, %v1454
        %1456 = vmatprep.mubr.bf16.mxu0 0
        %1457 = vmatmul.mubr.bf16.gmra.mrb[0].mxu0 %v1056
        %v1458 = vpop.f32.mrb[0].mxu0
        %v1459 = vadd.f32 0.0, %v1458
        %v1460 = vpop.f32.mrb[0].mxu0
        %v1461 = vadd.f32 0.0, %v1460
        %v1462 = vpop.f32.mrb[0].mxu0
        %v1463 = vadd.f32 0.0, %v1462
        %v1464 = vpop.f32.mrb[0].mxu0
        %v1465 = vadd.f32 0.0, %v1464
        %1466 = vmatprep.mubr.bf16.mxu0 0
        %1467 = vmatmul.mubr.bf16.gmra.mrb[0].mxu0 %v1057
        %v1468 = vpop.f32.mrb[0].mxu0
        %v1469 = vadd.f32 0.0, %v1468
        %v1470 = vpop.f32.mrb[0].mxu0
        %v1471 = vadd.f32 0.0, %v1470
        %v1472 = vpop.f32.mrb[0].mxu0
        %v1473 = vadd.f32 0.0, %v1472
        %v1474 = vpop.f32.mrb[0].mxu0
        %v1475 = vadd.f32 0.0, %v1474
        %1476 = vmatprep.mubr.bf16.mxu0 0
        %1477 = vmatmul.mubr.bf16.gmra.mrb[0].mxu0 %v1058
        %v1478 = vpop.f32.mrb[0].mxu0
        %v1479 = vadd.f32 0.0, %v1478
        %v1480 = vpop.f32.mrb[0].mxu0
        %v1481 = vadd.f32 0.0, %v1480
        %v1482 = vpop.f32.mrb[0].mxu0
        %v1483 = vadd.f32 0.0, %v1482
        %v1484 = vpop.f32.mrb[0].mxu0
        %v1485 = vadd.f32 0.0, %v1484
        %1486 = vmatprep.mubr.bf16.mxu0 0
        %1487 = vmatmul.mubr.bf16.gmra.mrb[0].mxu0 %v1059
        %v1488 = vpop.f32.mrb[0].mxu0
        %v1489 = vadd.f32 0.0, %v1488
        %v1490 = vpop.f32.mrb[0].mxu0
        %v1491 = vadd.f32 0.0, %v1490
        %v1492 = vpop.f32.mrb[0].mxu0
        %v1493 = vadd.f32 0.0, %v1492
        %v1494 = vpop.f32.mrb[0].mxu0
        %v1495 = vadd.f32 0.0, %v1494
        %1496 = vmatprep.mubr.bf16.mxu0 0
        %1497 = vmatmul.mubr.bf16.gmra.mrb[0].mxu0 %v1060
        %v1498 = vpop.f32.mrb[0].mxu0
        %v1499 = vadd.f32 0.0, %v1498
        %v1500 = vpop.f32.mrb[0].mxu0
        %v1501 = vadd.f32 0.0, %v1500
        %v1502 = vpop.f32.mrb[0].mxu0
        %v1503 = vadd.f32 0.0, %v1502
        %v1504 = vpop.f32.mrb[0].mxu0
        %v1505 = vadd.f32 0.0, %v1504
        %1506 = vmatprep.mubr.bf16.mxu0 0
        %1507 = vmatmul.mubr.bf16.gmra.mrb[0].mxu0 %v1061
        %v1508 = vpop.f32.mrb[0].mxu0
        %v1509 = vadd.f32 0.0, %v1508
        %v1510 = vpop.f32.mrb[0].mxu0
        %v1511 = vadd.f32 0.0, %v1510
        %v1512 = vpop.f32.mrb[0].mxu0
        %v1513 = vadd.f32 0.0, %v1512
        %v1514 = vpop.f32.mrb[0].mxu0
        %v1515 = vadd.f32 0.0, %v1514
        %1516 = vmatprep.mubr.bf16.mxu0 0
        %1517 = vmatmul.mubr.bf16.gmra.mrb[0].mxu0 %v1062
        %v1518 = vpop.f32.mrb[0].mxu0
        %v1519 = vadd.f32 0.0, %v1518
        %v1520 = vpop.f32.mrb[0].mxu0
        %v1521 = vadd.f32 0.0, %v1520
        %v1522 = vpop.f32.mrb[0].mxu0
        %v1523 = vadd.f32 0.0, %v1522
        %v1524 = vpop.f32.mrb[0].mxu0
        %v1525 = vadd.f32 0.0, %v1524
        %1526 = vmatprep.mubr.bf16.mxu0 0
        %1527 = vmatmul.mubr.bf16.gmra.mrb[0].mxu0 %v1063
        %v1528 = vpop.f32.mrb[0].mxu0
        %v1529 = vadd.f32 0.0, %v1528
        %v1530 = vpop.f32.mrb[0].mxu0
        %v1531 = vadd.f32 0.0, %v1530
        %v1532 = vpop.f32.mrb[0].mxu0
        %v1533 = vadd.f32 0.0, %v1532
        %v1534 = vpop.f32.mrb[0].mxu0
        %v1535 = vadd.f32 0.0, %v1534
        %1536 = vmatprep.mubr.bf16.mxu0 0
        %1537 = vmatmul.mubr.bf16.gmra.mrb[0].mxu0 %v1064
        %v1538 = vpop.f32.mrb[0].mxu0
        %v1539 = vadd.f32 0.0, %v1538
        %v1540 = vpop.f32.mrb[0].mxu0
        %v1541 = vadd.f32 0.0, %v1540
        %v1542 = vpop.f32.mrb[0].mxu0
        %v1543 = vadd.f32 0.0, %v1542
        %v1544 = vpop.f32.mrb[0].mxu0
        %v1545 = vadd.f32 0.0, %v1544
        %1546 = vmatprep.mubr.bf16.mxu0 0
        %1547 = vmatmul.mubr.bf16.gmra.mrb[0].mxu0 %v1065
        %v1548 = vpop.f32.mrb[0].mxu0
        %v1549 = vadd.f32 0.0, %v1548
        %v1550 = vpop.f32.mrb[0].mxu0
        %v1551 = vadd.f32 0.0, %v1550
        %v1552 = vpop.f32.mrb[0].mxu0
        %v1553 = vadd.f32 0.0, %v1552
        %v1554 = vpop.f32.mrb[0].mxu0
        %v1555 = vadd.f32 0.0, %v1554
        %1556 = vmatprep.mubr.bf16.mxu0 0
        %1557 = vmatmul.mubr.bf16.gmra.mrb[0].mxu0 %v1066
        %v1558 = vpop.f32.mrb[0].mxu0
        %v1559 = vadd.f32 0.0, %v1558
        %v1560 = vpop.f32.mrb[0].mxu0
        %v1561 = vadd.f32 0.0, %v1560
        %v1562 = vpop.f32.mrb[0].mxu0
        %v1563 = vadd.f32 0.0, %v1562
        %v1564 = vpop.f32.mrb[0].mxu0
        %v1565 = vadd.f32 0.0, %v1564
        %1566 = vmatprep.mubr.bf16.mxu0 0
        %1567 = vmatmul.mubr.bf16.gmra.mrb[0].mxu0 %v1067
        %v1568 = vpop.f32.mrb[0].mxu0
        %v1569 = vadd.f32 0.0, %v1568
        %v1570 = vpop.f32.mrb[0].mxu0
        %v1571 = vadd.f32 0.0, %v1570
        %v1572 = vpop.f32.mrb[0].mxu0
        %v1573 = vadd.f32 0.0, %v1572
        %v1574 = vpop.f32.mrb[0].mxu0
        %v1575 = vadd.f32 0.0, %v1574
        %1576 = vmatprep.mubr.bf16.mxu0 0
        %1577 = vmatmul.mubr.bf16.gmra.mrb[0].mxu0 %v1068
        %v1578 = vpop.f32.mrb[0].mxu0
        %v1579 = vadd.f32 0.0, %v1578
        %v1580 = vpop.f32.mrb[0].mxu0
        %v1581 = vadd.f32 0.0, %v1580
        %v1582 = vpop.f32.mrb[0].mxu0
        %v1583 = vadd.f32 0.0, %v1582
        %v1584 = vpop.f32.mrb[0].mxu0
        %v1585 = vadd.f32 0.0, %v1584
        %1586 = vmatprep.mubr.bf16.mxu0 0
        %1587 = vmatmul.mubr.bf16.gmra.mrb[0].mxu0 %v1069
        %v1588 = vpop.f32.mrb[0].mxu0
        %v1589 = vadd.f32 0.0, %v1588
        %v1590 = vpop.f32.mrb[0].mxu0
        %v1591 = vadd.f32 0.0, %v1590
        %v1592 = vpop.f32.mrb[0].mxu0
        %v1593 = vadd.f32 0.0, %v1592
        %v1594 = vpop.f32.mrb[0].mxu0
        %v1595 = vadd.f32 0.0, %v1594
        %1596 = vmatprep.mubr.bf16.mxu0 0
        %1597 = vmatmul.mubr.bf16.gmra.mrb[0].mxu0 %v1070
        %v1598 = vpop.f32.mrb[0].mxu0
        %v1599 = vadd.f32 0.0, %v1598
        %v1600 = vpop.f32.mrb[0].mxu0
        %v1601 = vadd.f32 0.0, %v1600
        %v1602 = vpop.f32.mrb[0].mxu0
        %v1603 = vadd.f32 0.0, %v1602
        %v1604 = vpop.f32.mrb[0].mxu0
        %v1605 = vadd.f32 0.0, %v1604
        %1606 = vmatprep.mubr.bf16.mxu0 0
        %1607 = vmatmul.mubr.bf16.gmra.mrb[0].mxu0 %v1071
        %v1608 = vpop.f32.mrb[0].mxu0
        %v1609 = vadd.f32 0.0, %v1608
        %v1610 = vpop.f32.mrb[0].mxu0
        %v1611 = vadd.f32 0.0, %v1610
        %v1612 = vpop.f32.mrb[0].mxu0
        %v1613 = vadd.f32 0.0, %v1612
        %v1614 = vpop.f32.mrb[0].mxu0
        %v1615 = vadd.f32 0.0, %v1614
        %1616 = vdwg.mxu0
        %1617 = vmatprep.subr.bf16.mxu0 %v1203
        %1618 = vmatpush1.bf16.msra.mxu0 %v1202
        %1619 = vmatprep.subr.bf16.mxu0 %v1207
        %1620 = vmatpush1.bf16.msra.mxu0 %v1206
        %1621 = vmatprep.subr.bf16.mxu0 %v1211
        %1622 = vmatpush1.bf16.msra.mxu0 %v1210
        %1623 = vmatprep.subr.bf16.mxu0 %v1215
        %1624 = vmatpush1.bf16.msra.mxu0 %v1214
        %1625 = vmatprep.subr.bf16.mxu0 %v1219
        %1626 = vmatpush1.bf16.msra.mxu0 %v1218
        %1627 = vmatprep.subr.bf16.mxu0 %v1223
        %1628 = vmatpush1.bf16.msra.mxu0 %v1222
        %1629 = vmatprep.subr.bf16.mxu0 %v1227
        %1630 = vmatpush1.bf16.msra.mxu0 %v1226
        %1631 = vmatprep.subr.bf16.mxu0 %v1231
        %1632 = vmatpush1.bf16.msra.mxu0 %v1230
        %1633 = vmatprep.subr.bf16.mxu0 0
        %1634 = vmatpush1.bf16.msra.mxu0 0
        %1635 = vmatprep.subr.bf16.mxu0 0
        %1636 = vmatpush1.bf16.msra.mxu0 0
        %1637 = vmatprep.subr.bf16.mxu0 0
        %1638 = vmatpush1.bf16.msra.mxu0 0
        %1639 = vmatprep.subr.bf16.mxu0 0
        %1640 = vmatpush1.bf16.msra.mxu0 0
        %1641 = vmatprep.subr.bf16.mxu0 0
        %1642 = vmatpush1.bf16.msra.mxu0 0
        %1643 = vmatprep.subr.bf16.mxu0 0
        %1644 = vmatpush1.bf16.msra.mxu0 0
        %1645 = vmatprep.subr.bf16.mxu0 0
        %1646 = vmatpush1.bf16.msra.mxu0 0
        %1647 = vmatprep.subr.bf16.mxu0 0
        %1648 = vmatpush1.bf16.msra.mxu0 0
        %1649 = vmatprep.mubr.bf16.mxu0 0
        %1650 = vmatmul.mubr.bf16.gmra.mrb[0].mxu0 %v1040
        %v1651 = vpop.f32.mrb[0].mxu0
        %v1652 = vadd.f32 0.0, %v1651
        %v1653 = vpop.f32.mrb[0].mxu0
        %v1654 = vadd.f32 0.0, %v1653
        %v1655 = vpop.f32.mrb[0].mxu0
        %v1656 = vadd.f32 0.0, %v1655
        %v1657 = vpop.f32.mrb[0].mxu0
        %v1658 = vadd.f32 0.0, %v1657
        %1659 = vmatprep.mubr.bf16.mxu0 0
        %1660 = vmatmul.mubr.bf16.gmra.mrb[0].mxu0 %v1041
        %v1661 = vpop.f32.mrb[0].mxu0
        %v1662 = vadd.f32 0.0, %v1661
        %v1663 = vpop.f32.mrb[0].mxu0
        %v1664 = vadd.f32 0.0, %v1663
        %v1665 = vpop.f32.mrb[0].mxu0
        %v1666 = vadd.f32 0.0, %v1665
        %v1667 = vpop.f32.mrb[0].mxu0
        %v1668 = vadd.f32 0.0, %v1667
        %1669 = vmatprep.mubr.bf16.mxu0 0
        %1670 = vmatmul.mubr.bf16.gmra.mrb[0].mxu0 %v1042
        %v1671 = vpop.f32.mrb[0].mxu0
        %v1672 = vadd.f32 0.0, %v1671
        %v1673 = vpop.f32.mrb[0].mxu0
        %v1674 = vadd.f32 0.0, %v1673
        %v1675 = vpop.f32.mrb[0].mxu0
        %v1676 = vadd.f32 0.0, %v1675
        %v1677 = vpop.f32.mrb[0].mxu0
        %v1678 = vadd.f32 0.0, %v1677
        %1679 = vmatprep.mubr.bf16.mxu0 0
        %1680 = vmatmul.mubr.bf16.gmra.mrb[0].mxu0 %v1043
        %v1681 = vpop.f32.mrb[0].mxu0
        %v1682 = vadd.f32 0.0, %v1681
        %v1683 = vpop.f32.mrb[0].mxu0
        %v1684 = vadd.f32 0.0, %v1683
        %v1685 = vpop.f32.mrb[0].mxu0
        %v1686 = vadd.f32 0.0, %v1685
        %v1687 = vpop.f32.mrb[0].mxu0
        %v1688 = vadd.f32 0.0, %v1687
        %1689 = vmatprep.mubr.bf16.mxu0 0
        %1690 = vmatmul.mubr.bf16.gmra.mrb[0].mxu0 %v1044
        %v1691 = vpop.f32.mrb[0].mxu0
        %v1692 = vadd.f32 0.0, %v1691
        %v1693 = vpop.f32.mrb[0].mxu0
        %v1694 = vadd.f32 0.0, %v1693
        %v1695 = vpop.f32.mrb[0].mxu0
        %v1696 = vadd.f32 0.0, %v1695
        %v1697 = vpop.f32.mrb[0].mxu0
        %v1698 = vadd.f32 0.0, %v1697
        %1699 = vmatprep.mubr.bf16.mxu0 0
        %1700 = vmatmul.mubr.bf16.gmra.mrb[0].mxu0 %v1045
        %v1701 = vpop.f32.mrb[0].mxu0
        %v1702 = vadd.f32 0.0, %v1701
        %v1703 = vpop.f32.mrb[0].mxu0
        %v1704 = vadd.f32 0.0, %v1703
        %v1705 = vpop.f32.mrb[0].mxu0
        %v1706 = vadd.f32 0.0, %v1705
        %v1707 = vpop.f32.mrb[0].mxu0
        %v1708 = vadd.f32 0.0, %v1707
        %1709 = vmatprep.mubr.bf16.mxu0 0
        %1710 = vmatmul.mubr.bf16.gmra.mrb[0].mxu0 %v1046
        %v1711 = vpop.f32.mrb[0].mxu0
        %v1712 = vadd.f32 0.0, %v1711
        %v1713 = vpop.f32.mrb[0].mxu0
        %v1714 = vadd.f32 0.0, %v1713
        %v1715 = vpop.f32.mrb[0].mxu0
        %v1716 = vadd.f32 0.0, %v1715
        %v1717 = vpop.f32.mrb[0].mxu0
        %v1718 = vadd.f32 0.0, %v1717
        %1719 = vmatprep.mubr.bf16.mxu0 0
        %1720 = vmatmul.mubr.bf16.gmra.mrb[0].mxu0 %v1047
        %v1721 = vpop.f32.mrb[0].mxu0
        %v1722 = vadd.f32 0.0, %v1721
        %v1723 = vpop.f32.mrb[0].mxu0
        %v1724 = vadd.f32 0.0, %v1723
        %v1725 = vpop.f32.mrb[0].mxu0
        %v1726 = vadd.f32 0.0, %v1725
        %v1727 = vpop.f32.mrb[0].mxu0
        %v1728 = vadd.f32 0.0, %v1727
        %1729 = vmatprep.mubr.bf16.mxu0 0
        %1730 = vmatmul.mubr.bf16.gmra.mrb[0].mxu0 %v1048
        %v1731 = vpop.f32.mrb[0].mxu0
        %v1732 = vadd.f32 0.0, %v1731
        %v1733 = vpop.f32.mrb[0].mxu0
        %v1734 = vadd.f32 0.0, %v1733
        %v1735 = vpop.f32.mrb[0].mxu0
        %v1736 = vadd.f32 0.0, %v1735
        %v1737 = vpop.f32.mrb[0].mxu0
        %v1738 = vadd.f32 0.0, %v1737
        %1739 = vmatprep.mubr.bf16.mxu0 0
        %1740 = vmatmul.mubr.bf16.gmra.mrb[0].mxu0 %v1049
        %v1741 = vpop.f32.mrb[0].mxu0
        %v1742 = vadd.f32 0.0, %v1741
        %v1743 = vpop.f32.mrb[0].mxu0
        %v1744 = vadd.f32 0.0, %v1743
        %v1745 = vpop.f32.mrb[0].mxu0
        %v1746 = vadd.f32 0.0, %v1745
        %v1747 = vpop.f32.mrb[0].mxu0
        %v1748 = vadd.f32 0.0, %v1747
        %1749 = vmatprep.mubr.bf16.mxu0 0
        %1750 = vmatmul.mubr.bf16.gmra.mrb[0].mxu0 %v1050
        %v1751 = vpop.f32.mrb[0].mxu0
        %v1752 = vadd.f32 0.0, %v1751
        %v1753 = vpop.f32.mrb[0].mxu0
        %v1754 = vadd.f32 0.0, %v1753
        %v1755 = vpop.f32.mrb[0].mxu0
        %v1756 = vadd.f32 0.0, %v1755
        %v1757 = vpop.f32.mrb[0].mxu0
        %v1758 = vadd.f32 0.0, %v1757
        %1759 = vmatprep.mubr.bf16.mxu0 0
        %1760 = vmatmul.mubr.bf16.gmra.mrb[0].mxu0 %v1051
        %v1761 = vpop.f32.mrb[0].mxu0
        %v1762 = vadd.f32 0.0, %v1761
        %v1763 = vpop.f32.mrb[0].mxu0
        %v1764 = vadd.f32 0.0, %v1763
        %v1765 = vpop.f32.mrb[0].mxu0
        %v1766 = vadd.f32 0.0, %v1765
        %v1767 = vpop.f32.mrb[0].mxu0
        %v1768 = vadd.f32 0.0, %v1767
        %1769 = vmatprep.mubr.bf16.mxu0 0
        %1770 = vmatmul.mubr.bf16.gmra.mrb[0].mxu0 %v1052
        %v1771 = vpop.f32.mrb[0].mxu0
        %v1772 = vadd.f32 0.0, %v1771
        %v1773 = vpop.f32.mrb[0].mxu0
        %v1774 = vadd.f32 0.0, %v1773
        %v1775 = vpop.f32.mrb[0].mxu0
        %v1776 = vadd.f32 0.0, %v1775
        %v1777 = vpop.f32.mrb[0].mxu0
        %v1778 = vadd.f32 0.0, %v1777
        %1779 = vmatprep.mubr.bf16.mxu0 0
        %1780 = vmatmul.mubr.bf16.gmra.mrb[0].mxu0 %v1053
        %v1781 = vpop.f32.mrb[0].mxu0
        %v1782 = vadd.f32 0.0, %v1781
        %v1783 = vpop.f32.mrb[0].mxu0
        %v1784 = vadd.f32 0.0, %v1783
        %v1785 = vpop.f32.mrb[0].mxu0
        %v1786 = vadd.f32 0.0, %v1785
        %v1787 = vpop.f32.mrb[0].mxu0
        %v1788 = vadd.f32 0.0, %v1787
        %1789 = vmatprep.mubr.bf16.mxu0 0
        %1790 = vmatmul.mubr.bf16.gmra.mrb[0].mxu0 %v1054
        %v1791 = vpop.f32.mrb[0].mxu0
        %v1792 = vadd.f32 0.0, %v1791
        %v1793 = vpop.f32.mrb[0].mxu0
        %v1794 = vadd.f32 0.0, %v1793
        %v1795 = vpop.f32.mrb[0].mxu0
        %v1796 = vadd.f32 0.0, %v1795
        %v1797 = vpop.f32.mrb[0].mxu0
        %v1798 = vadd.f32 0.0, %v1797
        %1799 = vmatprep.mubr.bf16.mxu0 0
        %1800 = vmatmul.mubr.bf16.gmra.mrb[0].mxu0 %v1055
        %v1801 = vpop.f32.mrb[0].mxu0
        %v1802 = vadd.f32 0.0, %v1801
        %v1803 = vpop.f32.mrb[0].mxu0
        %v1804 = vadd.f32 0.0, %v1803
        %v1805 = vpop.f32.mrb[0].mxu0
        %v1806 = vadd.f32 0.0, %v1805
        %v1807 = vpop.f32.mrb[0].mxu0
        %v1808 = vadd.f32 0.0, %v1807
        %1809 = vmatprep.mubr.bf16.mxu0 0
        %1810 = vmatmul.mubr.bf16.gmra.mrb[0].mxu0 %v1056
        %v1811 = vpop.f32.mrb[0].mxu0
        %v1812 = vadd.f32 0.0, %v1811
        %v1813 = vpop.f32.mrb[0].mxu0
        %v1814 = vadd.f32 0.0, %v1813
        %v1815 = vpop.f32.mrb[0].mxu0
        %v1816 = vadd.f32 0.0, %v1815
        %v1817 = vpop.f32.mrb[0].mxu0
        %v1818 = vadd.f32 0.0, %v1817
        %1819 = vmatprep.mubr.bf16.mxu0 0
        %1820 = vmatmul.mubr.bf16.gmra.mrb[0].mxu0 %v1057
        %v1821 = vpop.f32.mrb[0].mxu0
        %v1822 = vadd.f32 0.0, %v1821
        %v1823 = vpop.f32.mrb[0].mxu0
        %v1824 = vadd.f32 0.0, %v1823
        %v1825 = vpop.f32.mrb[0].mxu0
        %v1826 = vadd.f32 0.0, %v1825
        %v1827 = vpop.f32.mrb[0].mxu0
        %v1828 = vadd.f32 0.0, %v1827
        %1829 = vmatprep.mubr.bf16.mxu0 0
        %1830 = vmatmul.mubr.bf16.gmra.mrb[0].mxu0 %v1058
        %v1831 = vpop.f32.mrb[0].mxu0
        %v1832 = vadd.f32 0.0, %v1831
        %v1833 = vpop.f32.mrb[0].mxu0
        %v1834 = vadd.f32 0.0, %v1833
        %v1835 = vpop.f32.mrb[0].mxu0
        %v1836 = vadd.f32 0.0, %v1835
        %v1837 = vpop.f32.mrb[0].mxu0
        %v1838 = vadd.f32 0.0, %v1837
        %1839 = vmatprep.mubr.bf16.mxu0 0
        %1840 = vmatmul.mubr.bf16.gmra.mrb[0].mxu0 %v1059
        %v1841 = vpop.f32.mrb[0].mxu0
        %v1842 = vadd.f32 0.0, %v1841
        %v1843 = vpop.f32.mrb[0].mxu0
        %v1844 = vadd.f32 0.0, %v1843
        %v1845 = vpop.f32.mrb[0].mxu0
        %v1846 = vadd.f32 0.0, %v1845
        %v1847 = vpop.f32.mrb[0].mxu0
        %v1848 = vadd.f32 0.0, %v1847
        %1849 = vmatprep.mubr.bf16.mxu0 0
        %1850 = vmatmul.mubr.bf16.gmra.mrb[0].mxu0 %v1060
        %v1851 = vpop.f32.mrb[0].mxu0
        %v1852 = vadd.f32 0.0, %v1851
        %v1853 = vpop.f32.mrb[0].mxu0
        %v1854 = vadd.f32 0.0, %v1853
        %v1855 = vpop.f32.mrb[0].mxu0
        %v1856 = vadd.f32 0.0, %v1855
        %v1857 = vpop.f32.mrb[0].mxu0
        %v1858 = vadd.f32 0.0, %v1857
        %1859 = vmatprep.mubr.bf16.mxu0 0
        %1860 = vmatmul.mubr.bf16.gmra.mrb[0].mxu0 %v1061
        %v1861 = vpop.f32.mrb[0].mxu0
        %v1862 = vadd.f32 0.0, %v1861
        %v1863 = vpop.f32.mrb[0].mxu0
        %v1864 = vadd.f32 0.0, %v1863
        %v1865 = vpop.f32.mrb[0].mxu0
        %v1866 = vadd.f32 0.0, %v1865
        %v1867 = vpop.f32.mrb[0].mxu0
        %v1868 = vadd.f32 0.0, %v1867
        %1869 = vmatprep.mubr.bf16.mxu0 0
        %1870 = vmatmul.mubr.bf16.gmra.mrb[0].mxu0 %v1062
        %v1871 = vpop.f32.mrb[0].mxu0
        %v1872 = vadd.f32 0.0, %v1871
        %v1873 = vpop.f32.mrb[0].mxu0
        %v1874 = vadd.f32 0.0, %v1873
        %v1875 = vpop.f32.mrb[0].mxu0
        %v1876 = vadd.f32 0.0, %v1875
        %v1877 = vpop.f32.mrb[0].mxu0
        %v1878 = vadd.f32 0.0, %v1877
        %1879 = vmatprep.mubr.bf16.mxu0 0
        %1880 = vmatmul.mubr.bf16.gmra.mrb[0].mxu0 %v1063
        %v1881 = vpop.f32.mrb[0].mxu0
        %v1882 = vadd.f32 0.0, %v1881
        %v1883 = vpop.f32.mrb[0].mxu0
        %v1884 = vadd.f32 0.0, %v1883
        %v1885 = vpop.f32.mrb[0].mxu0
        %v1886 = vadd.f32 0.0, %v1885
        %v1887 = vpop.f32.mrb[0].mxu0
        %v1888 = vadd.f32 0.0, %v1887
        %1889 = vmatprep.mubr.bf16.mxu0 0
        %1890 = vmatmul.mubr.bf16.gmra.mrb[0].mxu0 %v1064
        %v1891 = vpop.f32.mrb[0].mxu0
        %v1892 = vadd.f32 0.0, %v1891
        %v1893 = vpop.f32.mrb[0].mxu0
        %v1894 = vadd.f32 0.0, %v1893
        %v1895 = vpop.f32.mrb[0].mxu0
        %v1896 = vadd.f32 0.0, %v1895
        %v1897 = vpop.f32.mrb[0].mxu0
        %v1898 = vadd.f32 0.0, %v1897
        %1899 = vmatprep.mubr.bf16.mxu0 0
        %1900 = vmatmul.mubr.bf16.gmra.mrb[0].mxu0 %v1065
        %v1901 = vpop.f32.mrb[0].mxu0
        %v1902 = vadd.f32 0.0, %v1901
        %v1903 = vpop.f32.mrb[0].mxu0
        %v1904 = vadd.f32 0.0, %v1903
        %v1905 = vpop.f32.mrb[0].mxu0
        %v1906 = vadd.f32 0.0, %v1905
        %v1907 = vpop.f32.mrb[0].mxu0
        %v1908 = vadd.f32 0.0, %v1907
        %1909 = vmatprep.mubr.bf16.mxu0 0
        %1910 = vmatmul.mubr.bf16.gmra.mrb[0].mxu0 %v1066
        %v1911 = vpop.f32.mrb[0].mxu0
        %v1912 = vadd.f32 0.0, %v1911
        %v1913 = vpop.f32.mrb[0].mxu0
        %v1914 = vadd.f32 0.0, %v1913
        %v1915 = vpop.f32.mrb[0].mxu0
        %v1916 = vadd.f32 0.0, %v1915
        %v1917 = vpop.f32.mrb[0].mxu0
        %v1918 = vadd.f32 0.0, %v1917
        %1919 = vmatprep.mubr.bf16.mxu0 0
        %1920 = vmatmul.mubr.bf16.gmra.mrb[0].mxu0 %v1067
        %v1921 = vpop.f32.mrb[0].mxu0
        %v1922 = vadd.f32 0.0, %v1921
        %v1923 = vpop.f32.mrb[0].mxu0
        %v1924 = vadd.f32 0.0, %v1923
        %v1925 = vpop.f32.mrb[0].mxu0
        %v1926 = vadd.f32 0.0, %v1925
        %v1927 = vpop.f32.mrb[0].mxu0
        %v1928 = vadd.f32 0.0, %v1927
        %1929 = vmatprep.mubr.bf16.mxu0 0
        %1930 = vmatmul.mubr.bf16.gmra.mrb[0].mxu0 %v1068
        %v1931 = vpop.f32.mrb[0].mxu0
        %v1932 = vadd.f32 0.0, %v1931
        %v1933 = vpop.f32.mrb[0].mxu0
        %v1934 = vadd.f32 0.0, %v1933
        %v1935 = vpop.f32.mrb[0].mxu0
        %v1936 = vadd.f32 0.0, %v1935
        %v1937 = vpop.f32.mrb[0].mxu0
        %v1938 = vadd.f32 0.0, %v1937
        %1939 = vmatprep.mubr.bf16.mxu0 0
        %1940 = vmatmul.mubr.bf16.gmra.mrb[0].mxu0 %v1069
        %v1941 = vpop.f32.mrb[0].mxu0
        %v1942 = vadd.f32 0.0, %v1941
        %v1943 = vpop.f32.mrb[0].mxu0
        %v1944 = vadd.f32 0.0, %v1943
        %v1945 = vpop.f32.mrb[0].mxu0
        %v1946 = vadd.f32 0.0, %v1945
        %v1947 = vpop.f32.mrb[0].mxu0
        %v1948 = vadd.f32 0.0, %v1947
        %1949 = vmatprep.mubr.bf16.mxu0 0
        %1950 = vmatmul.mubr.bf16.gmra.mrb[0].mxu0 %v1070
        %v1951 = vpop.f32.mrb[0].mxu0
        %v1952 = vadd.f32 0.0, %v1951
        %v1953 = vpop.f32.mrb[0].mxu0
        %v1954 = vadd.f32 0.0, %v1953
        %v1955 = vpop.f32.mrb[0].mxu0
        %v1956 = vadd.f32 0.0, %v1955
        %v1957 = vpop.f32.mrb[0].mxu0
        %v1958 = vadd.f32 0.0, %v1957
        %1959 = vmatprep.mubr.bf16.mxu0 0
        %1960 = vmatmul.mubr.bf16.gmra.mrb[0].mxu0 %v1071
        %v1961 = vpop.f32.mrb[0].mxu0
        %v1962 = vadd.f32 0.0, %v1961
        %v1963 = vpop.f32.mrb[0].mxu0
        %v1964 = vadd.f32 0.0, %v1963
        %v1965 = vpop.f32.mrb[0].mxu0
        %v1966 = vadd.f32 0.0, %v1965
        %v1967 = vpop.f32.mrb[0].mxu0
        %v1968 = vadd.f32 0.0, %v1967
        %1969 = vdwg.mxu0
        %v1970 = vadd.f32 %v560, %v1299
        %v1971 = vadd.f32 %v561, %v1301
        %v1972 = vadd.f32 %v562, %v1652
        %v1973 = vadd.f32 %v563, %v1654
        %v1974 = vadd.f32 %v564, %v1303
        %v1975 = vadd.f32 %v565, %v1305
        %v1976 = vadd.f32 %v566, %v1656
        %v1977 = vadd.f32 %v567, %v1658
        %v1978 = vadd.f32 %v568, %v1309
        %v1979 = vadd.f32 %v569, %v1311
        %v1980 = vadd.f32 %v570, %v1662
        %v1981 = vadd.f32 %v571, %v1664
        %v1982 = vadd.f32 %v572, %v1313
        %v1983 = vadd.f32 %v573, %v1315
        %v1984 = vadd.f32 %v574, %v1666
        %v1985 = vadd.f32 %v575, %v1668
        %v1986 = vadd.f32 %v576, %v1319
        %v1987 = vadd.f32 %v577, %v1321
        %v1988 = vadd.f32 %v578, %v1672
        %v1989 = vadd.f32 %v579, %v1674
        %v1990 = vadd.f32 %v580, %v1323
        %v1991 = vadd.f32 %v581, %v1325
        %v1992 = vadd.f32 %v582, %v1676
        %v1993 = vadd.f32 %v583, %v1678
        %v1994 = vadd.f32 %v584, %v1329
        %v1995 = vadd.f32 %v585, %v1331
        %v1996 = vadd.f32 %v586, %v1682
        %v1997 = vadd.f32 %v587, %v1684
        %v1998 = vadd.f32 %v588, %v1333
        %v1999 = vadd.f32 %v589, %v1335
        %v2000 = vadd.f32 %v590, %v1686
        %v2001 = vadd.f32 %v591, %v1688
        %v2002 = vadd.f32 %v592, %v1339
        %v2003 = vadd.f32 %v593, %v1341
        %v2004 = vadd.f32 %v594, %v1692
        %v2005 = vadd.f32 %v595, %v1694
        %v2006 = vadd.f32 %v596, %v1343
        %v2007 = vadd.f32 %v597, %v1345
        %v2008 = vadd.f32 %v598, %v1696
        %v2009 = vadd.f32 %v599, %v1698
        %v2010 = vadd.f32 %v600, %v1349
        %v2011 = vadd.f32 %v601, %v1351
        %v2012 = vadd.f32 %v602, %v1702
        %v2013 = vadd.f32 %v603, %v1704
        %v2014 = vadd.f32 %v604, %v1353
        %v2015 = vadd.f32 %v605, %v1355
        %v2016 = vadd.f32 %v606, %v1706
        %v2017 = vadd.f32 %v607, %v1708
        %v2018 = vadd.f32 %v608, %v1359
        %v2019 = vadd.f32 %v609, %v1361
        %v2020 = vadd.f32 %v610, %v1712
        %v2021 = vadd.f32 %v611, %v1714
        %v2022 = vadd.f32 %v612, %v1363
        %v2023 = vadd.f32 %v613, %v1365
        %v2024 = vadd.f32 %v614, %v1716
        %v2025 = vadd.f32 %v615, %v1718
        %v2026 = vadd.f32 %v616, %v1369
        %v2027 = vadd.f32 %v617, %v1371
        %v2028 = vadd.f32 %v618, %v1722
        %v2029 = vadd.f32 %v619, %v1724
        %v2030 = vadd.f32 %v620, %v1373
        %v2031 = vadd.f32 %v621, %v1375
        %v2032 = vadd.f32 %v622, %v1726
        %v2033 = vadd.f32 %v623, %v1728
        %v2034 = vadd.f32 %v624, %v1379
        %v2035 = vadd.f32 %v625, %v1381
        %v2036 = vadd.f32 %v626, %v1732
        %v2037 = vadd.f32 %v627, %v1734
        %v2038 = vadd.f32 %v628, %v1383
        %v2039 = vadd.f32 %v629, %v1385
        %v2040 = vadd.f32 %v630, %v1736
        %v2041 = vadd.f32 %v631, %v1738
        %v2042 = vadd.f32 %v632, %v1389
        %v2043 = vadd.f32 %v633, %v1391
        %v2044 = vadd.f32 %v634, %v1742
        %v2045 = vadd.f32 %v635, %v1744
        %v2046 = vadd.f32 %v636, %v1393
        %v2047 = vadd.f32 %v637, %v1395
        %v2048 = vadd.f32 %v638, %v1746
        %v2049 = vadd.f32 %v639, %v1748
        %v2050 = vadd.f32 %v640, %v1399
        %v2051 = vadd.f32 %v641, %v1401
        %v2052 = vadd.f32 %v642, %v1752
        %v2053 = vadd.f32 %v643, %v1754
        %v2054 = vadd.f32 %v644, %v1403
        %v2055 = vadd.f32 %v645, %v1405
        %v2056 = vadd.f32 %v646, %v1756
        %v2057 = vadd.f32 %v647, %v1758
        %v2058 = vadd.f32 %v648, %v1409
        %v2059 = vadd.f32 %v649, %v1411
        %v2060 = vadd.f32 %v650, %v1762
        %v2061 = vadd.f32 %v651, %v1764
        %v2062 = vadd.f32 %v652, %v1413
        %v2063 = vadd.f32 %v653, %v1415
        %v2064 = vadd.f32 %v654, %v1766
        %v2065 = vadd.f32 %v655, %v1768
        %v2066 = vadd.f32 %v656, %v1419
        %v2067 = vadd.f32 %v657, %v1421
        %v2068 = vadd.f32 %v658, %v1772
        %v2069 = vadd.f32 %v659, %v1774
        %v2070 = vadd.f32 %v660, %v1423
        %v2071 = vadd.f32 %v661, %v1425
        %v2072 = vadd.f32 %v662, %v1776
        %v2073 = vadd.f32 %v663, %v1778
        %v2074 = vadd.f32 %v664, %v1429
        %v2075 = vadd.f32 %v665, %v1431
        %v2076 = vadd.f32 %v666, %v1782
        %v2077 = vadd.f32 %v667, %v1784
        %v2078 = vadd.f32 %v668, %v1433
        %v2079 = vadd.f32 %v669, %v1435
        %v2080 = vadd.f32 %v670, %v1786
        %v2081 = vadd.f32 %v671, %v1788
        %v2082 = vadd.f32 %v672, %v1439
        %v2083 = vadd.f32 %v673, %v1441
        %v2084 = vadd.f32 %v674, %v1792
        %v2085 = vadd.f32 %v675, %v1794
        %v2086 = vadd.f32 %v676, %v1443
        %v2087 = vadd.f32 %v677, %v1445
        %v2088 = vadd.f32 %v678, %v1796
        %v2089 = vadd.f32 %v679, %v1798
        %v2090 = vadd.f32 %v680, %v1449
        %v2091 = vadd.f32 %v681, %v1451
        %v2092 = vadd.f32 %v682, %v1802
        %v2093 = vadd.f32 %v683, %v1804
        %v2094 = vadd.f32 %v684, %v1453
        %v2095 = vadd.f32 %v685, %v1455
        %v2096 = vadd.f32 %v686, %v1806
        %v2097 = vadd.f32 %v687, %v1808
        %v2098 = vadd.f32 %v688, %v1459
        %v2099 = vadd.f32 %v689, %v1461
        %v2100 = vadd.f32 %v690, %v1812
        %v2101 = vadd.f32 %v691, %v1814
        %v2102 = vadd.f32 %v692, %v1463
        %v2103 = vadd.f32 %v693, %v1465
        %v2104 = vadd.f32 %v694, %v1816
        %v2105 = vadd.f32 %v695, %v1818
        %v2106 = vadd.f32 %v696, %v1469
        %v2107 = vadd.f32 %v697, %v1471
        %v2108 = vadd.f32 %v698, %v1822
        %v2109 = vadd.f32 %v699, %v1824
        %v2110 = vadd.f32 %v700, %v1473
        %v2111 = vadd.f32 %v701, %v1475
        %v2112 = vadd.f32 %v702, %v1826
        %v2113 = vadd.f32 %v703, %v1828
        %v2114 = vadd.f32 %v704, %v1479
        %v2115 = vadd.f32 %v705, %v1481
        %v2116 = vadd.f32 %v706, %v1832
        %v2117 = vadd.f32 %v707, %v1834
        %v2118 = vadd.f32 %v708, %v1483
        %v2119 = vadd.f32 %v709, %v1485
        %v2120 = vadd.f32 %v710, %v1836
        %v2121 = vadd.f32 %v711, %v1838
        %v2122 = vadd.f32 %v712, %v1489
        %v2123 = vadd.f32 %v713, %v1491
        %v2124 = vadd.f32 %v714, %v1842
        %v2125 = vadd.f32 %v715, %v1844
        %v2126 = vadd.f32 %v716, %v1493
        %v2127 = vadd.f32 %v717, %v1495
        %v2128 = vadd.f32 %v718, %v1846
        %v2129 = vadd.f32 %v719, %v1848
        %v2130 = vadd.f32 %v720, %v1499
        %v2131 = vadd.f32 %v721, %v1501
        %v2132 = vadd.f32 %v722, %v1852
        %v2133 = vadd.f32 %v723, %v1854
        %v2134 = vadd.f32 %v724, %v1503
        %v2135 = vadd.f32 %v725, %v1505
        %v2136 = vadd.f32 %v726, %v1856
        %v2137 = vadd.f32 %v727, %v1858
        %v2138 = vadd.f32 %v728, %v1509
        %v2139 = vadd.f32 %v729, %v1511
        %v2140 = vadd.f32 %v730, %v1862
        %v2141 = vadd.f32 %v731, %v1864
        %v2142 = vadd.f32 %v732, %v1513
        %v2143 = vadd.f32 %v733, %v1515
        %v2144 = vadd.f32 %v734, %v1866
        %v2145 = vadd.f32 %v735, %v1868
        %v2146 = vadd.f32 %v736, %v1519
        %v2147 = vadd.f32 %v737, %v1521
        %v2148 = vadd.f32 %v738, %v1872
        %v2149 = vadd.f32 %v739, %v1874
        %v2150 = vadd.f32 %v740, %v1523
        %v2151 = vadd.f32 %v741, %v1525
        %v2152 = vadd.f32 %v742, %v1876
        %v2153 = vadd.f32 %v743, %v1878
        %v2154 = vadd.f32 %v744, %v1529
        %v2155 = vadd.f32 %v745, %v1531
        %v2156 = vadd.f32 %v746, %v1882
        %v2157 = vadd.f32 %v747, %v1884
        %v2158 = vadd.f32 %v748, %v1533
        %v2159 = vadd.f32 %v749, %v1535
        %v2160 = vadd.f32 %v750, %v1886
        %v2161 = vadd.f32 %v751, %v1888
        %v2162 = vadd.f32 %v752, %v1539
        %v2163 = vadd.f32 %v753, %v1541
        %v2164 = vadd.f32 %v754, %v1892
        %v2165 = vadd.f32 %v755, %v1894
        %v2166 = vadd.f32 %v756, %v1543
        %v2167 = vadd.f32 %v757, %v1545
        %v2168 = vadd.f32 %v758, %v1896
        %v2169 = vadd.f32 %v759, %v1898
        %v2170 = vadd.f32 %v760, %v1549
        %v2171 = vadd.f32 %v761, %v1551
        %v2172 = vadd.f32 %v762, %v1902
        %v2173 = vadd.f32 %v763, %v1904
        %v2174 = vadd.f32 %v764, %v1553
        %v2175 = vadd.f32 %v765, %v1555
        %v2176 = vadd.f32 %v766, %v1906
        %v2177 = vadd.f32 %v767, %v1908
        %v2178 = vadd.f32 %v768, %v1559
        %v2179 = vadd.f32 %v769, %v1561
        %v2180 = vadd.f32 %v770, %v1912
        %v2181 = vadd.f32 %v771, %v1914
        %v2182 = vadd.f32 %v772, %v1563
        %v2183 = vadd.f32 %v773, %v1565
        %v2184 = vadd.f32 %v774, %v1916
        %v2185 = vadd.f32 %v775, %v1918
        %v2186 = vadd.f32 %v776, %v1569
        %v2187 = vadd.f32 %v777, %v1571
        %v2188 = vadd.f32 %v778, %v1922
        %v2189 = vadd.f32 %v779, %v1924
        %v2190 = vadd.f32 %v780, %v1573
        %v2191 = vadd.f32 %v781, %v1575
        %v2192 = vadd.f32 %v782, %v1926
        %v2193 = vadd.f32 %v783, %v1928
        %v2194 = vadd.f32 %v784, %v1579
        %v2195 = vadd.f32 %v785, %v1581
        %v2196 = vadd.f32 %v786, %v1932
        %v2197 = vadd.f32 %v787, %v1934
        %v2198 = vadd.f32 %v788, %v1583
        %v2199 = vadd.f32 %v789, %v1585
        %v2200 = vadd.f32 %v790, %v1936
        %v2201 = vadd.f32 %v791, %v1938
        %v2202 = vadd.f32 %v792, %v1589
        %v2203 = vadd.f32 %v793, %v1591
        %v2204 = vadd.f32 %v794, %v1942
        %v2205 = vadd.f32 %v795, %v1944
        %v2206 = vadd.f32 %v796, %v1593
        %v2207 = vadd.f32 %v797, %v1595
        %v2208 = vadd.f32 %v798, %v1946
        %v2209 = vadd.f32 %v799, %v1948
        %v2210 = vadd.f32 %v800, %v1599
        %v2211 = vadd.f32 %v801, %v1601
        %v2212 = vadd.f32 %v802, %v1952
        %v2213 = vadd.f32 %v803, %v1954
        %v2214 = vadd.f32 %v804, %v1603
        %v2215 = vadd.f32 %v805, %v1605
        %v2216 = vadd.f32 %v806, %v1956
        %v2217 = vadd.f32 %v807, %v1958
        %v2218 = vadd.f32 %v808, %v1609
        %v2219 = vadd.f32 %v809, %v1611
        %v2220 = vadd.f32 %v810, %v1962
        %v2221 = vadd.f32 %v811, %v1964
        %v2222 = vadd.f32 %v812, %v1613
        %v2223 = vadd.f32 %v813, %v1615
        %v2224 = vadd.f32 %v814, %v1966
        %v2225 = vadd.f32 %v815, %v1968
        %2226 = vst [vmem:[#allocation2] sm:$0xff] %v1970
        %2227 = vst [vmem:[#allocation2 + $0x8] sm:$0xff] %v1971
        %2228 = vst [vmem:[#allocation2 + $0x10] sm:$0xff] %v1972
        %2229 = vst [vmem:[#allocation2 + $0x18] sm:$0xff] %v1973
        %2230 = vst [vmem:[#allocation2 + $0x20] sm:$0xff] %v1974
        %2231 = vst [vmem:[#allocation2 + $0x28] sm:$0xff] %v1975
        %2232 = vst [vmem:[#allocation2 + $0x30] sm:$0xff] %v1976
        %2233 = vst [vmem:[#allocation2 + $0x38] sm:$0xff] %v1977
        %2234 = vst [vmem:[#allocation2 + $0x40] sm:$0xff] %v1978
        %2235 = vst [vmem:[#allocation2 + $0x48] sm:$0xff] %v1979
        %2236 = vst [vmem:[#allocation2 + $0x50] sm:$0xff] %v1980
        %2237 = vst [vmem:[#allocation2 + $0x58] sm:$0xff] %v1981
        %2238 = vst [vmem:[#allocation2 + $0x60] sm:$0xff] %v1982
        %2239 = vst [vmem:[#allocation2 + $0x68] sm:$0xff] %v1983
        %2240 = vst [vmem:[#allocation2 + $0x70] sm:$0xff] %v1984
        %2241 = vst [vmem:[#allocation2 + $0x78] sm:$0xff] %v1985
        %2242 = vst [vmem:[#allocation2 + $0x80] sm:$0xff] %v1986
        %2243 = vst [vmem:[#allocation2 + $0x88] sm:$0xff] %v1987
        %2244 = vst [vmem:[#allocation2 + $0x90] sm:$0xff] %v1988
        %2245 = vst [vmem:[#allocation2 + $0x98] sm:$0xff] %v1989
        %2246 = vst [vmem:[#allocation2 + $0xa0] sm:$0xff] %v1990
        %2247 = vst [vmem:[#allocation2 + $0xa8] sm:$0xff] %v1991
        %2248 = vst [vmem:[#allocation2 + $0xb0] sm:$0xff] %v1992
        %2249 = vst [vmem:[#allocation2 + $0xb8] sm:$0xff] %v1993
        %2250 = vst [vmem:[#allocation2 + $0xc0] sm:$0xff] %v1994
        %2251 = vst [vmem:[#allocation2 + $0xc8] sm:$0xff] %v1995
        %2252 = vst [vmem:[#allocation2 + $0xd0] sm:$0xff] %v1996
        %2253 = vst [vmem:[#allocation2 + $0xd8] sm:$0xff] %v1997
        %2254 = vst [vmem:[#allocation2 + $0xe0] sm:$0xff] %v1998
        %2255 = vst [vmem:[#allocation2 + $0xe8] sm:$0xff] %v1999
        %2256 = vst [vmem:[#allocation2 + $0xf0] sm:$0xff] %v2000
        %2257 = vst [vmem:[#allocation2 + $0xf8] sm:$0xff] %v2001
        %2258 = vst [vmem:[#allocation2 + $0x100] sm:$0xff] %v2002
        %2259 = vst [vmem:[#allocation2 + $0x108] sm:$0xff] %v2003
        %2260 = vst [vmem:[#allocation2 + $0x110] sm:$0xff] %v2004
        %2261 = vst [vmem:[#allocation2 + $0x118] sm:$0xff] %v2005
        %2262 = vst [vmem:[#allocation2 + $0x120] sm:$0xff] %v2006
        %2263 = vst [vmem:[#allocation2 + $0x128] sm:$0xff] %v2007
        %2264 = vst [vmem:[#allocation2 + $0x130] sm:$0xff] %v2008
        %2265 = vst [vmem:[#allocation2 + $0x138] sm:$0xff] %v2009
        %2266 = vst [vmem:[#allocation2 + $0x140] sm:$0xff] %v2010
        %2267 = vst [vmem:[#allocation2 + $0x148] sm:$0xff] %v2011
        %2268 = vst [vmem:[#allocation2 + $0x150] sm:$0xff] %v2012
        %2269 = vst [vmem:[#allocation2 + $0x158] sm:$0xff] %v2013
        %2270 = vst [vmem:[#allocation2 + $0x160] sm:$0xff] %v2014
        %2271 = vst [vmem:[#allocation2 + $0x168] sm:$0xff] %v2015
        %2272 = vst [vmem:[#allocation2 + $0x170] sm:$0xff] %v2016
        %2273 = vst [vmem:[#allocation2 + $0x178] sm:$0xff] %v2017
        %2274 = vst [vmem:[#allocation2 + $0x180] sm:$0xff] %v2018
        %2275 = vst [vmem:[#allocation2 + $0x188] sm:$0xff] %v2019
        %2276 = vst [vmem:[#allocation2 + $0x190] sm:$0xff] %v2020
        %2277 = vst [vmem:[#allocation2 + $0x198] sm:$0xff] %v2021
        %2278 = vst [vmem:[#allocation2 + $0x1a0] sm:$0xff] %v2022
        %2279 = vst [vmem:[#allocation2 + $0x1a8] sm:$0xff] %v2023
        %2280 = vst [vmem:[#allocation2 + $0x1b0] sm:$0xff] %v2024
        %2281 = vst [vmem:[#allocation2 + $0x1b8] sm:$0xff] %v2025
        %2282 = vst [vmem:[#allocation2 + $0x1c0] sm:$0xff] %v2026
        %2283 = vst [vmem:[#allocation2 + $0x1c8] sm:$0xff] %v2027
        %2284 = vst [vmem:[#allocation2 + $0x1d0] sm:$0xff] %v2028
        %2285 = vst [vmem:[#allocation2 + $0x1d8] sm:$0xff] %v2029
        %2286 = vst [vmem:[#allocation2 + $0x1e0] sm:$0xff] %v2030
        %2287 = vst [vmem:[#allocation2 + $0x1e8] sm:$0xff] %v2031
        %2288 = vst [vmem:[#allocation2 + $0x1f0] sm:$0xff] %v2032
        %2289 = vst [vmem:[#allocation2 + $0x1f8] sm:$0xff] %v2033
        %2290 = vst [vmem:[#allocation2 + $0x200] sm:$0xff] %v2034
        %2291 = vst [vmem:[#allocation2 + $0x208] sm:$0xff] %v2035
        %2292 = vst [vmem:[#allocation2 + $0x210] sm:$0xff] %v2036
        %2293 = vst [vmem:[#allocation2 + $0x218] sm:$0xff] %v2037
        %2294 = vst [vmem:[#allocation2 + $0x220] sm:$0xff] %v2038
        %2295 = vst [vmem:[#allocation2 + $0x228] sm:$0xff] %v2039
        %2296 = vst [vmem:[#allocation2 + $0x230] sm:$0xff] %v2040
        %2297 = vst [vmem:[#allocation2 + $0x238] sm:$0xff] %v2041
        %2298 = vst [vmem:[#allocation2 + $0x240] sm:$0xff] %v2042
        %2299 = vst [vmem:[#allocation2 + $0x248] sm:$0xff] %v2043
        %2300 = vst [vmem:[#allocation2 + $0x250] sm:$0xff] %v2044
        %2301 = vst [vmem:[#allocation2 + $0x258] sm:$0xff] %v2045
        %2302 = vst [vmem:[#allocation2 + $0x260] sm:$0xff] %v2046
        %2303 = vst [vmem:[#allocation2 + $0x268] sm:$0xff] %v2047
        %2304 = vst [vmem:[#allocation2 + $0x270] sm:$0xff] %v2048
        %2305 = vst [vmem:[#allocation2 + $0x278] sm:$0xff] %v2049
        %2306 = vst [vmem:[#allocation2 + $0x280] sm:$0xff] %v2050
        %2307 = vst [vmem:[#allocation2 + $0x288] sm:$0xff] %v2051
        %2308 = vst [vmem:[#allocation2 + $0x290] sm:$0xff] %v2052
        %2309 = vst [vmem:[#allocation2 + $0x298] sm:$0xff] %v2053
        %2310 = vst [vmem:[#allocation2 + $0x2a0] sm:$0xff] %v2054
        %2311 = vst [vmem:[#allocation2 + $0x2a8] sm:$0xff] %v2055
        %2312 = vst [vmem:[#allocation2 + $0x2b0] sm:$0xff] %v2056
        %2313 = vst [vmem:[#allocation2 + $0x2b8] sm:$0xff] %v2057
        %2314 = vst [vmem:[#allocation2 + $0x2c0] sm:$0xff] %v2058
        %2315 = vst [vmem:[#allocation2 + $0x2c8] sm:$0xff] %v2059
        %2316 = vst [vmem:[#allocation2 + $0x2d0] sm:$0xff] %v2060
        %2317 = vst [vmem:[#allocation2 + $0x2d8] sm:$0xff] %v2061
        %2318 = vst [vmem:[#allocation2 + $0x2e0] sm:$0xff] %v2062
        %2319 = vst [vmem:[#allocation2 + $0x2e8] sm:$0xff] %v2063
        %2320 = vst [vmem:[#allocation2 + $0x2f0] sm:$0xff] %v2064
        %2321 = vst [vmem:[#allocation2 + $0x2f8] sm:$0xff] %v2065
        %2322 = vst [vmem:[#allocation2 + $0x300] sm:$0xff] %v2066
        %2323 = vst [vmem:[#allocation2 + $0x308] sm:$0xff] %v2067
        %2324 = vst [vmem:[#allocation2 + $0x310] sm:$0xff] %v2068
        %2325 = vst [vmem:[#allocation2 + $0x318] sm:$0xff] %v2069
        %2326 = vst [vmem:[#allocation2 + $0x320] sm:$0xff] %v2070
        %2327 = vst [vmem:[#allocation2 + $0x328] sm:$0xff] %v2071
        %2328 = vst [vmem:[#allocation2 + $0x330] sm:$0xff] %v2072
        %2329 = vst [vmem:[#allocation2 + $0x338] sm:$0xff] %v2073
        %2330 = vst [vmem:[#allocation2 + $0x340] sm:$0xff] %v2074
        %2331 = vst [vmem:[#allocation2 + $0x348] sm:$0xff] %v2075
        %2332 = vst [vmem:[#allocation2 + $0x350] sm:$0xff] %v2076
        %2333 = vst [vmem:[#allocation2 + $0x358] sm:$0xff] %v2077
        %2334 = vst [vmem:[#allocation2 + $0x360] sm:$0xff] %v2078
        %2335 = vst [vmem:[#allocation2 + $0x368] sm:$0xff] %v2079
        %2336 = vst [vmem:[#allocation2 + $0x370] sm:$0xff] %v2080
        %2337 = vst [vmem:[#allocation2 + $0x378] sm:$0xff] %v2081
        %2338 = vst [vmem:[#allocation2 + $0x380] sm:$0xff] %v2082
        %2339 = vst [vmem:[#allocation2 + $0x388] sm:$0xff] %v2083
        %2340 = vst [vmem:[#allocation2 + $0x390] sm:$0xff] %v2084
        %2341 = vst [vmem:[#allocation2 + $0x398] sm:$0xff] %v2085
        %2342 = vst [vmem:[#allocation2 + $0x3a0] sm:$0xff] %v2086
        %2343 = vst [vmem:[#allocation2 + $0x3a8] sm:$0xff] %v2087
        %2344 = vst [vmem:[#allocation2 + $0x3b0] sm:$0xff] %v2088
        %2345 = vst [vmem:[#allocation2 + $0x3b8] sm:$0xff] %v2089
        %2346 = vst [vmem:[#allocation2 + $0x3c0] sm:$0xff] %v2090
        %2347 = vst [vmem:[#allocation2 + $0x3c8] sm:$0xff] %v2091
        %2348 = vst [vmem:[#allocation2 + $0x3d0] sm:$0xff] %v2092
        %2349 = vst [vmem:[#allocation2 + $0x3d8] sm:$0xff] %v2093
        %2350 = vst [vmem:[#allocation2 + $0x3e0] sm:$0xff] %v2094
        %2351 = vst [vmem:[#allocation2 + $0x3e8] sm:$0xff] %v2095
        %2352 = vst [vmem:[#allocation2 + $0x3f0] sm:$0xff] %v2096
        %2353 = vst [vmem:[#allocation2 + $0x3f8] sm:$0xff] %v2097
        %2354 = vst [vmem:[#allocation2 + $0x400] sm:$0xff] %v2098
        %2355 = vst [vmem:[#allocation2 + $0x408] sm:$0xff] %v2099
        %2356 = vst [vmem:[#allocation2 + $0x410] sm:$0xff] %v2100
        %2357 = vst [vmem:[#allocation2 + $0x418] sm:$0xff] %v2101
        %2358 = vst [vmem:[#allocation2 + $0x420] sm:$0xff] %v2102
        %2359 = vst [vmem:[#allocation2 + $0x428] sm:$0xff] %v2103
        %2360 = vst [vmem:[#allocation2 + $0x430] sm:$0xff] %v2104
        %2361 = vst [vmem:[#allocation2 + $0x438] sm:$0xff] %v2105
        %2362 = vst [vmem:[#allocation2 + $0x440] sm:$0xff] %v2106
        %2363 = vst [vmem:[#allocation2 + $0x448] sm:$0xff] %v2107
        %2364 = vst [vmem:[#allocation2 + $0x450] sm:$0xff] %v2108
        %2365 = vst [vmem:[#allocation2 + $0x458] sm:$0xff] %v2109
        %2366 = vst [vmem:[#allocation2 + $0x460] sm:$0xff] %v2110
        %2367 = vst [vmem:[#allocation2 + $0x468] sm:$0xff] %v2111
        %2368 = vst [vmem:[#allocation2 + $0x470] sm:$0xff] %v2112
        %2369 = vst [vmem:[#allocation2 + $0x478] sm:$0xff] %v2113
        %2370 = vst [vmem:[#allocation2 + $0x480] sm:$0xff] %v2114
        %2371 = vst [vmem:[#allocation2 + $0x488] sm:$0xff] %v2115
        %2372 = vst [vmem:[#allocation2 + $0x490] sm:$0xff] %v2116
        %2373 = vst [vmem:[#allocation2 + $0x498] sm:$0xff] %v2117
        %2374 = vst [vmem:[#allocation2 + $0x4a0] sm:$0xff] %v2118
        %2375 = vst [vmem:[#allocation2 + $0x4a8] sm:$0xff] %v2119
        %2376 = vst [vmem:[#allocation2 + $0x4b0] sm:$0xff] %v2120
        %2377 = vst [vmem:[#allocation2 + $0x4b8] sm:$0xff] %v2121
        %2378 = vst [vmem:[#allocation2 + $0x4c0] sm:$0xff] %v2122
        %2379 = vst [vmem:[#allocation2 + $0x4c8] sm:$0xff] %v2123
        %2380 = vst [vmem:[#allocation2 + $0x4d0] sm:$0xff] %v2124
        %2381 = vst [vmem:[#allocation2 + $0x4d8] sm:$0xff] %v2125
        %2382 = vst [vmem:[#allocation2 + $0x4e0] sm:$0xff] %v2126
        %2383 = vst [vmem:[#allocation2 + $0x4e8] sm:$0xff] %v2127
        %2384 = vst [vmem:[#allocation2 + $0x4f0] sm:$0xff] %v2128
        %2385 = vst [vmem:[#allocation2 + $0x4f8] sm:$0xff] %v2129
        %2386 = vst [vmem:[#allocation2 + $0x500] sm:$0xff] %v2130
        %2387 = vst [vmem:[#allocation2 + $0x508] sm:$0xff] %v2131
        %2388 = vst [vmem:[#allocation2 + $0x510] sm:$0xff] %v2132
        %2389 = vst [vmem:[#allocation2 + $0x518] sm:$0xff] %v2133
        %2390 = vst [vmem:[#allocation2 + $0x520] sm:$0xff] %v2134
        %2391 = vst [vmem:[#allocation2 + $0x528] sm:$0xff] %v2135
        %2392 = vst [vmem:[#allocation2 + $0x530] sm:$0xff] %v2136
        %2393 = vst [vmem:[#allocation2 + $0x538] sm:$0xff] %v2137
        %2394 = vst [vmem:[#allocation2 + $0x540] sm:$0xff] %v2138
        %2395 = vst [vmem:[#allocation2 + $0x548] sm:$0xff] %v2139
        %2396 = vst [vmem:[#allocation2 + $0x550] sm:$0xff] %v2140
        %2397 = vst [vmem:[#allocation2 + $0x558] sm:$0xff] %v2141
        %2398 = vst [vmem:[#allocation2 + $0x560] sm:$0xff] %v2142
        %2399 = vst [vmem:[#allocation2 + $0x568] sm:$0xff] %v2143
        %2400 = vst [vmem:[#allocation2 + $0x570] sm:$0xff] %v2144
        %2401 = vst [vmem:[#allocation2 + $0x578] sm:$0xff] %v2145
        %2402 = vst [vmem:[#allocation2 + $0x580] sm:$0xff] %v2146
        %2403 = vst [vmem:[#allocation2 + $0x588] sm:$0xff] %v2147
        %2404 = vst [vmem:[#allocation2 + $0x590] sm:$0xff] %v2148
        %2405 = vst [vmem:[#allocation2 + $0x598] sm:$0xff] %v2149
        %2406 = vst [vmem:[#allocation2 + $0x5a0] sm:$0xff] %v2150
        %2407 = vst [vmem:[#allocation2 + $0x5a8] sm:$0xff] %v2151
        %2408 = vst [vmem:[#allocation2 + $0x5b0] sm:$0xff] %v2152
        %2409 = vst [vmem:[#allocation2 + $0x5b8] sm:$0xff] %v2153
        %2410 = vst [vmem:[#allocation2 + $0x5c0] sm:$0xff] %v2154
        %2411 = vst [vmem:[#allocation2 + $0x5c8] sm:$0xff] %v2155
        %2412 = vst [vmem:[#allocation2 + $0x5d0] sm:$0xff] %v2156
        %2413 = vst [vmem:[#allocation2 + $0x5d8] sm:$0xff] %v2157
        %2414 = vst [vmem:[#allocation2 + $0x5e0] sm:$0xff] %v2158
        %2415 = vst [vmem:[#allocation2 + $0x5e8] sm:$0xff] %v2159
        %2416 = vst [vmem:[#allocation2 + $0x5f0] sm:$0xff] %v2160
        %2417 = vst [vmem:[#allocation2 + $0x5f8] sm:$0xff] %v2161
        %2418 = vst [vmem:[#allocation2 + $0x600] sm:$0xff] %v2162
        %2419 = vst [vmem:[#allocation2 + $0x608] sm:$0xff] %v2163
        %2420 = vst [vmem:[#allocation2 + $0x610] sm:$0xff] %v2164
        %2421 = vst [vmem:[#allocation2 + $0x618] sm:$0xff] %v2165
        %2422 = vst [vmem:[#allocation2 + $0x620] sm:$0xff] %v2166
        %2423 = vst [vmem:[#allocation2 + $0x628] sm:$0xff] %v2167
        %2424 = vst [vmem:[#allocation2 + $0x630] sm:$0xff] %v2168
        %2425 = vst [vmem:[#allocation2 + $0x638] sm:$0xff] %v2169
        %2426 = vst [vmem:[#allocation2 + $0x640] sm:$0xff] %v2170
        %2427 = vst [vmem:[#allocation2 + $0x648] sm:$0xff] %v2171
        %2428 = vst [vmem:[#allocation2 + $0x650] sm:$0xff] %v2172
        %2429 = vst [vmem:[#allocation2 + $0x658] sm:$0xff] %v2173
        %2430 = vst [vmem:[#allocation2 + $0x660] sm:$0xff] %v2174
        %2431 = vst [vmem:[#allocation2 + $0x668] sm:$0xff] %v2175
        %2432 = vst [vmem:[#allocation2 + $0x670] sm:$0xff] %v2176
        %2433 = vst [vmem:[#allocation2 + $0x678] sm:$0xff] %v2177
        %2434 = vst [vmem:[#allocation2 + $0x680] sm:$0xff] %v2178
        %2435 = vst [vmem:[#allocation2 + $0x688] sm:$0xff] %v2179
        %2436 = vst [vmem:[#allocation2 + $0x690] sm:$0xff] %v2180
        %2437 = vst [vmem:[#allocation2 + $0x698] sm:$0xff] %v2181
        %2438 = vst [vmem:[#allocation2 + $0x6a0] sm:$0xff] %v2182
        %2439 = vst [vmem:[#allocation2 + $0x6a8] sm:$0xff] %v2183
        %2440 = vst [vmem:[#allocation2 + $0x6b0] sm:$0xff] %v2184
        %2441 = vst [vmem:[#allocation2 + $0x6b8] sm:$0xff] %v2185
        %2442 = vst [vmem:[#allocation2 + $0x6c0] sm:$0xff] %v2186
        %2443 = vst [vmem:[#allocation2 + $0x6c8] sm:$0xff] %v2187
        %2444 = vst [vmem:[#allocation2 + $0x6d0] sm:$0xff] %v2188
        %2445 = vst [vmem:[#allocation2 + $0x6d8] sm:$0xff] %v2189
        %2446 = vst [vmem:[#allocation2 + $0x6e0] sm:$0xff] %v2190
        %2447 = vst [vmem:[#allocation2 + $0x6e8] sm:$0xff] %v2191
        %2448 = vst [vmem:[#allocation2 + $0x6f0] sm:$0xff] %v2192
        %2449 = vst [vmem:[#allocation2 + $0x6f8] sm:$0xff] %v2193
        %2450 = vst [vmem:[#allocation2 + $0x700] sm:$0xff] %v2194
        %2451 = vst [vmem:[#allocation2 + $0x708] sm:$0xff] %v2195
        %2452 = vst [vmem:[#allocation2 + $0x710] sm:$0xff] %v2196
        %2453 = vst [vmem:[#allocation2 + $0x718] sm:$0xff] %v2197
        %2454 = vst [vmem:[#allocation2 + $0x720] sm:$0xff] %v2198
        %2455 = vst [vmem:[#allocation2 + $0x728] sm:$0xff] %v2199
        %2456 = vst [vmem:[#allocation2 + $0x730] sm:$0xff] %v2200
        %2457 = vst [vmem:[#allocation2 + $0x738] sm:$0xff] %v2201
        %2458 = vst [vmem:[#allocation2 + $0x740] sm:$0xff] %v2202
        %2459 = vst [vmem:[#allocation2 + $0x748] sm:$0xff] %v2203
        %2460 = vst [vmem:[#allocation2 + $0x750] sm:$0xff] %v2204
        %2461 = vst [vmem:[#allocation2 + $0x758] sm:$0xff] %v2205
        %2462 = vst [vmem:[#allocation2 + $0x760] sm:$0xff] %v2206
        %2463 = vst [vmem:[#allocation2 + $0x768] sm:$0xff] %v2207
        %2464 = vst [vmem:[#allocation2 + $0x770] sm:$0xff] %v2208
        %2465 = vst [vmem:[#allocation2 + $0x778] sm:$0xff] %v2209
        %2466 = vst [vmem:[#allocation2 + $0x780] sm:$0xff] %v2210
        %2467 = vst [vmem:[#allocation2 + $0x788] sm:$0xff] %v2211
        %2468 = vst [vmem:[#allocation2 + $0x790] sm:$0xff] %v2212
        %2469 = vst [vmem:[#allocation2 + $0x798] sm:$0xff] %v2213
        %2470 = vst [vmem:[#allocation2 + $0x7a0] sm:$0xff] %v2214
        %2471 = vst [vmem:[#allocation2 + $0x7a8] sm:$0xff] %v2215
        %2472 = vst [vmem:[#allocation2 + $0x7b0] sm:$0xff] %v2216
        %2473 = vst [vmem:[#allocation2 + $0x7b8] sm:$0xff] %v2217
        %2474 = vst [vmem:[#allocation2 + $0x7c0] sm:$0xff] %v2218
        %2475 = vst [vmem:[#allocation2 + $0x7c8] sm:$0xff] %v2219
        %2476 = vst [vmem:[#allocation2 + $0x7d0] sm:$0xff] %v2220
        %2477 = vst [vmem:[#allocation2 + $0x7d8] sm:$0xff] %v2221
        %2478 = vst [vmem:[#allocation2 + $0x7e0] sm:$0xff] %v2222
        %2479 = vst [vmem:[#allocation2 + $0x7e8] sm:$0xff] %v2223
        %2480 = vst [vmem:[#allocation2 + $0x7f0] sm:$0xff] %v2224
        %2481 = vst [vmem:[#allocation2 + $0x7f8] sm:$0xff] %v2225
        // Predicated region
        $region49: #{tpu_custom_call.1} parent=31 // pred_check
          %p2482 = pneg %p300
        $region50: #{tpu_custom_call.1} parent=31 // pred_check_branch
          %2484 = sbr.rel (%p2482) target = $region52
        $region51: #{tpu_custom_call.1} parent=31 // pred_region
          %v2485 = vld [vmem:[#allocation2] sm:$0xff]
          %v2486 = vld [vmem:[#allocation2 + $0x8] sm:$0xff]
          %v2487 = vld [vmem:[#allocation2 + $0x10] sm:$0xff]
          %v2488 = vld [vmem:[#allocation2 + $0x18] sm:$0xff]
          %v2489 = vld [vmem:[#allocation2 + $0x20] sm:$0xff]
          %v2490 = vld [vmem:[#allocation2 + $0x28] sm:$0xff]
          %v2491 = vld [vmem:[#allocation2 + $0x30] sm:$0xff]
          %v2492 = vld [vmem:[#allocation2 + $0x38] sm:$0xff]
          %v2493 = vld [vmem:[#allocation2 + $0x40] sm:$0xff]
          %v2494 = vld [vmem:[#allocation2 + $0x48] sm:$0xff]
          %v2495 = vld [vmem:[#allocation2 + $0x50] sm:$0xff]
          %v2496 = vld [vmem:[#allocation2 + $0x58] sm:$0xff]
          %v2497 = vld [vmem:[#allocation2 + $0x60] sm:$0xff]
          %v2498 = vld [vmem:[#allocation2 + $0x68] sm:$0xff]
          %v2499 = vld [vmem:[#allocation2 + $0x70] sm:$0xff]
          %v2500 = vld [vmem:[#allocation2 + $0x78] sm:$0xff]
          %v2501 = vld [vmem:[#allocation2 + $0x80] sm:$0xff]
          %v2502 = vld [vmem:[#allocation2 + $0x88] sm:$0xff]
          %v2503 = vld [vmem:[#allocation2 + $0x90] sm:$0xff]
          %v2504 = vld [vmem:[#allocation2 + $0x98] sm:$0xff]
          %v2505 = vld [vmem:[#allocation2 + $0xa0] sm:$0xff]
          %v2506 = vld [vmem:[#allocation2 + $0xa8] sm:$0xff]
          %v2507 = vld [vmem:[#allocation2 + $0xb0] sm:$0xff]
          %v2508 = vld [vmem:[#allocation2 + $0xb8] sm:$0xff]
          %v2509 = vld [vmem:[#allocation2 + $0xc0] sm:$0xff]
          %v2510 = vld [vmem:[#allocation2 + $0xc8] sm:$0xff]
          %v2511 = vld [vmem:[#allocation2 + $0xd0] sm:$0xff]
          %v2512 = vld [vmem:[#allocation2 + $0xd8] sm:$0xff]
          %v2513 = vld [vmem:[#allocation2 + $0xe0] sm:$0xff]
          %v2514 = vld [vmem:[#allocation2 + $0xe8] sm:$0xff]
          %v2515 = vld [vmem:[#allocation2 + $0xf0] sm:$0xff]
          %v2516 = vld [vmem:[#allocation2 + $0xf8] sm:$0xff]
          %v2517 = vld [vmem:[#allocation2 + $0x100] sm:$0xff]
          %v2518 = vld [vmem:[#allocation2 + $0x108] sm:$0xff]
          %v2519 = vld [vmem:[#allocation2 + $0x110] sm:$0xff]
          %v2520 = vld [vmem:[#allocation2 + $0x118] sm:$0xff]
          %v2521 = vld [vmem:[#allocation2 + $0x120] sm:$0xff]
          %v2522 = vld [vmem:[#allocation2 + $0x128] sm:$0xff]
          %v2523 = vld [vmem:[#allocation2 + $0x130] sm:$0xff]
          %v2524 = vld [vmem:[#allocation2 + $0x138] sm:$0xff]
          %v2525 = vld [vmem:[#allocation2 + $0x140] sm:$0xff]
          %v2526 = vld [vmem:[#allocation2 + $0x148] sm:$0xff]
          %v2527 = vld [vmem:[#allocation2 + $0x150] sm:$0xff]
          %v2528 = vld [vmem:[#allocation2 + $0x158] sm:$0xff]
          %v2529 = vld [vmem:[#allocation2 + $0x160] sm:$0xff]
          %v2530 = vld [vmem:[#allocation2 + $0x168] sm:$0xff]
          %v2531 = vld [vmem:[#allocation2 + $0x170] sm:$0xff]
          %v2532 = vld [vmem:[#allocation2 + $0x178] sm:$0xff]
          %v2533 = vld [vmem:[#allocation2 + $0x180] sm:$0xff]
          %v2534 = vld [vmem:[#allocation2 + $0x188] sm:$0xff]
          %v2535 = vld [vmem:[#allocation2 + $0x190] sm:$0xff]
          %v2536 = vld [vmem:[#allocation2 + $0x198] sm:$0xff]
          %v2537 = vld [vmem:[#allocation2 + $0x1a0] sm:$0xff]
          %v2538 = vld [vmem:[#allocation2 + $0x1a8] sm:$0xff]
          %v2539 = vld [vmem:[#allocation2 + $0x1b0] sm:$0xff]
          %v2540 = vld [vmem:[#allocation2 + $0x1b8] sm:$0xff]
          %v2541 = vld [vmem:[#allocation2 + $0x1c0] sm:$0xff]
          %v2542 = vld [vmem:[#allocation2 + $0x1c8] sm:$0xff]
          %v2543 = vld [vmem:[#allocation2 + $0x1d0] sm:$0xff]
          %v2544 = vld [vmem:[#allocation2 + $0x1d8] sm:$0xff]
          %v2545 = vld [vmem:[#allocation2 + $0x1e0] sm:$0xff]
          %v2546 = vld [vmem:[#allocation2 + $0x1e8] sm:$0xff]
          %v2547 = vld [vmem:[#allocation2 + $0x1f0] sm:$0xff]
          %v2548 = vld [vmem:[#allocation2 + $0x1f8] sm:$0xff]
          %v2549 = vld [vmem:[#allocation2 + $0x200] sm:$0xff]
          %v2550 = vld [vmem:[#allocation2 + $0x208] sm:$0xff]
          %v2551 = vld [vmem:[#allocation2 + $0x210] sm:$0xff]
          %v2552 = vld [vmem:[#allocation2 + $0x218] sm:$0xff]
          %v2553 = vld [vmem:[#allocation2 + $0x220] sm:$0xff]
          %v2554 = vld [vmem:[#allocation2 + $0x228] sm:$0xff]
          %v2555 = vld [vmem:[#allocation2 + $0x230] sm:$0xff]
          %v2556 = vld [vmem:[#allocation2 + $0x238] sm:$0xff]
          %v2557 = vld [vmem:[#allocation2 + $0x240] sm:$0xff]
          %v2558 = vld [vmem:[#allocation2 + $0x248] sm:$0xff]
          %v2559 = vld [vmem:[#allocation2 + $0x250] sm:$0xff]
          %v2560 = vld [vmem:[#allocation2 + $0x258] sm:$0xff]
          %v2561 = vld [vmem:[#allocation2 + $0x260] sm:$0xff]
          %v2562 = vld [vmem:[#allocation2 + $0x268] sm:$0xff]
          %v2563 = vld [vmem:[#allocation2 + $0x270] sm:$0xff]
          %v2564 = vld [vmem:[#allocation2 + $0x278] sm:$0xff]
          %v2565 = vld [vmem:[#allocation2 + $0x280] sm:$0xff]
          %v2566 = vld [vmem:[#allocation2 + $0x288] sm:$0xff]
          %v2567 = vld [vmem:[#allocation2 + $0x290] sm:$0xff]
          %v2568 = vld [vmem:[#allocation2 + $0x298] sm:$0xff]
          %v2569 = vld [vmem:[#allocation2 + $0x2a0] sm:$0xff]
          %v2570 = vld [vmem:[#allocation2 + $0x2a8] sm:$0xff]
          %v2571 = vld [vmem:[#allocation2 + $0x2b0] sm:$0xff]
          %v2572 = vld [vmem:[#allocation2 + $0x2b8] sm:$0xff]
          %v2573 = vld [vmem:[#allocation2 + $0x2c0] sm:$0xff]
          %v2574 = vld [vmem:[#allocation2 + $0x2c8] sm:$0xff]
          %v2575 = vld [vmem:[#allocation2 + $0x2d0] sm:$0xff]
          %v2576 = vld [vmem:[#allocation2 + $0x2d8] sm:$0xff]
          %v2577 = vld [vmem:[#allocation2 + $0x2e0] sm:$0xff]
          %v2578 = vld [vmem:[#allocation2 + $0x2e8] sm:$0xff]
          %v2579 = vld [vmem:[#allocation2 + $0x2f0] sm:$0xff]
          %v2580 = vld [vmem:[#allocation2 + $0x2f8] sm:$0xff]
          %v2581 = vld [vmem:[#allocation2 + $0x300] sm:$0xff]
          %v2582 = vld [vmem:[#allocation2 + $0x308] sm:$0xff]
          %v2583 = vld [vmem:[#allocation2 + $0x310] sm:$0xff]
          %v2584 = vld [vmem:[#allocation2 + $0x318] sm:$0xff]
          %v2585 = vld [vmem:[#allocation2 + $0x320] sm:$0xff]
          %v2586 = vld [vmem:[#allocation2 + $0x328] sm:$0xff]
          %v2587 = vld [vmem:[#allocation2 + $0x330] sm:$0xff]
          %v2588 = vld [vmem:[#allocation2 + $0x338] sm:$0xff]
          %v2589 = vld [vmem:[#allocation2 + $0x340] sm:$0xff]
          %v2590 = vld [vmem:[#allocation2 + $0x348] sm:$0xff]
          %v2591 = vld [vmem:[#allocation2 + $0x350] sm:$0xff]
          %v2592 = vld [vmem:[#allocation2 + $0x358] sm:$0xff]
          %v2593 = vld [vmem:[#allocation2 + $0x360] sm:$0xff]
          %v2594 = vld [vmem:[#allocation2 + $0x368] sm:$0xff]
          %v2595 = vld [vmem:[#allocation2 + $0x370] sm:$0xff]
          %v2596 = vld [vmem:[#allocation2 + $0x378] sm:$0xff]
          %v2597 = vld [vmem:[#allocation2 + $0x380] sm:$0xff]
          %v2598 = vld [vmem:[#allocation2 + $0x388] sm:$0xff]
          %v2599 = vld [vmem:[#allocation2 + $0x390] sm:$0xff]
          %v2600 = vld [vmem:[#allocation2 + $0x398] sm:$0xff]
          %v2601 = vld [vmem:[#allocation2 + $0x3a0] sm:$0xff]
          %v2602 = vld [vmem:[#allocation2 + $0x3a8] sm:$0xff]
          %v2603 = vld [vmem:[#allocation2 + $0x3b0] sm:$0xff]
          %v2604 = vld [vmem:[#allocation2 + $0x3b8] sm:$0xff]
          %v2605 = vld [vmem:[#allocation2 + $0x3c0] sm:$0xff]
          %v2606 = vld [vmem:[#allocation2 + $0x3c8] sm:$0xff]
          %v2607 = vld [vmem:[#allocation2 + $0x3d0] sm:$0xff]
          %v2608 = vld [vmem:[#allocation2 + $0x3d8] sm:$0xff]
          %v2609 = vld [vmem:[#allocation2 + $0x3e0] sm:$0xff]
          %v2610 = vld [vmem:[#allocation2 + $0x3e8] sm:$0xff]
          %v2611 = vld [vmem:[#allocation2 + $0x3f0] sm:$0xff]
          %v2612 = vld [vmem:[#allocation2 + $0x3f8] sm:$0xff]
          %v2613 = vld [vmem:[#allocation2 + $0x400] sm:$0xff]
          %v2614 = vld [vmem:[#allocation2 + $0x408] sm:$0xff]
          %v2615 = vld [vmem:[#allocation2 + $0x410] sm:$0xff]
          %v2616 = vld [vmem:[#allocation2 + $0x418] sm:$0xff]
          %v2617 = vld [vmem:[#allocation2 + $0x420] sm:$0xff]
          %v2618 = vld [vmem:[#allocation2 + $0x428] sm:$0xff]
          %v2619 = vld [vmem:[#allocation2 + $0x430] sm:$0xff]
          %v2620 = vld [vmem:[#allocation2 + $0x438] sm:$0xff]
          %v2621 = vld [vmem:[#allocation2 + $0x440] sm:$0xff]
          %v2622 = vld [vmem:[#allocation2 + $0x448] sm:$0xff]
          %v2623 = vld [vmem:[#allocation2 + $0x450] sm:$0xff]
          %v2624 = vld [vmem:[#allocation2 + $0x458] sm:$0xff]
          %v2625 = vld [vmem:[#allocation2 + $0x460] sm:$0xff]
          %v2626 = vld [vmem:[#allocation2 + $0x468] sm:$0xff]
          %v2627 = vld [vmem:[#allocation2 + $0x470] sm:$0xff]
          %v2628 = vld [vmem:[#allocation2 + $0x478] sm:$0xff]
          %v2629 = vld [vmem:[#allocation2 + $0x480] sm:$0xff]
          %v2630 = vld [vmem:[#allocation2 + $0x488] sm:$0xff]
          %v2631 = vld [vmem:[#allocation2 + $0x490] sm:$0xff]
          %v2632 = vld [vmem:[#allocation2 + $0x498] sm:$0xff]
          %v2633 = vld [vmem:[#allocation2 + $0x4a0] sm:$0xff]
          %v2634 = vld [vmem:[#allocation2 + $0x4a8] sm:$0xff]
          %v2635 = vld [vmem:[#allocation2 + $0x4b0] sm:$0xff]
          %v2636 = vld [vmem:[#allocation2 + $0x4b8] sm:$0xff]
          %v2637 = vld [vmem:[#allocation2 + $0x4c0] sm:$0xff]
          %v2638 = vld [vmem:[#allocation2 + $0x4c8] sm:$0xff]
          %v2639 = vld [vmem:[#allocation2 + $0x4d0] sm:$0xff]
          %v2640 = vld [vmem:[#allocation2 + $0x4d8] sm:$0xff]
          %v2641 = vld [vmem:[#allocation2 + $0x4e0] sm:$0xff]
          %v2642 = vld [vmem:[#allocation2 + $0x4e8] sm:$0xff]
          %v2643 = vld [vmem:[#allocation2 + $0x4f0] sm:$0xff]
          %v2644 = vld [vmem:[#allocation2 + $0x4f8] sm:$0xff]
          %v2645 = vld [vmem:[#allocation2 + $0x500] sm:$0xff]
          %v2646 = vld [vmem:[#allocation2 + $0x508] sm:$0xff]
          %v2647 = vld [vmem:[#allocation2 + $0x510] sm:$0xff]
          %v2648 = vld [vmem:[#allocation2 + $0x518] sm:$0xff]
          %v2649 = vld [vmem:[#allocation2 + $0x520] sm:$0xff]
          %v2650 = vld [vmem:[#allocation2 + $0x528] sm:$0xff]
          %v2651 = vld [vmem:[#allocation2 + $0x530] sm:$0xff]
          %v2652 = vld [vmem:[#allocation2 + $0x538] sm:$0xff]
          %v2653 = vld [vmem:[#allocation2 + $0x540] sm:$0xff]
          %v2654 = vld [vmem:[#allocation2 + $0x548] sm:$0xff]
          %v2655 = vld [vmem:[#allocation2 + $0x550] sm:$0xff]
          %v2656 = vld [vmem:[#allocation2 + $0x558] sm:$0xff]
          %v2657 = vld [vmem:[#allocation2 + $0x560] sm:$0xff]
          %v2658 = vld [vmem:[#allocation2 + $0x568] sm:$0xff]
          %v2659 = vld [vmem:[#allocation2 + $0x570] sm:$0xff]
          %v2660 = vld [vmem:[#allocation2 + $0x578] sm:$0xff]
          %v2661 = vld [vmem:[#allocation2 + $0x580] sm:$0xff]
          %v2662 = vld [vmem:[#allocation2 + $0x588] sm:$0xff]
          %v2663 = vld [vmem:[#allocation2 + $0x590] sm:$0xff]
          %v2664 = vld [vmem:[#allocation2 + $0x598] sm:$0xff]
          %v2665 = vld [vmem:[#allocation2 + $0x5a0] sm:$0xff]
          %v2666 = vld [vmem:[#allocation2 + $0x5a8] sm:$0xff]
          %v2667 = vld [vmem:[#allocation2 + $0x5b0] sm:$0xff]
          %v2668 = vld [vmem:[#allocation2 + $0x5b8] sm:$0xff]
          %v2669 = vld [vmem:[#allocation2 + $0x5c0] sm:$0xff]
          %v2670 = vld [vmem:[#allocation2 + $0x5c8] sm:$0xff]
          %v2671 = vld [vmem:[#allocation2 + $0x5d0] sm:$0xff]
          %v2672 = vld [vmem:[#allocation2 + $0x5d8] sm:$0xff]
          %v2673 = vld [vmem:[#allocation2 + $0x5e0] sm:$0xff]
          %v2674 = vld [vmem:[#allocation2 + $0x5e8] sm:$0xff]
          %v2675 = vld [vmem:[#allocation2 + $0x5f0] sm:$0xff]
          %v2676 = vld [vmem:[#allocation2 + $0x5f8] sm:$0xff]
          %v2677 = vld [vmem:[#allocation2 + $0x600] sm:$0xff]
          %v2678 = vld [vmem:[#allocation2 + $0x608] sm:$0xff]
          %v2679 = vld [vmem:[#allocation2 + $0x610] sm:$0xff]
          %v2680 = vld [vmem:[#allocation2 + $0x618] sm:$0xff]
          %v2681 = vld [vmem:[#allocation2 + $0x620] sm:$0xff]
          %v2682 = vld [vmem:[#allocation2 + $0x628] sm:$0xff]
          %v2683 = vld [vmem:[#allocation2 + $0x630] sm:$0xff]
          %v2684 = vld [vmem:[#allocation2 + $0x638] sm:$0xff]
          %v2685 = vld [vmem:[#allocation2 + $0x640] sm:$0xff]
          %v2686 = vld [vmem:[#allocation2 + $0x648] sm:$0xff]
          %v2687 = vld [vmem:[#allocation2 + $0x650] sm:$0xff]
          %v2688 = vld [vmem:[#allocation2 + $0x658] sm:$0xff]
          %v2689 = vld [vmem:[#allocation2 + $0x660] sm:$0xff]
          %v2690 = vld [vmem:[#allocation2 + $0x668] sm:$0xff]
          %v2691 = vld [vmem:[#allocation2 + $0x670] sm:$0xff]
          %v2692 = vld [vmem:[#allocation2 + $0x678] sm:$0xff]
          %v2693 = vld [vmem:[#allocation2 + $0x680] sm:$0xff]
          %v2694 = vld [vmem:[#allocation2 + $0x688] sm:$0xff]
          %v2695 = vld [vmem:[#allocation2 + $0x690] sm:$0xff]
          %v2696 = vld [vmem:[#allocation2 + $0x698] sm:$0xff]
          %v2697 = vld [vmem:[#allocation2 + $0x6a0] sm:$0xff]
          %v2698 = vld [vmem:[#allocation2 + $0x6a8] sm:$0xff]
          %v2699 = vld [vmem:[#allocation2 + $0x6b0] sm:$0xff]
          %v2700 = vld [vmem:[#allocation2 + $0x6b8] sm:$0xff]
          %v2701 = vld [vmem:[#allocation2 + $0x6c0] sm:$0xff]
          %v2702 = vld [vmem:[#allocation2 + $0x6c8] sm:$0xff]
          %v2703 = vld [vmem:[#allocation2 + $0x6d0] sm:$0xff]
          %v2704 = vld [vmem:[#allocation2 + $0x6d8] sm:$0xff]
          %v2705 = vld [vmem:[#allocation2 + $0x6e0] sm:$0xff]
          %v2706 = vld [vmem:[#allocation2 + $0x6e8] sm:$0xff]
          %v2707 = vld [vmem:[#allocation2 + $0x6f0] sm:$0xff]
          %v2708 = vld [vmem:[#allocation2 + $0x6f8] sm:$0xff]
          %v2709 = vld [vmem:[#allocation2 + $0x700] sm:$0xff]
          %v2710 = vld [vmem:[#allocation2 + $0x708] sm:$0xff]
          %v2711 = vld [vmem:[#allocation2 + $0x710] sm:$0xff]
          %v2712 = vld [vmem:[#allocation2 + $0x718] sm:$0xff]
          %v2713 = vld [vmem:[#allocation2 + $0x720] sm:$0xff]
          %v2714 = vld [vmem:[#allocation2 + $0x728] sm:$0xff]
          %v2715 = vld [vmem:[#allocation2 + $0x730] sm:$0xff]
          %v2716 = vld [vmem:[#allocation2 + $0x738] sm:$0xff]
          %v2717 = vld [vmem:[#allocation2 + $0x740] sm:$0xff]
          %v2718 = vld [vmem:[#allocation2 + $0x748] sm:$0xff]
          %v2719 = vld [vmem:[#allocation2 + $0x750] sm:$0xff]
          %v2720 = vld [vmem:[#allocation2 + $0x758] sm:$0xff]
          %v2721 = vld [vmem:[#allocation2 + $0x760] sm:$0xff]
          %v2722 = vld [vmem:[#allocation2 + $0x768] sm:$0xff]
          %v2723 = vld [vmem:[#allocation2 + $0x770] sm:$0xff]
          %v2724 = vld [vmem:[#allocation2 + $0x778] sm:$0xff]
          %v2725 = vld [vmem:[#allocation2 + $0x780] sm:$0xff]
          %v2726 = vld [vmem:[#allocation2 + $0x788] sm:$0xff]
          %v2727 = vld [vmem:[#allocation2 + $0x790] sm:$0xff]
          %v2728 = vld [vmem:[#allocation2 + $0x798] sm:$0xff]
          %v2729 = vld [vmem:[#allocation2 + $0x7a0] sm:$0xff]
          %v2730 = vld [vmem:[#allocation2 + $0x7a8] sm:$0xff]
          %v2731 = vld [vmem:[#allocation2 + $0x7b0] sm:$0xff]
          %v2732 = vld [vmem:[#allocation2 + $0x7b8] sm:$0xff]
          %v2733 = vld [vmem:[#allocation2 + $0x7c0] sm:$0xff]
          %v2734 = vld [vmem:[#allocation2 + $0x7c8] sm:$0xff]
          %v2735 = vld [vmem:[#allocation2 + $0x7d0] sm:$0xff]
          %v2736 = vld [vmem:[#allocation2 + $0x7d8] sm:$0xff]
          %v2737 = vld [vmem:[#allocation2 + $0x7e0] sm:$0xff]
          %v2738 = vld [vmem:[#allocation2 + $0x7e8] sm:$0xff]
          %v2739 = vld [vmem:[#allocation2 + $0x7f0] sm:$0xff]
          %v2740 = vld [vmem:[#allocation2 + $0x7f8] sm:$0xff]
          %v2741 = vld [vmem:[%s260] sm:$0xf]
          %v2743 = vlaneseq
          %v2744 = vshrl.u32 %v2743, 7
          %v2745 = vsub.s32 0, %v2744
          %v2746 = vrot.slane %v2741, %v2745
          %v2747 = vlaneseq
          %v2748 = vshrl.u32 %v2747, 7
          %v2749 = vsub.s32 1, %v2748
          %v2750 = vrot.slane %v2741, %v2749
          %v2751 = vlaneseq
          %v2752 = vshrl.u32 %v2751, 7
          %v2753 = vsub.s32 2, %v2752
          %v2754 = vrot.slane %v2741, %v2753
          %v2755 = vlaneseq
          %v2756 = vshrl.u32 %v2755, 7
          %v2757 = vsub.s32 3, %v2756
          %v2758 = vrot.slane %v2741, %v2757
          %v2763 = vadd.f32 %v2485, %v2746
          %v2764 = vadd.f32 %v2486, %v2750
          %v2765 = vadd.f32 %v2487, %v2754
          %v2766 = vadd.f32 %v2488, %v2758
          %v2767 = vadd.f32 %v2489, %v2746
          %v2768 = vadd.f32 %v2490, %v2750
          %v2769 = vadd.f32 %v2491, %v2754
          %v2770 = vadd.f32 %v2492, %v2758
          %v2771 = vadd.f32 %v2493, %v2746
          %v2772 = vadd.f32 %v2494, %v2750
          %v2773 = vadd.f32 %v2495, %v2754
          %v2774 = vadd.f32 %v2496, %v2758
          %v2775 = vadd.f32 %v2497, %v2746
          %v2776 = vadd.f32 %v2498, %v2750
          %v2777 = vadd.f32 %v2499, %v2754
          %v2778 = vadd.f32 %v2500, %v2758
          %v2779 = vadd.f32 %v2501, %v2746
          %v2780 = vadd.f32 %v2502, %v2750
          %v2781 = vadd.f32 %v2503, %v2754
          %v2782 = vadd.f32 %v2504, %v2758
          %v2783 = vadd.f32 %v2505, %v2746
          %v2784 = vadd.f32 %v2506, %v2750
          %v2785 = vadd.f32 %v2507, %v2754
          %v2786 = vadd.f32 %v2508, %v2758
          %v2787 = vadd.f32 %v2509, %v2746
          %v2788 = vadd.f32 %v2510, %v2750
          %v2789 = vadd.f32 %v2511, %v2754
          %v2790 = vadd.f32 %v2512, %v2758
          %v2791 = vadd.f32 %v2513, %v2746
          %v2792 = vadd.f32 %v2514, %v2750
          %v2793 = vadd.f32 %v2515, %v2754
          %v2794 = vadd.f32 %v2516, %v2758
          %v2795 = vadd.f32 %v2517, %v2746
          %v2796 = vadd.f32 %v2518, %v2750
          %v2797 = vadd.f32 %v2519, %v2754
          %v2798 = vadd.f32 %v2520, %v2758
          %v2799 = vadd.f32 %v2521, %v2746
          %v2800 = vadd.f32 %v2522, %v2750
          %v2801 = vadd.f32 %v2523, %v2754
          %v2802 = vadd.f32 %v2524, %v2758
          %v2803 = vadd.f32 %v2525, %v2746
          %v2804 = vadd.f32 %v2526, %v2750
          %v2805 = vadd.f32 %v2527, %v2754
          %v2806 = vadd.f32 %v2528, %v2758
          %v2807 = vadd.f32 %v2529, %v2746
          %v2808 = vadd.f32 %v2530, %v2750
          %v2809 = vadd.f32 %v2531, %v2754
          %v2810 = vadd.f32 %v2532, %v2758
          %v2811 = vadd.f32 %v2533, %v2746
          %v2812 = vadd.f32 %v2534, %v2750
          %v2813 = vadd.f32 %v2535, %v2754
          %v2814 = vadd.f32 %v2536, %v2758
          %v2815 = vadd.f32 %v2537, %v2746
          %v2816 = vadd.f32 %v2538, %v2750
          %v2817 = vadd.f32 %v2539, %v2754
          %v2818 = vadd.f32 %v2540, %v2758
          %v2819 = vadd.f32 %v2541, %v2746
          %v2820 = vadd.f32 %v2542, %v2750
          %v2821 = vadd.f32 %v2543, %v2754
          %v2822 = vadd.f32 %v2544, %v2758
          %v2823 = vadd.f32 %v2545, %v2746
          %v2824 = vadd.f32 %v2546, %v2750
          %v2825 = vadd.f32 %v2547, %v2754
          %v2826 = vadd.f32 %v2548, %v2758
          %v2827 = vadd.f32 %v2549, %v2746
          %v2828 = vadd.f32 %v2550, %v2750
          %v2829 = vadd.f32 %v2551, %v2754
          %v2830 = vadd.f32 %v2552, %v2758
          %v2831 = vadd.f32 %v2553, %v2746
          %v2832 = vadd.f32 %v2554, %v2750
          %v2833 = vadd.f32 %v2555, %v2754
          %v2834 = vadd.f32 %v2556, %v2758
          %v2835 = vadd.f32 %v2557, %v2746
          %v2836 = vadd.f32 %v2558, %v2750
          %v2837 = vadd.f32 %v2559, %v2754
          %v2838 = vadd.f32 %v2560, %v2758
          %v2839 = vadd.f32 %v2561, %v2746
          %v2840 = vadd.f32 %v2562, %v2750
          %v2841 = vadd.f32 %v2563, %v2754
          %v2842 = vadd.f32 %v2564, %v2758
          %v2843 = vadd.f32 %v2565, %v2746
          %v2844 = vadd.f32 %v2566, %v2750
          %v2845 = vadd.f32 %v2567, %v2754
          %v2846 = vadd.f32 %v2568, %v2758
          %v2847 = vadd.f32 %v2569, %v2746
          %v2848 = vadd.f32 %v2570, %v2750
          %v2849 = vadd.f32 %v2571, %v2754
          %v2850 = vadd.f32 %v2572, %v2758
          %v2851 = vadd.f32 %v2573, %v2746
          %v2852 = vadd.f32 %v2574, %v2750
          %v2853 = vadd.f32 %v2575, %v2754
          %v2854 = vadd.f32 %v2576, %v2758
          %v2855 = vadd.f32 %v2577, %v2746
          %v2856 = vadd.f32 %v2578, %v2750
          %v2857 = vadd.f32 %v2579, %v2754
          %v2858 = vadd.f32 %v2580, %v2758
          %v2859 = vadd.f32 %v2581, %v2746
          %v2860 = vadd.f32 %v2582, %v2750
          %v2861 = vadd.f32 %v2583, %v2754
          %v2862 = vadd.f32 %v2584, %v2758
          %v2863 = vadd.f32 %v2585, %v2746
          %v2864 = vadd.f32 %v2586, %v2750
          %v2865 = vadd.f32 %v2587, %v2754
          %v2866 = vadd.f32 %v2588, %v2758
          %v2867 = vadd.f32 %v2589, %v2746
          %v2868 = vadd.f32 %v2590, %v2750
          %v2869 = vadd.f32 %v2591, %v2754
          %v2870 = vadd.f32 %v2592, %v2758
          %v2871 = vadd.f32 %v2593, %v2746
          %v2872 = vadd.f32 %v2594, %v2750
          %v2873 = vadd.f32 %v2595, %v2754
          %v2874 = vadd.f32 %v2596, %v2758
          %v2875 = vadd.f32 %v2597, %v2746
          %v2876 = vadd.f32 %v2598, %v2750
          %v2877 = vadd.f32 %v2599, %v2754
          %v2878 = vadd.f32 %v2600, %v2758
          %v2879 = vadd.f32 %v2601, %v2746
          %v2880 = vadd.f32 %v2602, %v2750
          %v2881 = vadd.f32 %v2603, %v2754
          %v2882 = vadd.f32 %v2604, %v2758
          %v2883 = vadd.f32 %v2605, %v2746
          %v2884 = vadd.f32 %v2606, %v2750
          %v2885 = vadd.f32 %v2607, %v2754
          %v2886 = vadd.f32 %v2608, %v2758
          %v2887 = vadd.f32 %v2609, %v2746
          %v2888 = vadd.f32 %v2610, %v2750
          %v2889 = vadd.f32 %v2611, %v2754
          %v2890 = vadd.f32 %v2612, %v2758
          %v2891 = vadd.f32 %v2613, %v2746
          %v2892 = vadd.f32 %v2614, %v2750
          %v2893 = vadd.f32 %v2615, %v2754
          %v2894 = vadd.f32 %v2616, %v2758
          %v2895 = vadd.f32 %v2617, %v2746
          %v2896 = vadd.f32 %v2618, %v2750
          %v2897 = vadd.f32 %v2619, %v2754
          %v2898 = vadd.f32 %v2620, %v2758
          %v2899 = vadd.f32 %v2621, %v2746
          %v2900 = vadd.f32 %v2622, %v2750
          %v2901 = vadd.f32 %v2623, %v2754
          %v2902 = vadd.f32 %v2624, %v2758
          %v2903 = vadd.f32 %v2625, %v2746
          %v2904 = vadd.f32 %v2626, %v2750
          %v2905 = vadd.f32 %v2627, %v2754
          %v2906 = vadd.f32 %v2628, %v2758
          %v2907 = vadd.f32 %v2629, %v2746
          %v2908 = vadd.f32 %v2630, %v2750
          %v2909 = vadd.f32 %v2631, %v2754
          %v2910 = vadd.f32 %v2632, %v2758
          %v2911 = vadd.f32 %v2633, %v2746
          %v2912 = vadd.f32 %v2634, %v2750
          %v2913 = vadd.f32 %v2635, %v2754
          %v2914 = vadd.f32 %v2636, %v2758
          %v2915 = vadd.f32 %v2637, %v2746
          %v2916 = vadd.f32 %v2638, %v2750
          %v2917 = vadd.f32 %v2639, %v2754
          %v2918 = vadd.f32 %v2640, %v2758
          %v2919 = vadd.f32 %v2641, %v2746
          %v2920 = vadd.f32 %v2642, %v2750
          %v2921 = vadd.f32 %v2643, %v2754
          %v2922 = vadd.f32 %v2644, %v2758
          %v2923 = vadd.f32 %v2645, %v2746
          %v2924 = vadd.f32 %v2646, %v2750
          %v2925 = vadd.f32 %v2647, %v2754
          %v2926 = vadd.f32 %v2648, %v2758
          %v2927 = vadd.f32 %v2649, %v2746
          %v2928 = vadd.f32 %v2650, %v2750
          %v2929 = vadd.f32 %v2651, %v2754
          %v2930 = vadd.f32 %v2652, %v2758
          %v2931 = vadd.f32 %v2653, %v2746
          %v2932 = vadd.f32 %v2654, %v2750
          %v2933 = vadd.f32 %v2655, %v2754
          %v2934 = vadd.f32 %v2656, %v2758
          %v2935 = vadd.f32 %v2657, %v2746
          %v2936 = vadd.f32 %v2658, %v2750
          %v2937 = vadd.f32 %v2659, %v2754
          %v2938 = vadd.f32 %v2660, %v2758
          %v2939 = vadd.f32 %v2661, %v2746
          %v2940 = vadd.f32 %v2662, %v2750
          %v2941 = vadd.f32 %v2663, %v2754
          %v2942 = vadd.f32 %v2664, %v2758
          %v2943 = vadd.f32 %v2665, %v2746
          %v2944 = vadd.f32 %v2666, %v2750
          %v2945 = vadd.f32 %v2667, %v2754
          %v2946 = vadd.f32 %v2668, %v2758
          %v2947 = vadd.f32 %v2669, %v2746
          %v2948 = vadd.f32 %v2670, %v2750
          %v2949 = vadd.f32 %v2671, %v2754
          %v2950 = vadd.f32 %v2672, %v2758
          %v2951 = vadd.f32 %v2673, %v2746
          %v2952 = vadd.f32 %v2674, %v2750
          %v2953 = vadd.f32 %v2675, %v2754
          %v2954 = vadd.f32 %v2676, %v2758
          %v2955 = vadd.f32 %v2677, %v2746
          %v2956 = vadd.f32 %v2678, %v2750
          %v2957 = vadd.f32 %v2679, %v2754
          %v2958 = vadd.f32 %v2680, %v2758
          %v2959 = vadd.f32 %v2681, %v2746
          %v2960 = vadd.f32 %v2682, %v2750
          %v2961 = vadd.f32 %v2683, %v2754
          %v2962 = vadd.f32 %v2684, %v2758
          %v2963 = vadd.f32 %v2685, %v2746
          %v2964 = vadd.f32 %v2686, %v2750
          %v2965 = vadd.f32 %v2687, %v2754
          %v2966 = vadd.f32 %v2688, %v2758
          %v2967 = vadd.f32 %v2689, %v2746
          %v2968 = vadd.f32 %v2690, %v2750
          %v2969 = vadd.f32 %v2691, %v2754
          %v2970 = vadd.f32 %v2692, %v2758
          %v2971 = vadd.f32 %v2693, %v2746
          %v2972 = vadd.f32 %v2694, %v2750
          %v2973 = vadd.f32 %v2695, %v2754
          %v2974 = vadd.f32 %v2696, %v2758
          %v2975 = vadd.f32 %v2697, %v2746
          %v2976 = vadd.f32 %v2698, %v2750
          %v2977 = vadd.f32 %v2699, %v2754
          %v2978 = vadd.f32 %v2700, %v2758
          %v2979 = vadd.f32 %v2701, %v2746
          %v2980 = vadd.f32 %v2702, %v2750
          %v2981 = vadd.f32 %v2703, %v2754
          %v2982 = vadd.f32 %v2704, %v2758
          %v2983 = vadd.f32 %v2705, %v2746
          %v2984 = vadd.f32 %v2706, %v2750
          %v2985 = vadd.f32 %v2707, %v2754
          %v2986 = vadd.f32 %v2708, %v2758
          %v2987 = vadd.f32 %v2709, %v2746
          %v2988 = vadd.f32 %v2710, %v2750
          %v2989 = vadd.f32 %v2711, %v2754
          %v2990 = vadd.f32 %v2712, %v2758
          %v2991 = vadd.f32 %v2713, %v2746
          %v2992 = vadd.f32 %v2714, %v2750
          %v2993 = vadd.f32 %v2715, %v2754
          %v2994 = vadd.f32 %v2716, %v2758
          %v2995 = vadd.f32 %v2717, %v2746
          %v2996 = vadd.f32 %v2718, %v2750
          %v2997 = vadd.f32 %v2719, %v2754
          %v2998 = vadd.f32 %v2720, %v2758
          %v2999 = vadd.f32 %v2721, %v2746
          %v3000 = vadd.f32 %v2722, %v2750
          %v3001 = vadd.f32 %v2723, %v2754
          %v3002 = vadd.f32 %v2724, %v2758
          %v3003 = vadd.f32 %v2725, %v2746
          %v3004 = vadd.f32 %v2726, %v2750
          %v3005 = vadd.f32 %v2727, %v2754
          %v3006 = vadd.f32 %v2728, %v2758
          %v3007 = vadd.f32 %v2729, %v2746
          %v3008 = vadd.f32 %v2730, %v2750
          %v3009 = vadd.f32 %v2731, %v2754
          %v3010 = vadd.f32 %v2732, %v2758
          %v3011 = vadd.f32 %v2733, %v2746
          %v3012 = vadd.f32 %v2734, %v2750
          %v3013 = vadd.f32 %v2735, %v2754
          %v3014 = vadd.f32 %v2736, %v2758
          %v3015 = vadd.f32 %v2737, %v2746
          %v3016 = vadd.f32 %v2738, %v2750
          %v3017 = vadd.f32 %v2739, %v2754
          %v3018 = vadd.f32 %v2740, %v2758
          %v3019 = vpack.c.bf16 %v2767, %v2763
          %v3020 = vpack.c.bf16 %v2768, %v2764
          %v3021 = vpack.c.bf16 %v2769, %v2765
          %v3022 = vpack.c.bf16 %v2770, %v2766
          %v3023 = vpack.c.bf16 %v2775, %v2771
          %v3024 = vpack.c.bf16 %v2776, %v2772
          %v3025 = vpack.c.bf16 %v2777, %v2773
          %v3026 = vpack.c.bf16 %v2778, %v2774
          %v3027 = vpack.c.bf16 %v2783, %v2779
          %v3028 = vpack.c.bf16 %v2784, %v2780
          %v3029 = vpack.c.bf16 %v2785, %v2781
          %v3030 = vpack.c.bf16 %v2786, %v2782
          %v3031 = vpack.c.bf16 %v2791, %v2787
          %v3032 = vpack.c.bf16 %v2792, %v2788
          %v3033 = vpack.c.bf16 %v2793, %v2789
          %v3034 = vpack.c.bf16 %v2794, %v2790
          %v3035 = vpack.c.bf16 %v2799, %v2795
          %v3036 = vpack.c.bf16 %v2800, %v2796
          %v3037 = vpack.c.bf16 %v2801, %v2797
          %v3038 = vpack.c.bf16 %v2802, %v2798
          %v3039 = vpack.c.bf16 %v2807, %v2803
          %v3040 = vpack.c.bf16 %v2808, %v2804
          %v3041 = vpack.c.bf16 %v2809, %v2805
          %v3042 = vpack.c.bf16 %v2810, %v2806
          %v3043 = vpack.c.bf16 %v2815, %v2811
          %v3044 = vpack.c.bf16 %v2816, %v2812
          %v3045 = vpack.c.bf16 %v2817, %v2813
          %v3046 = vpack.c.bf16 %v2818, %v2814
          %v3047 = vpack.c.bf16 %v2823, %v2819
          %v3048 = vpack.c.bf16 %v2824, %v2820
          %v3049 = vpack.c.bf16 %v2825, %v2821
          %v3050 = vpack.c.bf16 %v2826, %v2822
          %v3051 = vpack.c.bf16 %v2831, %v2827
          %v3052 = vpack.c.bf16 %v2832, %v2828
          %v3053 = vpack.c.bf16 %v2833, %v2829
          %v3054 = vpack.c.bf16 %v2834, %v2830
          %v3055 = vpack.c.bf16 %v2839, %v2835
          %v3056 = vpack.c.bf16 %v2840, %v2836
          %v3057 = vpack.c.bf16 %v2841, %v2837
          %v3058 = vpack.c.bf16 %v2842, %v2838
          %v3059 = vpack.c.bf16 %v2847, %v2843
          %v3060 = vpack.c.bf16 %v2848, %v2844
          %v3061 = vpack.c.bf16 %v2849, %v2845
          %v3062 = vpack.c.bf16 %v2850, %v2846
          %v3063 = vpack.c.bf16 %v2855, %v2851
          %v3064 = vpack.c.bf16 %v2856, %v2852
          %v3065 = vpack.c.bf16 %v2857, %v2853
          %v3066 = vpack.c.bf16 %v2858, %v2854
          %v3067 = vpack.c.bf16 %v2863, %v2859
          %v3068 = vpack.c.bf16 %v2864, %v2860
          %v3069 = vpack.c.bf16 %v2865, %v2861
          %v3070 = vpack.c.bf16 %v2866, %v2862
          %v3071 = vpack.c.bf16 %v2871, %v2867
          %v3072 = vpack.c.bf16 %v2872, %v2868
          %v3073 = vpack.c.bf16 %v2873, %v2869
          %v3074 = vpack.c.bf16 %v2874, %v2870
          %v3075 = vpack.c.bf16 %v2879, %v2875
          %v3076 = vpack.c.bf16 %v2880, %v2876
          %v3077 = vpack.c.bf16 %v2881, %v2877
          %v3078 = vpack.c.bf16 %v2882, %v2878
          %v3079 = vpack.c.bf16 %v2887, %v2883
          %v3080 = vpack.c.bf16 %v2888, %v2884
          %v3081 = vpack.c.bf16 %v2889, %v2885
          %v3082 = vpack.c.bf16 %v2890, %v2886
          %v3083 = vpack.c.bf16 %v2895, %v2891
          %v3084 = vpack.c.bf16 %v2896, %v2892
          %v3085 = vpack.c.bf16 %v2897, %v2893
          %v3086 = vpack.c.bf16 %v2898, %v2894
          %v3087 = vpack.c.bf16 %v2903, %v2899
          %v3088 = vpack.c.bf16 %v2904, %v2900
          %v3089 = vpack.c.bf16 %v2905, %v2901
          %v3090 = vpack.c.bf16 %v2906, %v2902
          %v3091 = vpack.c.bf16 %v2911, %v2907
          %v3092 = vpack.c.bf16 %v2912, %v2908
          %v3093 = vpack.c.bf16 %v2913, %v2909
          %v3094 = vpack.c.bf16 %v2914, %v2910
          %v3095 = vpack.c.bf16 %v2919, %v2915
          %v3096 = vpack.c.bf16 %v2920, %v2916
          %v3097 = vpack.c.bf16 %v2921, %v2917
          %v3098 = vpack.c.bf16 %v2922, %v2918
          %v3099 = vpack.c.bf16 %v2927, %v2923
          %v3100 = vpack.c.bf16 %v2928, %v2924
          %v3101 = vpack.c.bf16 %v2929, %v2925
          %v3102 = vpack.c.bf16 %v2930, %v2926
          %v3103 = vpack.c.bf16 %v2935, %v2931
          %v3104 = vpack.c.bf16 %v2936, %v2932
          %v3105 = vpack.c.bf16 %v2937, %v2933
          %v3106 = vpack.c.bf16 %v2938, %v2934
          %v3107 = vpack.c.bf16 %v2943, %v2939
          %v3108 = vpack.c.bf16 %v2944, %v2940
          %v3109 = vpack.c.bf16 %v2945, %v2941
          %v3110 = vpack.c.bf16 %v2946, %v2942
          %v3111 = vpack.c.bf16 %v2951, %v2947
          %v3112 = vpack.c.bf16 %v2952, %v2948
          %v3113 = vpack.c.bf16 %v2953, %v2949
          %v3114 = vpack.c.bf16 %v2954, %v2950
          %v3115 = vpack.c.bf16 %v2959, %v2955
          %v3116 = vpack.c.bf16 %v2960, %v2956
          %v3117 = vpack.c.bf16 %v2961, %v2957
          %v3118 = vpack.c.bf16 %v2962, %v2958
          %v3119 = vpack.c.bf16 %v2967, %v2963
          %v3120 = vpack.c.bf16 %v2968, %v2964
          %v3121 = vpack.c.bf16 %v2969, %v2965
          %v3122 = vpack.c.bf16 %v2970, %v2966
          %v3123 = vpack.c.bf16 %v2975, %v2971
          %v3124 = vpack.c.bf16 %v2976, %v2972
          %v3125 = vpack.c.bf16 %v2977, %v2973
          %v3126 = vpack.c.bf16 %v2978, %v2974
          %v3127 = vpack.c.bf16 %v2983, %v2979
          %v3128 = vpack.c.bf16 %v2984, %v2980
          %v3129 = vpack.c.bf16 %v2985, %v2981
          %v3130 = vpack.c.bf16 %v2986, %v2982
          %v3131 = vpack.c.bf16 %v2991, %v2987
          %v3132 = vpack.c.bf16 %v2992, %v2988
          %v3133 = vpack.c.bf16 %v2993, %v2989
          %v3134 = vpack.c.bf16 %v2994, %v2990
          %v3135 = vpack.c.bf16 %v2999, %v2995
          %v3136 = vpack.c.bf16 %v3000, %v2996
          %v3137 = vpack.c.bf16 %v3001, %v2997
          %v3138 = vpack.c.bf16 %v3002, %v2998
          %v3139 = vpack.c.bf16 %v3007, %v3003
          %v3140 = vpack.c.bf16 %v3008, %v3004
          %v3141 = vpack.c.bf16 %v3009, %v3005
          %v3142 = vpack.c.bf16 %v3010, %v3006
          %v3143 = vpack.c.bf16 %v3015, %v3011
          %v3144 = vpack.c.bf16 %v3016, %v3012
          %v3145 = vpack.c.bf16 %v3017, %v3013
          %v3146 = vpack.c.bf16 %v3018, %v3014
          %v3275 = vunpack.c.l.b16 %v3019
          %v3276 = vunpack.c.l.b16 %v3020
          %v3277 = vunpack.c.l.b16 %v3021
          %v3278 = vunpack.c.l.b16 %v3022
          %v3279 = vunpack.c.h.b16 %v3019
          %v3280 = vunpack.c.h.b16 %v3020
          %v3281 = vunpack.c.h.b16 %v3021
          %v3282 = vunpack.c.h.b16 %v3022
          %v3283 = vunpack.c.l.b16 %v3023
          %v3284 = vunpack.c.l.b16 %v3024
          %v3285 = vunpack.c.l.b16 %v3025
          %v3286 = vunpack.c.l.b16 %v3026
          %v3287 = vunpack.c.h.b16 %v3023
          %v3288 = vunpack.c.h.b16 %v3024
          %v3289 = vunpack.c.h.b16 %v3025
          %v3290 = vunpack.c.h.b16 %v3026
          %v3291 = vunpack.c.l.b16 %v3027
          %v3292 = vunpack.c.l.b16 %v3028
          %v3293 = vunpack.c.l.b16 %v3029
          %v3294 = vunpack.c.l.b16 %v3030
          %v3295 = vunpack.c.h.b16 %v3027
          %v3296 = vunpack.c.h.b16 %v3028
          %v3297 = vunpack.c.h.b16 %v3029
          %v3298 = vunpack.c.h.b16 %v3030
          %v3299 = vunpack.c.l.b16 %v3031
          %v3300 = vunpack.c.l.b16 %v3032
          %v3301 = vunpack.c.l.b16 %v3033
          %v3302 = vunpack.c.l.b16 %v3034
          %v3303 = vunpack.c.h.b16 %v3031
          %v3304 = vunpack.c.h.b16 %v3032
          %v3305 = vunpack.c.h.b16 %v3033
          %v3306 = vunpack.c.h.b16 %v3034
          %v3307 = vunpack.c.l.b16 %v3035
          %v3308 = vunpack.c.l.b16 %v3036
          %v3309 = vunpack.c.l.b16 %v3037
          %v3310 = vunpack.c.l.b16 %v3038
          %v3311 = vunpack.c.h.b16 %v3035
          %v3312 = vunpack.c.h.b16 %v3036
          %v3313 = vunpack.c.h.b16 %v3037
          %v3314 = vunpack.c.h.b16 %v3038
          %v3315 = vunpack.c.l.b16 %v3039
          %v3316 = vunpack.c.l.b16 %v3040
          %v3317 = vunpack.c.l.b16 %v3041
          %v3318 = vunpack.c.l.b16 %v3042
          %v3319 = vunpack.c.h.b16 %v3039
          %v3320 = vunpack.c.h.b16 %v3040
          %v3321 = vunpack.c.h.b16 %v3041
          %v3322 = vunpack.c.h.b16 %v3042
          %v3323 = vunpack.c.l.b16 %v3043
          %v3324 = vunpack.c.l.b16 %v3044
          %v3325 = vunpack.c.l.b16 %v3045
          %v3326 = vunpack.c.l.b16 %v3046
          %v3327 = vunpack.c.h.b16 %v3043
          %v3328 = vunpack.c.h.b16 %v3044
          %v3329 = vunpack.c.h.b16 %v3045
          %v3330 = vunpack.c.h.b16 %v3046
          %v3331 = vunpack.c.l.b16 %v3047
          %v3332 = vunpack.c.l.b16 %v3048
          %v3333 = vunpack.c.l.b16 %v3049
          %v3334 = vunpack.c.l.b16 %v3050
          %v3335 = vunpack.c.h.b16 %v3047
          %v3336 = vunpack.c.h.b16 %v3048
          %v3337 = vunpack.c.h.b16 %v3049
          %v3338 = vunpack.c.h.b16 %v3050
          %v3339 = vunpack.c.l.b16 %v3051
          %v3340 = vunpack.c.l.b16 %v3052
          %v3341 = vunpack.c.l.b16 %v3053
          %v3342 = vunpack.c.l.b16 %v3054
          %v3343 = vunpack.c.h.b16 %v3051
          %v3344 = vunpack.c.h.b16 %v3052
          %v3345 = vunpack.c.h.b16 %v3053
          %v3346 = vunpack.c.h.b16 %v3054
          %v3347 = vunpack.c.l.b16 %v3055
          %v3348 = vunpack.c.l.b16 %v3056
          %v3349 = vunpack.c.l.b16 %v3057
          %v3350 = vunpack.c.l.b16 %v3058
          %v3351 = vunpack.c.h.b16 %v3055
          %v3352 = vunpack.c.h.b16 %v3056
          %v3353 = vunpack.c.h.b16 %v3057
          %v3354 = vunpack.c.h.b16 %v3058
          %v3355 = vunpack.c.l.b16 %v3059
          %v3356 = vunpack.c.l.b16 %v3060
          %v3357 = vunpack.c.l.b16 %v3061
          %v3358 = vunpack.c.l.b16 %v3062
          %v3359 = vunpack.c.h.b16 %v3059
          %v3360 = vunpack.c.h.b16 %v3060
          %v3361 = vunpack.c.h.b16 %v3061
          %v3362 = vunpack.c.h.b16 %v3062
          %v3363 = vunpack.c.l.b16 %v3063
          %v3364 = vunpack.c.l.b16 %v3064
          %v3365 = vunpack.c.l.b16 %v3065
          %v3366 = vunpack.c.l.b16 %v3066
          %v3367 = vunpack.c.h.b16 %v3063
          %v3368 = vunpack.c.h.b16 %v3064
          %v3369 = vunpack.c.h.b16 %v3065
          %v3370 = vunpack.c.h.b16 %v3066
          %v3371 = vunpack.c.l.b16 %v3067
          %v3372 = vunpack.c.l.b16 %v3068
          %v3373 = vunpack.c.l.b16 %v3069
          %v3374 = vunpack.c.l.b16 %v3070
          %v3375 = vunpack.c.h.b16 %v3067
          %v3376 = vunpack.c.h.b16 %v3068
          %v3377 = vunpack.c.h.b16 %v3069
          %v3378 = vunpack.c.h.b16 %v3070
          %v3379 = vunpack.c.l.b16 %v3071
          %v3380 = vunpack.c.l.b16 %v3072
          %v3381 = vunpack.c.l.b16 %v3073
          %v3382 = vunpack.c.l.b16 %v3074
          %v3383 = vunpack.c.h.b16 %v3071
          %v3384 = vunpack.c.h.b16 %v3072
          %v3385 = vunpack.c.h.b16 %v3073
          %v3386 = vunpack.c.h.b16 %v3074
          %v3387 = vunpack.c.l.b16 %v3075
          %v3388 = vunpack.c.l.b16 %v3076
          %v3389 = vunpack.c.l.b16 %v3077
          %v3390 = vunpack.c.l.b16 %v3078
          %v3391 = vunpack.c.h.b16 %v3075
          %v3392 = vunpack.c.h.b16 %v3076
          %v3393 = vunpack.c.h.b16 %v3077
          %v3394 = vunpack.c.h.b16 %v3078
          %v3395 = vunpack.c.l.b16 %v3079
          %v3396 = vunpack.c.l.b16 %v3080
          %v3397 = vunpack.c.l.b16 %v3081
          %v3398 = vunpack.c.l.b16 %v3082
          %v3399 = vunpack.c.h.b16 %v3079
          %v3400 = vunpack.c.h.b16 %v3080
          %v3401 = vunpack.c.h.b16 %v3081
          %v3402 = vunpack.c.h.b16 %v3082
          %v3403 = vunpack.c.l.b16 %v3083
          %v3404 = vunpack.c.l.b16 %v3084
          %v3405 = vunpack.c.l.b16 %v3085
          %v3406 = vunpack.c.l.b16 %v3086
          %v3407 = vunpack.c.h.b16 %v3083
          %v3408 = vunpack.c.h.b16 %v3084
          %v3409 = vunpack.c.h.b16 %v3085
          %v3410 = vunpack.c.h.b16 %v3086
          %v3411 = vunpack.c.l.b16 %v3087
          %v3412 = vunpack.c.l.b16 %v3088
          %v3413 = vunpack.c.l.b16 %v3089
          %v3414 = vunpack.c.l.b16 %v3090
          %v3415 = vunpack.c.h.b16 %v3087
          %v3416 = vunpack.c.h.b16 %v3088
          %v3417 = vunpack.c.h.b16 %v3089
          %v3418 = vunpack.c.h.b16 %v3090
          %v3419 = vunpack.c.l.b16 %v3091
          %v3420 = vunpack.c.l.b16 %v3092
          %v3421 = vunpack.c.l.b16 %v3093
          %v3422 = vunpack.c.l.b16 %v3094
          %v3423 = vunpack.c.h.b16 %v3091
          %v3424 = vunpack.c.h.b16 %v3092
          %v3425 = vunpack.c.h.b16 %v3093
          %v3426 = vunpack.c.h.b16 %v3094
          %v3427 = vunpack.c.l.b16 %v3095
          %v3428 = vunpack.c.l.b16 %v3096
          %v3429 = vunpack.c.l.b16 %v3097
          %v3430 = vunpack.c.l.b16 %v3098
          %v3431 = vunpack.c.h.b16 %v3095
          %v3432 = vunpack.c.h.b16 %v3096
          %v3433 = vunpack.c.h.b16 %v3097
          %v3434 = vunpack.c.h.b16 %v3098
          %v3435 = vunpack.c.l.b16 %v3099
          %v3436 = vunpack.c.l.b16 %v3100
          %v3437 = vunpack.c.l.b16 %v3101
          %v3438 = vunpack.c.l.b16 %v3102
          %v3439 = vunpack.c.h.b16 %v3099
          %v3440 = vunpack.c.h.b16 %v3100
          %v3441 = vunpack.c.h.b16 %v3101
          %v3442 = vunpack.c.h.b16 %v3102
          %v3443 = vunpack.c.l.b16 %v3103
          %v3444 = vunpack.c.l.b16 %v3104
          %v3445 = vunpack.c.l.b16 %v3105
          %v3446 = vunpack.c.l.b16 %v3106
          %v3447 = vunpack.c.h.b16 %v3103
          %v3448 = vunpack.c.h.b16 %v3104
          %v3449 = vunpack.c.h.b16 %v3105
          %v3450 = vunpack.c.h.b16 %v3106
          %v3451 = vunpack.c.l.b16 %v3107
          %v3452 = vunpack.c.l.b16 %v3108
          %v3453 = vunpack.c.l.b16 %v3109
          %v3454 = vunpack.c.l.b16 %v3110
          %v3455 = vunpack.c.h.b16 %v3107
          %v3456 = vunpack.c.h.b16 %v3108
          %v3457 = vunpack.c.h.b16 %v3109
          %v3458 = vunpack.c.h.b16 %v3110
          %v3459 = vunpack.c.l.b16 %v3111
          %v3460 = vunpack.c.l.b16 %v3112
          %v3461 = vunpack.c.l.b16 %v3113
          %v3462 = vunpack.c.l.b16 %v3114
          %v3463 = vunpack.c.h.b16 %v3111
          %v3464 = vunpack.c.h.b16 %v3112
          %v3465 = vunpack.c.h.b16 %v3113
          %v3466 = vunpack.c.h.b16 %v3114
          %v3467 = vunpack.c.l.b16 %v3115
          %v3468 = vunpack.c.l.b16 %v3116
          %v3469 = vunpack.c.l.b16 %v3117
          %v3470 = vunpack.c.l.b16 %v3118
          %v3471 = vunpack.c.h.b16 %v3115
          %v3472 = vunpack.c.h.b16 %v3116
          %v3473 = vunpack.c.h.b16 %v3117
          %v3474 = vunpack.c.h.b16 %v3118
          %v3475 = vunpack.c.l.b16 %v3119
          %v3476 = vunpack.c.l.b16 %v3120
          %v3477 = vunpack.c.l.b16 %v3121
          %v3478 = vunpack.c.l.b16 %v3122
          %v3479 = vunpack.c.h.b16 %v3119
          %v3480 = vunpack.c.h.b16 %v3120
          %v3481 = vunpack.c.h.b16 %v3121
          %v3482 = vunpack.c.h.b16 %v3122
          %v3483 = vunpack.c.l.b16 %v3123
          %v3484 = vunpack.c.l.b16 %v3124
          %v3485 = vunpack.c.l.b16 %v3125
          %v3486 = vunpack.c.l.b16 %v3126
          %v3487 = vunpack.c.h.b16 %v3123
          %v3488 = vunpack.c.h.b16 %v3124
          %v3489 = vunpack.c.h.b16 %v3125
          %v3490 = vunpack.c.h.b16 %v3126
          %v3491 = vunpack.c.l.b16 %v3127
          %v3492 = vunpack.c.l.b16 %v3128
          %v3493 = vunpack.c.l.b16 %v3129
          %v3494 = vunpack.c.l.b16 %v3130
          %v3495 = vunpack.c.h.b16 %v3127
          %v3496 = vunpack.c.h.b16 %v3128
          %v3497 = vunpack.c.h.b16 %v3129
          %v3498 = vunpack.c.h.b16 %v3130
          %v3499 = vunpack.c.l.b16 %v3131
          %v3500 = vunpack.c.l.b16 %v3132
          %v3501 = vunpack.c.l.b16 %v3133
          %v3502 = vunpack.c.l.b16 %v3134
          %v3503 = vunpack.c.h.b16 %v3131
          %v3504 = vunpack.c.h.b16 %v3132
          %v3505 = vunpack.c.h.b16 %v3133
          %v3506 = vunpack.c.h.b16 %v3134
          %v3507 = vunpack.c.l.b16 %v3135
          %v3508 = vunpack.c.l.b16 %v3136
          %v3509 = vunpack.c.l.b16 %v3137
          %v3510 = vunpack.c.l.b16 %v3138
          %v3511 = vunpack.c.h.b16 %v3135
          %v3512 = vunpack.c.h.b16 %v3136
          %v3513 = vunpack.c.h.b16 %v3137
          %v3514 = vunpack.c.h.b16 %v3138
          %v3515 = vunpack.c.l.b16 %v3139
          %v3516 = vunpack.c.l.b16 %v3140
          %v3517 = vunpack.c.l.b16 %v3141
          %v3518 = vunpack.c.l.b16 %v3142
          %v3519 = vunpack.c.h.b16 %v3139
          %v3520 = vunpack.c.h.b16 %v3140
          %v3521 = vunpack.c.h.b16 %v3141
          %v3522 = vunpack.c.h.b16 %v3142
          %v3523 = vunpack.c.l.b16 %v3143
          %v3524 = vunpack.c.l.b16 %v3144
          %v3525 = vunpack.c.l.b16 %v3145
          %v3526 = vunpack.c.l.b16 %v3146
          %v3527 = vunpack.c.h.b16 %v3143
          %v3528 = vunpack.c.h.b16 %v3144
          %v3529 = vunpack.c.h.b16 %v3145
          %v3530 = vunpack.c.h.b16 %v3146
          %v3531 = vpack.c.b16 %v3276, %v3275
          %v3532 = vpack.c.b16 %v3278, %v3277
          %v3533 = vpack.c.b16 %v3280, %v3279
          %v3534 = vpack.c.b16 %v3282, %v3281
          %v3535 = vpack.c.b16 %v3284, %v3283
          %v3536 = vpack.c.b16 %v3286, %v3285
          %v3537 = vpack.c.b16 %v3288, %v3287
          %v3538 = vpack.c.b16 %v3290, %v3289
          %v3539 = vpack.c.b16 %v3292, %v3291
          %v3540 = vpack.c.b16 %v3294, %v3293
          %v3541 = vpack.c.b16 %v3296, %v3295
          %v3542 = vpack.c.b16 %v3298, %v3297
          %v3543 = vpack.c.b16 %v3300, %v3299
          %v3544 = vpack.c.b16 %v3302, %v3301
          %v3545 = vpack.c.b16 %v3304, %v3303
          %v3546 = vpack.c.b16 %v3306, %v3305
          %v3547 = vpack.c.b16 %v3308, %v3307
          %v3548 = vpack.c.b16 %v3310, %v3309
          %v3549 = vpack.c.b16 %v3312, %v3311
          %v3550 = vpack.c.b16 %v3314, %v3313
          %v3551 = vpack.c.b16 %v3316, %v3315
          %v3552 = vpack.c.b16 %v3318, %v3317
          %v3553 = vpack.c.b16 %v3320, %v3319
          %v3554 = vpack.c.b16 %v3322, %v3321
          %v3555 = vpack.c.b16 %v3324, %v3323
          %v3556 = vpack.c.b16 %v3326, %v3325
          %v3557 = vpack.c.b16 %v3328, %v3327
          %v3558 = vpack.c.b16 %v3330, %v3329
          %v3559 = vpack.c.b16 %v3332, %v3331
          %v3560 = vpack.c.b16 %v3334, %v3333
          %v3561 = vpack.c.b16 %v3336, %v3335
          %v3562 = vpack.c.b16 %v3338, %v3337
          %v3563 = vpack.c.b16 %v3340, %v3339
          %v3564 = vpack.c.b16 %v3342, %v3341
          %v3565 = vpack.c.b16 %v3344, %v3343
          %v3566 = vpack.c.b16 %v3346, %v3345
          %v3567 = vpack.c.b16 %v3348, %v3347
          %v3568 = vpack.c.b16 %v3350, %v3349
          %v3569 = vpack.c.b16 %v3352, %v3351
          %v3570 = vpack.c.b16 %v3354, %v3353
          %v3571 = vpack.c.b16 %v3356, %v3355
          %v3572 = vpack.c.b16 %v3358, %v3357
          %v3573 = vpack.c.b16 %v3360, %v3359
          %v3574 = vpack.c.b16 %v3362, %v3361
          %v3575 = vpack.c.b16 %v3364, %v3363
          %v3576 = vpack.c.b16 %v3366, %v3365
          %v3577 = vpack.c.b16 %v3368, %v3367
          %v3578 = vpack.c.b16 %v3370, %v3369
          %v3579 = vpack.c.b16 %v3372, %v3371
          %v3580 = vpack.c.b16 %v3374, %v3373
          %v3581 = vpack.c.b16 %v3376, %v3375
          %v3582 = vpack.c.b16 %v3378, %v3377
          %v3583 = vpack.c.b16 %v3380, %v3379
          %v3584 = vpack.c.b16 %v3382, %v3381
          %v3585 = vpack.c.b16 %v3384, %v3383
          %v3586 = vpack.c.b16 %v3386, %v3385
          %v3587 = vpack.c.b16 %v3388, %v3387
          %v3588 = vpack.c.b16 %v3390, %v3389
          %v3589 = vpack.c.b16 %v3392, %v3391
          %v3590 = vpack.c.b16 %v3394, %v3393
          %v3591 = vpack.c.b16 %v3396, %v3395
          %v3592 = vpack.c.b16 %v3398, %v3397
          %v3593 = vpack.c.b16 %v3400, %v3399
          %v3594 = vpack.c.b16 %v3402, %v3401
          %v3595 = vpack.c.b16 %v3404, %v3403
          %v3596 = vpack.c.b16 %v3406, %v3405
          %v3597 = vpack.c.b16 %v3408, %v3407
          %v3598 = vpack.c.b16 %v3410, %v3409
          %v3599 = vpack.c.b16 %v3412, %v3411
          %v3600 = vpack.c.b16 %v3414, %v3413
          %v3601 = vpack.c.b16 %v3416, %v3415
          %v3602 = vpack.c.b16 %v3418, %v3417
          %v3603 = vpack.c.b16 %v3420, %v3419
          %v3604 = vpack.c.b16 %v3422, %v3421
          %v3605 = vpack.c.b16 %v3424, %v3423
          %v3606 = vpack.c.b16 %v3426, %v3425
          %v3607 = vpack.c.b16 %v3428, %v3427
          %v3608 = vpack.c.b16 %v3430, %v3429
          %v3609 = vpack.c.b16 %v3432, %v3431
          %v3610 = vpack.c.b16 %v3434, %v3433
          %v3611 = vpack.c.b16 %v3436, %v3435
          %v3612 = vpack.c.b16 %v3438, %v3437
          %v3613 = vpack.c.b16 %v3440, %v3439
          %v3614 = vpack.c.b16 %v3442, %v3441
          %v3615 = vpack.c.b16 %v3444, %v3443
          %v3616 = vpack.c.b16 %v3446, %v3445
          %v3617 = vpack.c.b16 %v3448, %v3447
          %v3618 = vpack.c.b16 %v3450, %v3449
          %v3619 = vpack.c.b16 %v3452, %v3451
          %v3620 = vpack.c.b16 %v3454, %v3453
          %v3621 = vpack.c.b16 %v3456, %v3455
          %v3622 = vpack.c.b16 %v3458, %v3457
          %v3623 = vpack.c.b16 %v3460, %v3459
          %v3624 = vpack.c.b16 %v3462, %v3461
          %v3625 = vpack.c.b16 %v3464, %v3463
          %v3626 = vpack.c.b16 %v3466, %v3465
          %v3627 = vpack.c.b16 %v3468, %v3467
          %v3628 = vpack.c.b16 %v3470, %v3469
          %v3629 = vpack.c.b16 %v3472, %v3471
          %v3630 = vpack.c.b16 %v3474, %v3473
          %v3631 = vpack.c.b16 %v3476, %v3475
          %v3632 = vpack.c.b16 %v3478, %v3477
          %v3633 = vpack.c.b16 %v3480, %v3479
          %v3634 = vpack.c.b16 %v3482, %v3481
          %v3635 = vpack.c.b16 %v3484, %v3483
          %v3636 = vpack.c.b16 %v3486, %v3485
          %v3637 = vpack.c.b16 %v3488, %v3487
          %v3638 = vpack.c.b16 %v3490, %v3489
          %v3639 = vpack.c.b16 %v3492, %v3491
          %v3640 = vpack.c.b16 %v3494, %v3493
          %v3641 = vpack.c.b16 %v3496, %v3495
          %v3642 = vpack.c.b16 %v3498, %v3497
          %v3643 = vpack.c.b16 %v3500, %v3499
          %v3644 = vpack.c.b16 %v3502, %v3501
          %v3645 = vpack.c.b16 %v3504, %v3503
          %v3646 = vpack.c.b16 %v3506, %v3505
          %v3647 = vpack.c.b16 %v3508, %v3507
          %v3648 = vpack.c.b16 %v3510, %v3509
          %v3649 = vpack.c.b16 %v3512, %v3511
          %v3650 = vpack.c.b16 %v3514, %v3513
          %v3651 = vpack.c.b16 %v3516, %v3515
          %v3652 = vpack.c.b16 %v3518, %v3517
          %v3653 = vpack.c.b16 %v3520, %v3519
          %v3654 = vpack.c.b16 %v3522, %v3521
          %v3655 = vpack.c.b16 %v3524, %v3523
          %v3656 = vpack.c.b16 %v3526, %v3525
          %v3657 = vpack.c.b16 %v3528, %v3527
          %v3658 = vpack.c.b16 %v3530, %v3529
          %3787 = vst [vmem:[%s292] sm:$0xff] %v3531
          %3788 = vst [vmem:[%s292 + $0x8] sm:$0xff] %v3532
          %3789 = vst [vmem:[%s292 + $0x10] sm:$0xff] %v3533
          %3790 = vst [vmem:[%s292 + $0x18] sm:$0xff] %v3534
          %3791 = vst [vmem:[%s292 + $0x20] sm:$0xff] %v3535
          %3792 = vst [vmem:[%s292 + $0x28] sm:$0xff] %v3536
          %3793 = vst [vmem:[%s292 + $0x30] sm:$0xff] %v3537
          %3794 = vst [vmem:[%s292 + $0x38] sm:$0xff] %v3538
          %3795 = vst [vmem:[%s292 + $0x40] sm:$0xff] %v3539
          %3796 = vst [vmem:[%s292 + $0x48] sm:$0xff] %v3540
          %3797 = vst [vmem:[%s292 + $0x50] sm:$0xff] %v3541
          %3798 = vst [vmem:[%s292 + $0x58] sm:$0xff] %v3542
          %3799 = vst [vmem:[%s292 + $0x60] sm:$0xff] %v3543
          %3800 = vst [vmem:[%s292 + $0x68] sm:$0xff] %v3544
          %3801 = vst [vmem:[%s292 + $0x70] sm:$0xff] %v3545
          %3802 = vst [vmem:[%s292 + $0x78] sm:$0xff] %v3546
          %3803 = vst [vmem:[%s292 + $0x80] sm:$0xff] %v3547
          %3804 = vst [vmem:[%s292 + $0x88] sm:$0xff] %v3548
          %3805 = vst [vmem:[%s292 + $0x90] sm:$0xff] %v3549
          %3806 = vst [vmem:[%s292 + $0x98] sm:$0xff] %v3550
          %3807 = vst [vmem:[%s292 + $0xa0] sm:$0xff] %v3551
          %3808 = vst [vmem:[%s292 + $0xa8] sm:$0xff] %v3552
          %3809 = vst [vmem:[%s292 + $0xb0] sm:$0xff] %v3553
          %3810 = vst [vmem:[%s292 + $0xb8] sm:$0xff] %v3554
          %3811 = vst [vmem:[%s292 + $0xc0] sm:$0xff] %v3555
          %3812 = vst [vmem:[%s292 + $0xc8] sm:$0xff] %v3556
          %3813 = vst [vmem:[%s292 + $0xd0] sm:$0xff] %v3557
          %3814 = vst [vmem:[%s292 + $0xd8] sm:$0xff] %v3558
          %3815 = vst [vmem:[%s292 + $0xe0] sm:$0xff] %v3559
          %3816 = vst [vmem:[%s292 + $0xe8] sm:$0xff] %v3560
          %3817 = vst [vmem:[%s292 + $0xf0] sm:$0xff] %v3561
          %3818 = vst [vmem:[%s292 + $0xf8] sm:$0xff] %v3562
          %3819 = vst [vmem:[%s292 + $0x100] sm:$0xff] %v3563
          %3820 = vst [vmem:[%s292 + $0x108] sm:$0xff] %v3564
          %3821 = vst [vmem:[%s292 + $0x110] sm:$0xff] %v3565
          %3822 = vst [vmem:[%s292 + $0x118] sm:$0xff] %v3566
          %3823 = vst [vmem:[%s292 + $0x120] sm:$0xff] %v3567
          %3824 = vst [vmem:[%s292 + $0x128] sm:$0xff] %v3568
          %3825 = vst [vmem:[%s292 + $0x130] sm:$0xff] %v3569
          %3826 = vst [vmem:[%s292 + $0x138] sm:$0xff] %v3570
          %3827 = vst [vmem:[%s292 + $0x140] sm:$0xff] %v3571
          %3828 = vst [vmem:[%s292 + $0x148] sm:$0xff] %v3572
          %3829 = vst [vmem:[%s292 + $0x150] sm:$0xff] %v3573
          %3830 = vst [vmem:[%s292 + $0x158] sm:$0xff] %v3574
          %3831 = vst [vmem:[%s292 + $0x160] sm:$0xff] %v3575
          %3832 = vst [vmem:[%s292 + $0x168] sm:$0xff] %v3576
          %3833 = vst [vmem:[%s292 + $0x170] sm:$0xff] %v3577
          %3834 = vst [vmem:[%s292 + $0x178] sm:$0xff] %v3578
          %3835 = vst [vmem:[%s292 + $0x180] sm:$0xff] %v3579
          %3836 = vst [vmem:[%s292 + $0x188] sm:$0xff] %v3580
          %3837 = vst [vmem:[%s292 + $0x190] sm:$0xff] %v3581
          %3838 = vst [vmem:[%s292 + $0x198] sm:$0xff] %v3582
          %3839 = vst [vmem:[%s292 + $0x1a0] sm:$0xff] %v3583
          %3840 = vst [vmem:[%s292 + $0x1a8] sm:$0xff] %v3584
          %3841 = vst [vmem:[%s292 + $0x1b0] sm:$0xff] %v3585
          %3842 = vst [vmem:[%s292 + $0x1b8] sm:$0xff] %v3586
          %3843 = vst [vmem:[%s292 + $0x1c0] sm:$0xff] %v3587
          %3844 = vst [vmem:[%s292 + $0x1c8] sm:$0xff] %v3588
          %3845 = vst [vmem:[%s292 + $0x1d0] sm:$0xff] %v3589
          %3846 = vst [vmem:[%s292 + $0x1d8] sm:$0xff] %v3590
          %3847 = vst [vmem:[%s292 + $0x1e0] sm:$0xff] %v3591
          %3848 = vst [vmem:[%s292 + $0x1e8] sm:$0xff] %v3592
          %3849 = vst [vmem:[%s292 + $0x1f0] sm:$0xff] %v3593
          %3850 = vst [vmem:[%s292 + $0x1f8] sm:$0xff] %v3594
          %3851 = vst [vmem:[%s292 + $0x200] sm:$0xff] %v3595
          %3852 = vst [vmem:[%s292 + $0x208] sm:$0xff] %v3596
          %3853 = vst [vmem:[%s292 + $0x210] sm:$0xff] %v3597
          %3854 = vst [vmem:[%s292 + $0x218] sm:$0xff] %v3598
          %3855 = vst [vmem:[%s292 + $0x220] sm:$0xff] %v3599
          %3856 = vst [vmem:[%s292 + $0x228] sm:$0xff] %v3600
          %3857 = vst [vmem:[%s292 + $0x230] sm:$0xff] %v3601
          %3858 = vst [vmem:[%s292 + $0x238] sm:$0xff] %v3602
          %3859 = vst [vmem:[%s292 + $0x240] sm:$0xff] %v3603
          %3860 = vst [vmem:[%s292 + $0x248] sm:$0xff] %v3604
          %3861 = vst [vmem:[%s292 + $0x250] sm:$0xff] %v3605
          %3862 = vst [vmem:[%s292 + $0x258] sm:$0xff] %v3606
          %3863 = vst [vmem:[%s292 + $0x260] sm:$0xff] %v3607
          %3864 = vst [vmem:[%s292 + $0x268] sm:$0xff] %v3608
          %3865 = vst [vmem:[%s292 + $0x270] sm:$0xff] %v3609
          %3866 = vst [vmem:[%s292 + $0x278] sm:$0xff] %v3610
          %3867 = vst [vmem:[%s292 + $0x280] sm:$0xff] %v3611
          %3868 = vst [vmem:[%s292 + $0x288] sm:$0xff] %v3612
          %3869 = vst [vmem:[%s292 + $0x290] sm:$0xff] %v3613
          %3870 = vst [vmem:[%s292 + $0x298] sm:$0xff] %v3614
          %3871 = vst [vmem:[%s292 + $0x2a0] sm:$0xff] %v3615
          %3872 = vst [vmem:[%s292 + $0x2a8] sm:$0xff] %v3616
          %3873 = vst [vmem:[%s292 + $0x2b0] sm:$0xff] %v3617
          %3874 = vst [vmem:[%s292 + $0x2b8] sm:$0xff] %v3618
          %3875 = vst [vmem:[%s292 + $0x2c0] sm:$0xff] %v3619
          %3876 = vst [vmem:[%s292 + $0x2c8] sm:$0xff] %v3620
          %3877 = vst [vmem:[%s292 + $0x2d0] sm:$0xff] %v3621
          %3878 = vst [vmem:[%s292 + $0x2d8] sm:$0xff] %v3622
          %3879 = vst [vmem:[%s292 + $0x2e0] sm:$0xff] %v3623
          %3880 = vst [vmem:[%s292 + $0x2e8] sm:$0xff] %v3624
          %3881 = vst [vmem:[%s292 + $0x2f0] sm:$0xff] %v3625
          %3882 = vst [vmem:[%s292 + $0x2f8] sm:$0xff] %v3626
          %3883 = vst [vmem:[%s292 + $0x300] sm:$0xff] %v3627
          %3884 = vst [vmem:[%s292 + $0x308] sm:$0xff] %v3628
          %3885 = vst [vmem:[%s292 + $0x310] sm:$0xff] %v3629
          %3886 = vst [vmem:[%s292 + $0x318] sm:$0xff] %v3630
          %3887 = vst [vmem:[%s292 + $0x320] sm:$0xff] %v3631
          %3888 = vst [vmem:[%s292 + $0x328] sm:$0xff] %v3632
          %3889 = vst [vmem:[%s292 + $0x330] sm:$0xff] %v3633
          %3890 = vst [vmem:[%s292 + $0x338] sm:$0xff] %v3634
          %3891 = vst [vmem:[%s292 + $0x340] sm:$0xff] %v3635
          %3892 = vst [vmem:[%s292 + $0x348] sm:$0xff] %v3636
          %3893 = vst [vmem:[%s292 + $0x350] sm:$0xff] %v3637
          %3894 = vst [vmem:[%s292 + $0x358] sm:$0xff] %v3638
          %3895 = vst [vmem:[%s292 + $0x360] sm:$0xff] %v3639
          %3896 = vst [vmem:[%s292 + $0x368] sm:$0xff] %v3640
          %3897 = vst [vmem:[%s292 + $0x370] sm:$0xff] %v3641
          %3898 = vst [vmem:[%s292 + $0x378] sm:$0xff] %v3642
          %3899 = vst [vmem:[%s292 + $0x380] sm:$0xff] %v3643
          %3900 = vst [vmem:[%s292 + $0x388] sm:$0xff] %v3644
          %3901 = vst [vmem:[%s292 + $0x390] sm:$0xff] %v3645
          %3902 = vst [vmem:[%s292 + $0x398] sm:$0xff] %v3646
          %3903 = vst [vmem:[%s292 + $0x3a0] sm:$0xff] %v3647
          %3904 = vst [vmem:[%s292 + $0x3a8] sm:$0xff] %v3648
          %3905 = vst [vmem:[%s292 + $0x3b0] sm:$0xff] %v3649
          %3906 = vst [vmem:[%s292 + $0x3b8] sm:$0xff] %v3650
          %3907 = vst [vmem:[%s292 + $0x3c0] sm:$0xff] %v3651
          %3908 = vst [vmem:[%s292 + $0x3c8] sm:$0xff] %v3652
          %3909 = vst [vmem:[%s292 + $0x3d0] sm:$0xff] %v3653
          %3910 = vst [vmem:[%s292 + $0x3d8] sm:$0xff] %v3654
          %3911 = vst [vmem:[%s292 + $0x3e0] sm:$0xff] %v3655
          %3912 = vst [vmem:[%s292 + $0x3e8] sm:$0xff] %v3656
          %3913 = vst [vmem:[%s292 + $0x3f0] sm:$0xff] %v3657
          %3914 = vst [vmem:[%s292 + $0x3f8] sm:$0xff] %v3658
        $region52: #{tpu_custom_call.1} parent=31 // pred_fallthru
          _
        %s3915 = sand.u32 %s134, 1
        %s3916 = scalar_lea.sflag [#allocation5], %s3915
        %s3917 = sand.u32 %s134, 1
        %s3918 = smul.addr %s3917, 1024
        %s3919 = scalar_lea.vmem [#allocation9], %s3918
        // Predicated region
        $region53: #{tpu_custom_call.1} parent=31 // pred_check
          %p3920 = pneg %p144
        $region54: #{tpu_custom_call.1} parent=31 // pred_check_branch
          %3922 = sbr.rel (%p3920) target = $region56
        $region55: #{tpu_custom_call.1} parent=31 // pred_region
          %s3923 = smul.u32 64, %s28
          %s3924 = smul.u32 4, %s29
          %s3926 = ssub.s32 16384, 16384
          %3927 = vsyncadd %s3916, %s3926
          %s3928 = smul.addr %s3923, 8
          %s3929 = sadd.s32 %s3924, %s3928
          %s3930 = smul.addr %s3929, 64
          %s3931 = scalar_lea.hbm %s3, %s3930
          %s3932 = sshll.u32 %s3919, 4
          %s3933 = int_to_ptr.vmem [resolvable:$true] %s3932
          %3938 = dma.vmem_to_hbm [thread:$0]  %s3933, 16384, %s3931, %s3916, 256, 512, 16
        $region56: #{tpu_custom_call.1} parent=31 // pred_fallthru
          _
      $region32: #{tpu_custom_call.1} parent=5 // pred_fallthru
        _
      %p3939 = scmp.le.s32.totalorder 2, %s18
      // Predicated region
      $region57: #{tpu_custom_call.1} parent=5 // pred_check
        %p3940 = pneg %p3939
      $region58: #{tpu_custom_call.1} parent=5 // pred_check_branch
        %3942 = sbr.rel (%p3940) target = $region60
      $region59: #{tpu_custom_call.1} parent=5 // pred_region
        %s3943 = ssub.s32 %s18, 2
        // Predicated region
        $region61: #{tpu_custom_call.1} parent=59 // pred_check
          %p3944 = pneg %p150
        $region62: #{tpu_custom_call.1} parent=59 // pred_check_branch
          %3946 = sbr.rel (%p3944) target = $region64
        $region63: #{tpu_custom_call.1} parent=59 // pred_region
          %s3947 = sand.u32 %s135, 1
          %s3948 = scalar_lea.sflag [#allocation5], %s3947
          %s3949 = sand.u32 %s135, 1
          %s3950 = smul.addr %s3949, 1024
          %s3951 = scalar_lea.vmem [#allocation9], %s3950
          %3952 = dma.done %s3948, 16384
        $region64: #{tpu_custom_call.1} parent=59 // pred_fallthru
          _
      $region60: #{tpu_custom_call.1} parent=5 // pred_fallthru
        _
    $region6: #{tpu_custom_call.1} parent=1 // loop_footer
      %s22 = sadd.s32 1, %s18
    $region7: #{tpu_custom_call.1} parent=1 // loop_footer_branch
      %17 = sbr.rel target = $region3
    $region8: #{tpu_custom_call.1} parent=1 // loop_exit
      _
    %3953 = vsyncpa [#allocation4], 1
    %s3954 = scalar_lea.sflag [#allocation4], 1
    %3955 = vsyncpa %s3954, 1
    %3956 = vsyncpa [#allocation7], 1
    %s3957 = scalar_lea.sflag [#allocation7], 1
    %3958 = vsyncpa %s3957, 1
    %3959 = vsyncpa [#allocation5], 1
    %s3960 = scalar_lea.sflag [#allocation5], 1
    %3961 = vsyncpa %s3960, 1

</llo_original>
